<compile_context>
chip_gen: v7x
topology: tpu7x:2x2x1
jax: 0.10.0
libtpu: 0.0.40
codegen_flags: <defaults>
</compile_context>

<pallas_src>
import functools

import jax
import jax.numpy as jnp
from jax.experimental import pallas as pl
from jax.experimental.pallas import tpu as pltpu


def _round_up(x, m):
    return ((x + m - 1) // m) * m


def _gconv_fused_kernel(adj_ref, x_ref, pool_ref, mask_ref,
                        w1_ref, w2_ref, vec_ref,
                        z_ref, g_ref, z_scr, *, n_real):
    """One grid step == one GIN layer (MLP + ReLU + BatchNorm1d + add-pool).

    adj_ref : (Np, Np) bf16  A + I (eps=0 self term folded), resident
    x_ref   : (Np, D)  bf16  zero-padded input node features, resident
    pool_ref: (Gp, Np) bf16  graph pooling matrix (0/1), resident
    mask_ref: (Np, 1)  f32   1.0 for real node rows, 0.0 for padding, resident
    w1_ref  : (L, D, D) f32  stacked first-linear weights, resident
    w2_ref  : (L, D, D) f32  stacked second-linear weights, resident
    vec_ref : (L, 8, D) f32  rows 0..3 = b1, b2, gamma, beta (rest zero), resident
    z_ref   : (Np, D)  f32   layer-l slab of the concatenated node output
    g_ref   : (Gp, D)  f32   layer-l slab of the concatenated graph output
    z_scr   : (Np, D)  bf16  node features carried between layer steps
    """
    layer = pl.program_id(0)

    @pl.when(layer == 0)
    def _():
        z_scr[...] = x_ref[...]

    z_in = z_scr[...]                                    # bf16

    # GIN aggregation with eps = 0: (A + I) @ z, native bf16 MXU path, f32 acc.
    agg = jnp.dot(adj_ref[...], z_in, preferred_element_type=jnp.float32)

    w1 = w1_ref[layer]
    w2 = w2_ref[layer]
    vecs = vec_ref[layer]
    b1 = vecs[0:1, :]
    b2 = vecs[1:2, :]
    gamma = vecs[2:3, :]
    beta = vecs[3:4, :]

    # MLP: Linear -> ReLU -> Linear (f32), then the GConv ReLU activation.
    h = jnp.dot(agg, w1, preferred_element_type=jnp.float32) + b1
    h = jnp.maximum(h, 0.0)
    h = jnp.dot(h, w2, preferred_element_type=jnp.float32) + b2
    z = jnp.maximum(h, 0.0)

    # BatchNorm1d (training-mode batch stats, biased variance, eps=1e-5) over
    # the n_real genuine node rows only; padded rows are masked out of the
    # statistics and zeroed so they never contaminate later layers / pooling.
    mask = mask_ref[...]                                 # (Np, 1)
    z = z * mask
    inv_n = 1.0 / float(n_real)
    mean = jnp.sum(z, axis=0, keepdims=True) * inv_n
    ctr = z - mean
    var = jnp.sum(ctr * ctr * mask, axis=0, keepdims=True) * inv_n
    zbn = (gamma * ctr * jax.lax.rsqrt(var + 1e-5) + beta) * mask

    zbn_lo = zbn.astype(jnp.bfloat16)
    z_scr[...] = zbn_lo                                  # carry to next layer
    z_ref[...] = zbn
    # global_add_pool as a (graphs x nodes) bf16 matmul, f32 accumulation.
    g_ref[...] = jnp.dot(pool_ref[...], zbn_lo, preferred_element_type=jnp.float32)


@functools.partial(jax.jit, static_argnames=("n_real", "single_buffer"))
def _run_fused(adj, x_pad, pool, mask, w1s, w2s, vecs, *, n_real, single_buffer):
    num_layers, d, _ = w1s.shape
    n_pad = x_pad.shape[0]
    g_pad = pool.shape[0]

    # ---- VMEM budget: single-buffered residents + double-buffered outputs. ----
    buf = 1 if single_buffer else 2
    bytes_adj = n_pad * n_pad * 2
    bytes_x = n_pad * d * 2
    bytes_pool = g_pad * n_pad * 2
    bytes_mask = n_pad * 128 * 4                         # lane-padded internally
    bytes_w = num_layers * (2 * d * d + 8 * d) * 4
    bytes_out = 2 * (n_pad + g_pad) * d * 4              # double-buffered outputs
    bytes_scratch = n_pad * d * 2
    vmem_need = (buf * (bytes_adj + bytes_x + bytes_pool + bytes_mask + bytes_w)
                 + bytes_out + bytes_scratch)
    try:
        vmem_cap = int(pltpu.get_tpu_info().vmem_capacity_bytes)
    except Exception:
        vmem_cap = 64 * 1024 * 1024
    vmem_limit = max(4 * 1024 * 1024,
                     min(int(vmem_need * 1.25), (vmem_cap * 3) // 4))

    flops_per_layer = (2 * n_pad * n_pad * d             # (A + I) @ z
                       + 4 * n_pad * d * d               # two MLP linears
                       + 2 * g_pad * n_pad * d           # add-pool matmul
                       + 10 * n_pad * d)                 # elementwise / BN
    cost = pl.CostEstimate(
        flops=int(num_layers * flops_per_layer),
        transcendentals=int(num_layers * d),
        bytes_accessed=int(bytes_adj + bytes_x + bytes_pool + bytes_mask
                           + bytes_w + num_layers * (n_pad + g_pad) * d * 4))

    resident = {"pipeline_mode": pl.Buffered(1)} if single_buffer else {}

    grid_spec = pltpu.PrefetchScalarGridSpec(
        num_scalar_prefetch=0,
        grid=(num_layers,),
        in_specs=[
            pl.BlockSpec((n_pad, n_pad), lambda l: (0, 0), **resident),        # adj
            pl.BlockSpec((n_pad, d), lambda l: (0, 0), **resident),            # x
            pl.BlockSpec((g_pad, n_pad), lambda l: (0, 0), **resident),        # pool
            pl.BlockSpec((n_pad, 1), lambda l: (0, 0), **resident),            # mask
            pl.BlockSpec((num_layers, d, d), lambda l: (0, 0, 0), **resident), # W1 stack
            pl.BlockSpec((num_layers, d, d), lambda l: (0, 0, 0), **resident), # W2 stack
            pl.BlockSpec((num_layers, 8, d), lambda l: (0, 0, 0), **resident), # vec stack
        ],
        out_specs=(
            pl.BlockSpec((n_pad, d), lambda l: (0, l)),      # z slab (lane-dense)
            pl.BlockSpec((g_pad, d), lambda l: (0, l)),      # g slab (lane-dense)
        ),
        scratch_shapes=[pltpu.VMEM((n_pad, d), jnp.bfloat16)],
    )

    kernel = functools.partial(_gconv_fused_kernel, n_real=n_real)

    return pl.pallas_call(
        kernel,
        out_shape=(
            jax.ShapeDtypeStruct((n_pad, num_layers * d), jnp.float32),
            jax.ShapeDtypeStruct((g_pad, num_layers * d), jnp.float32),
        ),
        grid_spec=grid_spec,
        compiler_params=pltpu.CompilerParams(
            dimension_semantics=("arbitrary",),           # layer axis carries z_scr
            vmem_limit_bytes=int(vmem_limit)),
        cost_estimate=cost,
    )(adj, x_pad, pool, mask, w1s, w2s, vecs)


def _pad2(a, rows, cols):
    return jnp.pad(a, ((0, rows - a.shape[0]), (0, cols - a.shape[1])))


def gconv_forward(x, edge_index, batch, params, num_graphs):
    """Encoder forward: returns (z, g) exactly as Encoder.forward does.

    Assumes batch ids are contiguous 0..num_graphs-1 and the node count is
    static per compilation (recompiles on a new graph size).
    """
    n, input_dim = x.shape
    hidden = params[0][0].shape[1]
    num_layers = len(params)

    d = _round_up(max(input_dim, hidden), 128)   # lane-dense feature width
    n_pad = _round_up(n, 128)                    # lane axis of adj / pool
    g_pad = _round_up(num_graphs, 16)            # bf16 sublane packing

    src, dst = edge_index[0], edge_index[1]
    # Dense adjacency A[dst, src] += 1 (duplicate edges counted, matching PyG
    # GINConv sum aggregation) with the eps=0 self term folded in as +I.
    # TODO(synk): cache A across calls / switch to a scalar-prefetch CSR
    # aggregation once graphs exceed the VMEM-resident dense-adjacency regime.
    adj = jnp.zeros((n, n), jnp.float32).at[dst, src].add(1.0)
    adj = adj + jnp.eye(n, dtype=jnp.float32)
    # bf16 represents integers exactly only up to 256; guard the cast.
    assert float(jnp.max(adj)) < 256.0, "edge multiplicity too large for bf16 adjacency"
    adj = jnp.pad(adj, ((0, n_pad - n), (0, n_pad - n))).astype(jnp.bfloat16)

    pool = (jnp.arange(num_graphs)[:, None] == batch[None, :]).astype(jnp.float32)
    pool = jnp.pad(pool, ((0, g_pad - num_graphs), (0, n_pad - n))).astype(jnp.bfloat16)

    x_pad = jnp.pad(x.astype(jnp.float32),
                    ((0, n_pad - n), (0, d - input_dim))).astype(jnp.bfloat16)
    mask = (jnp.arange(n_pad) < n).astype(jnp.float32).reshape(n_pad, 1)

    w1s = jnp.stack([_pad2(p[0], d, d) for p in params])
    w2s = jnp.stack([_pad2(p[2], d, d) for p in params])
    vecs = jnp.stack([
        jnp.concatenate([_pad2(p[1].reshape(1, -1), 1, d),    # b1
                         _pad2(p[3].reshape(1, -1), 1, d),    # b2
                         _pad2(p[4].reshape(1, -1), 1, d),    # gamma
                         _pad2(p[5].reshape(1, -1), 1, d),    # beta
                         jnp.zeros((4, d), jnp.float32)],     # sublane padding
                        axis=0)
        for p in params])

    try:
        z_slab, g_slab = _run_fused(adj, x_pad, pool, mask, w1s, w2s, vecs,
                                    n_real=n, single_buffer=True)
        jax.block_until_ready((z_slab, g_slab))
    except Exception:
        # Fallback if this JAX build rejects pipeline_mode=pl.Buffered(1).
        z_slab, g_slab = _run_fused(adj, x_pad, pool, mask, w1s, w2s, vecs,
                                    n_real=n, single_buffer=False)

    z = jnp.concatenate(
        [z_slab[:n, l * d: l * d + hidden] for l in range(num_layers)], axis=1)
    g = jnp.concatenate(
        [g_slab[:num_graphs, l * d: l * d + hidden] for l in range(num_layers)],
        axis=1)
    return z, g


def _reference(x, edge_index, batch, params, num_graphs):
    """Pure-JAX f32 reference of the same forward for a correctness check."""
    n = x.shape[0]
    src, dst = edge_index[0], edge_index[1]
    adj = jnp.zeros((n, n), jnp.float32).at[dst, src].add(1.0)
    pool = (jnp.arange(num_graphs)[:, None] == batch[None, :]).astype(jnp.float32)
    z = x.astype(jnp.float32)
    zs, gs = [], []
    for (w1, b1, w2, b2, gamma, beta) in params:
        agg = adj @ z + z
        h = jnp.maximum(agg @ w1 + b1, 0.0)
        h = h @ w2 + b2
        zz = jnp.maximum(h, 0.0)
        mean = zz.mean(axis=0, keepdims=True)
        var = ((zz - mean) ** 2).mean(axis=0, keepdims=True)
        zz = gamma * (zz - mean) * jax.lax.rsqrt(var + 1e-5) + beta
        zs.append(zz)
        gs.append(pool @ zz)
        z = zz
    return jnp.concatenate(zs, axis=1), jnp.concatenate(gs, axis=1)


def init_params(key, input_dim, hidden_dim, num_layers):
    params = []
    for i in range(num_layers):
        din = input_dim if i == 0 else hidden_dim
        key, k1, k2 = jax.random.split(key, 3)
        w1 = (jax.random.normal(k1, (din, hidden_dim), jnp.float32)
              * (1.0 / jnp.sqrt(din)))
        b1 = jnp.zeros((1, hidden_dim), jnp.float32)
        w2 = (jax.random.normal(k2, (hidden_dim, hidden_dim), jnp.float32)
              * (1.0 / jnp.sqrt(hidden_dim)))
        b2 = jnp.zeros((1, hidden_dim), jnp.float32)
        gamma = jnp.ones((1, hidden_dim), jnp.float32)
        beta = jnp.zeros((1, hidden_dim), jnp.float32)
        params.append((w1, b1, w2, b2, gamma, beta))
    return params


if __name__ == "__main__":
    key = jax.random.PRNGKey(0)

    # Small synthetic graph batch.
    num_nodes = 16
    input_dim = 8
    hidden_dim = 32
    num_layers = 3
    num_graphs = 2
    num_edges = 40

    key, kx, ke = jax.random.split(key, 3)
    x = jax.random.normal(kx, (num_nodes, input_dim), jnp.float32)
    edge_index = jax.random.randint(ke, (2, num_edges), 0, num_nodes, jnp.int32)
    # First 8 nodes -> graph 0, last 8 -> graph 1.
    batch = jnp.concatenate([jnp.zeros(8, jnp.int32), jnp.ones(8, jnp.int32)])

    params = init_params(key, input_dim, hidden_dim, num_layers)

    z, g = gconv_forward(x, edge_index, batch, params, num_graphs)
    jax.block_until_ready((z, g))

    assert z.shape == (num_nodes, hidden_dim * num_layers)
    assert g.shape == (num_graphs, hidden_dim * num_layers)

    z_ref, g_ref = _reference(x, edge_index, batch, params, num_graphs)
    assert bool(jnp.all(jnp.isfinite(z))) and bool(jnp.all(jnp.isfinite(g)))
    assert bool(jnp.allclose(z, z_ref, atol=5e-2, rtol=5e-2))
    assert bool(jnp.allclose(g, g_ref, atol=5e-2, rtol=5e-2))

    print("KERNEL_OK")
</pallas_src>

<mosaic_0001>
module attributes {stable_mosaic.version = 11 : i64} {
  func.func @_gconv_fused_kernel(%arg0: i32, %arg1: memref<128x128xbf16, #tpu.memory_space<vmem>>, %arg2: memref<128x128xbf16, #tpu.memory_space<vmem>>, %arg3: memref<16x128xbf16, #tpu.memory_space<vmem>>, %arg4: memref<128x1xf32, #tpu.memory_space<vmem>>, %arg5: memref<3x128x128xf32, #tpu.memory_space<vmem>>, %arg6: memref<3x128x128xf32, #tpu.memory_space<vmem>>, %arg7: memref<3x8x128xf32, #tpu.memory_space<vmem>>, %arg8: memref<128x128xf32, #tpu.memory_space<vmem>>, %arg9: memref<16x128xf32, #tpu.memory_space<vmem>>, %arg10: memref<128x128xbf16, #tpu.memory_space<vmem>>) attributes {dimension_semantics = [#tpu.dimension_semantics<arbitrary>], iteration_bounds = array<i64: 3>, scalar_prefetch = 0 : i64, scratch_operands = 1 : i64, tpu.core_type = #tpu.core_type<tc>, window_params = [{pipeline_mode = #tpu.pipeline_mode<synchronous>, transform_indices = @transform_0, window_bounds = array<i64: 128, 128>}, {pipeline_mode = #tpu.pipeline_mode<synchronous>, transform_indices = @transform_1, window_bounds = array<i64: 128, 128>}, {pipeline_mode = #tpu.pipeline_mode<synchronous>, transform_indices = @transform_2, window_bounds = array<i64: 16, 128>}, {pipeline_mode = #tpu.pipeline_mode<synchronous>, transform_indices = @transform_3, window_bounds = array<i64: 128, 1>}, {pipeline_mode = #tpu.pipeline_mode<synchronous>, transform_indices = @transform_4, window_bounds = array<i64: 3, 128, 128>}, {pipeline_mode = #tpu.pipeline_mode<synchronous>, transform_indices = @transform_5, window_bounds = array<i64: 3, 128, 128>}, {pipeline_mode = #tpu.pipeline_mode<synchronous>, transform_indices = @transform_6, window_bounds = array<i64: 3, 8, 128>}, {transform_indices = @transform_7, window_bounds = array<i64: 128, 128>}, {transform_indices = @transform_8, window_bounds = array<i64: 16, 128>}]} {
    %c0_i32 = arith.constant 0 : i32
    %0 = arith.cmpi eq, %arg0, %c0_i32 : i32
    %1 = arith.extui %0 : i1 to i32
    %c0_i32_0 = arith.constant 0 : i32
    %2 = arith.cmpi ne, %1, %c0_i32_0 : i32
    scf.if %2 {
      %c0_30 = arith.constant 0 : index
      %c0_31 = arith.constant 0 : index
      %62 = vector.load %arg2[%c0_30, %c0_31] : memref<128x128xbf16, #tpu.memory_space<vmem>>, vector<128x128xbf16>
      %c0_32 = arith.constant 0 : index
      %c0_33 = arith.constant 0 : index
      %63 = vector.load %arg10[%c0_32, %c0_33] : memref<128x128xbf16, #tpu.memory_space<vmem>>, vector<128x128xbf16>
      tpu.vector_store %arg10[%c0_32, %c0_33], %62 {strides = array<i32>} : memref<128x128xbf16, #tpu.memory_space<vmem>>, vector<128x128xbf16>,
    } else {
    }
    %c0 = arith.constant 0 : index
    %c0_1 = arith.constant 0 : index
    %3 = vector.load %arg10[%c0, %c0_1] : memref<128x128xbf16, #tpu.memory_space<vmem>>, vector<128x128xbf16>
    %c0_2 = arith.constant 0 : index
    %c0_3 = arith.constant 0 : index
    %4 = vector.load %arg1[%c0_2, %c0_3] : memref<128x128xbf16, #tpu.memory_space<vmem>>, vector<128x128xbf16>
    %cst = arith.constant dense<0.000000e+00> : vector<128x128xf32>
    %5 = tpu.matmul %4, %3, %cst {dimension_numbers = #tpu.dot_dimension_numbers<[1], [0], [0], [1], [0, 0, 1, 1], [], []>} : vector<128x128xbf16>, vector<128x128xbf16>, vector<128x128xf32> -> vector<128x128xf32>
    %6 = arith.index_cast %arg0 : i32 to index
    %c0_4 = arith.constant 0 : index
    %c0_5 = arith.constant 0 : index
    %7 = vector.load %arg5[%6, %c0_4, %c0_5] : memref<3x128x128xf32, #tpu.memory_space<vmem>>, vector<1x128x128xf32>
    %8 = vector.shape_cast %7 : vector<1x128x128xf32> to vector<128x128xf32>
    %9 = arith.index_cast %arg0 : i32 to index
    %c0_6 = arith.constant 0 : index
    %c0_7 = arith.constant 0 : index
    %10 = vector.load %arg6[%9, %c0_6, %c0_7] : memref<3x128x128xf32, #tpu.memory_space<vmem>>, vector<1x128x128xf32>
    %11 = vector.shape_cast %10 : vector<1x128x128xf32> to vector<128x128xf32>
    %12 = arith.index_cast %arg0 : i32 to index
    %c0_8 = arith.constant 0 : index
    %c0_9 = arith.constant 0 : index
    %13 = vector.load %arg7[%12, %c0_8, %c0_9] : memref<3x8x128xf32, #tpu.memory_space<vmem>>, vector<1x8x128xf32>
    %14 = vector.shape_cast %13 : vector<1x8x128xf32> to vector<8x128xf32>
    %15 = vector.extract_strided_slice %14 {offsets = [0, 0], sizes = [1, 128], strides = [1, 1]} : vector<8x128xf32> to vector<1x128xf32>
    %16 = vector.extract_strided_slice %14 {offsets = [1, 0], sizes = [1, 128], strides = [1, 1]} : vector<8x128xf32> to vector<1x128xf32>
    %17 = vector.extract_strided_slice %14 {offsets = [2, 0], sizes = [1, 128], strides = [1, 1]} : vector<8x128xf32> to vector<1x128xf32>
    %18 = vector.extract_strided_slice %14 {offsets = [3, 0], sizes = [1, 128], strides = [1, 1]} : vector<8x128xf32> to vector<1x128xf32>
    %cst_10 = arith.constant dense<0.000000e+00> : vector<128x128xf32>
    %19 = tpu.matmul %5, %8, %cst_10 {dimension_numbers = #tpu.dot_dimension_numbers<[1], [0], [0], [1], [0, 0, 1, 1], [], []>} : vector<128x128xf32>, vector<128x128xf32>, vector<128x128xf32> -> vector<128x128xf32>
    %20 = vector.broadcast %15 : vector<1x128xf32> to vector<128x128xf32>
    %21 = arith.addf %19, %20 : vector<128x128xf32>
    %cst_11 = arith.constant 0.000000e+00 : f32
    %22 = vector.broadcast %cst_11 : f32 to vector<128x128xf32>
    %23 = arith.maximumf %21, %22 : vector<128x128xf32>
    %cst_12 = arith.constant dense<0.000000e+00> : vector<128x128xf32>
    %24 = tpu.matmul %23, %11, %cst_12 {dimension_numbers = #tpu.dot_dimension_numbers<[1], [0], [0], [1], [0, 0, 1, 1], [], []>} : vector<128x128xf32>, vector<128x128xf32>, vector<128x128xf32> -> vector<128x128xf32>
    %25 = vector.broadcast %16 : vector<1x128xf32> to vector<128x128xf32>
    %26 = arith.addf %24, %25 : vector<128x128xf32>
    %cst_13 = arith.constant 0.000000e+00 : f32
    %27 = vector.broadcast %cst_13 : f32 to vector<128x128xf32>
    %28 = arith.maximumf %26, %27 : vector<128x128xf32>
    %c0_14 = arith.constant 0 : index
    %c0_15 = arith.constant 0 : index
    %29 = vector.load %arg4[%c0_14, %c0_15] : memref<128x1xf32, #tpu.memory_space<vmem>>, vector<128x1xf32>
    %30 = vector.broadcast %29 : vector<128x1xf32> to vector<128x128xf32>
    %31 = arith.mulf %28, %30 : vector<128x128xf32>
    %cst_16 = arith.constant dense<0.000000e+00> : vector<128xf32>
    %32 = vector.multi_reduction <add>, %31, %cst_16 [0] : vector<128x128xf32> to vector<128xf32>
    %33 = vector.shape_cast %32 : vector<128xf32> to vector<1x128xf32>
    %cst_17 = arith.constant 6.250000e-02 : f32
    %34 = vector.broadcast %cst_17 : f32 to vector<1x128xf32>
    %35 = arith.mulf %33, %34 : vector<1x128xf32>
    %36 = vector.broadcast %35 : vector<1x128xf32> to vector<128x128xf32>
    %37 = arith.subf %31, %36 : vector<128x128xf32>
    %38 = arith.mulf %37, %37 : vector<128x128xf32>
    %39 = vector.broadcast %29 : vector<128x1xf32> to vector<128x128xf32>
    %40 = arith.mulf %38, %39 : vector<128x128xf32>
    %cst_18 = arith.constant dense<0.000000e+00> : vector<128xf32>
    %41 = vector.multi_reduction <add>, %40, %cst_18 [0] : vector<128x128xf32> to vector<128xf32>
    %42 = vector.shape_cast %41 : vector<128xf32> to vector<1x128xf32>
    %cst_19 = arith.constant 6.250000e-02 : f32
    %43 = vector.broadcast %cst_19 : f32 to vector<1x128xf32>
    %44 = arith.mulf %42, %43 : vector<1x128xf32>
    %45 = vector.broadcast %17 : vector<1x128xf32> to vector<128x128xf32>
    %46 = arith.mulf %45, %37 : vector<128x128xf32>
    %cst_20 = arith.constant 9.99999974E-6 : f32
    %47 = vector.broadcast %cst_20 : f32 to vector<1x128xf32>
    %48 = arith.addf %44, %47 : vector<1x128xf32>
    %49 = math.rsqrt %48 : vector<1x128xf32>
    %50 = vector.broadcast %49 : vector<1x128xf32> to vector<128x128xf32>
    %51 = arith.mulf %46, %50 : vector<128x128xf32>
    %52 = vector.broadcast %18 : vector<1x128xf32> to vector<128x128xf32>
    %53 = arith.addf %51, %52 : vector<128x128xf32>
    %54 = vector.broadcast %29 : vector<128x1xf32> to vector<128x128xf32>
    %55 = arith.mulf %53, %54 : vector<128x128xf32>
    %56 = arith.truncf %55 : vector<128x128xf32> to vector<128x128xbf16>
    %c0_21 = arith.constant 0 : index
    %c0_22 = arith.constant 0 : index
    %57 = vector.load %arg10[%c0_21, %c0_22] : memref<128x128xbf16, #tpu.memory_space<vmem>>, vector<128x128xbf16>
    tpu.vector_store %arg10[%c0_21, %c0_22], %56 {strides = array<i32>} : memref<128x128xbf16, #tpu.memory_space<vmem>>, vector<128x128xbf16>,
    %c0_23 = arith.constant 0 : index
    %c0_24 = arith.constant 0 : index
    %58 = vector.load %arg8[%c0_23, %c0_24] : memref<128x128xf32, #tpu.memory_space<vmem>>, vector<128x128xf32>
    tpu.vector_store %arg8[%c0_23, %c0_24], %55 {strides = array<i32>} : memref<128x128xf32, #tpu.memory_space<vmem>>, vector<128x128xf32>,
    %c0_25 = arith.constant 0 : index
    %c0_26 = arith.constant 0 : index
    %59 = vector.load %arg3[%c0_25, %c0_26] : memref<16x128xbf16, #tpu.memory_space<vmem>>, vector<16x128xbf16>
    %cst_27 = arith.constant dense<0.000000e+00> : vector<16x128xf32>
    %60 = tpu.matmul %59, %56, %cst_27 {dimension_numbers = #tpu.dot_dimension_numbers<[1], [0], [0], [1], [0, 0, 1, 1], [], []>} : vector<16x128xbf16>, vector<128x128xbf16>, vector<16x128xf32> -> vector<16x128xf32>
    %c0_28 = arith.constant 0 : index
    %c0_29 = arith.constant 0 : index
    %61 = vector.load %arg9[%c0_28, %c0_29] : memref<16x128xf32, #tpu.memory_space<vmem>>, vector<16x128xf32>
    tpu.vector_store %arg9[%c0_28, %c0_29], %60 {strides = array<i32>} : memref<16x128xf32, #tpu.memory_space<vmem>>, vector<16x128xf32>,
    return
  }
  func.func @transform_0(%arg0: i32) -> (i32, i32) {
    %c0_i32 = arith.constant 0 : i32
    %c0_i32_0 = arith.constant 0 : i32
    %c0_i32_1 = arith.constant 0 : i32
    return %c0_i32, %c0_i32_0 : i32, i32
  }
  func.func @transform_1(%arg0: i32) -> (i32, i32) {
    %c0_i32 = arith.constant 0 : i32
    %c0_i32_0 = arith.constant 0 : i32
    %c0_i32_1 = arith.constant 0 : i32
    return %c0_i32, %c0_i32_0 : i32, i32
  }
  func.func @transform_2(%arg0: i32) -> (i32, i32) {
    %c0_i32 = arith.constant 0 : i32
    %c0_i32_0 = arith.constant 0 : i32
    %c0_i32_1 = arith.constant 0 : i32
    return %c0_i32, %c0_i32_0 : i32, i32
  }
  func.func @transform_3(%arg0: i32) -> (i32, i32) {
    %c0_i32 = arith.constant 0 : i32
    %c0_i32_0 = arith.constant 0 : i32
    %c0_i32_1 = arith.constant 0 : i32
    return %c0_i32, %c0_i32_0 : i32, i32
  }
  func.func @transform_4(%arg0: i32) -> (i32, i32, i32) {
    %c0_i32 = arith.constant 0 : i32
    %c0_i32_0 = arith.constant 0 : i32
    %c0_i32_1 = arith.constant 0 : i32
    %c0_i32_2 = arith.constant 0 : i32
    return %c0_i32, %c0_i32_0, %c0_i32_1 : i32, i32, i32
  }
  func.func @transform_5(%arg0: i32) -> (i32, i32, i32) {
    %c0_i32 = arith.constant 0 : i32
    %c0_i32_0 = arith.constant 0 : i32
    %c0_i32_1 = arith.constant 0 : i32
    %c0_i32_2 = arith.constant 0 : i32
    return %c0_i32, %c0_i32_0, %c0_i32_1 : i32, i32, i32
  }
  func.func @transform_6(%arg0: i32) -> (i32, i32, i32) {
    %c0_i32 = arith.constant 0 : i32
    %c0_i32_0 = arith.constant 0 : i32
    %c0_i32_1 = arith.constant 0 : i32
    %c0_i32_2 = arith.constant 0 : i32
    return %c0_i32, %c0_i32_0, %c0_i32_1 : i32, i32, i32
  }
  func.func @transform_7(%arg0: i32) -> (i32, i32) {
    %c0_i32 = arith.constant 0 : i32
    %c0_i32_0 = arith.constant 0 : i32
    return %c0_i32, %arg0 : i32, i32
  }
  func.func @transform_8(%arg0: i32) -> (i32, i32) {
    %c0_i32 = arith.constant 0 : i32
    %c0_i32_0 = arith.constant 0 : i32
    return %c0_i32, %arg0 : i32, i32
  }
}

module attributes {stable_mosaic.version = 11 : i64} {
  func.func @_gconv_fused_kernel(%arg0: i32, %arg1: memref<128x128xbf16, #tpu.memory_space<vmem>>, %arg2: memref<128x128xbf16, #tpu.memory_space<vmem>>, %arg3: memref<16x128xbf16, #tpu.memory_space<vmem>>, %arg4: memref<128x1xf32, #tpu.memory_space<vmem>>, %arg5: memref<3x128x128xf32, #tpu.memory_space<vmem>>, %arg6: memref<3x128x128xf32, #tpu.memory_space<vmem>>, %arg7: memref<3x8x128xf32, #tpu.memory_space<vmem>>, %arg8: memref<128x128xf32, #tpu.memory_space<vmem>>, %arg9: memref<16x128xf32, #tpu.memory_space<vmem>>, %arg10: memref<128x128xbf16, #tpu.memory_space<vmem>>) attributes {dimension_semantics = [#tpu.dimension_semantics<arbitrary>], iteration_bounds = array<i64: 3>, scalar_prefetch = 0 : i64, scratch_operands = 1 : i64, tpu.core_type = #tpu.core_type<tc>, window_params = [{pipeline_mode = #tpu.pipeline_mode<synchronous>, transform_indices = @transform_0, window_bounds = array<i64: 128, 128>}, {pipeline_mode = #tpu.pipeline_mode<synchronous>, transform_indices = @transform_1, window_bounds = array<i64: 128, 128>}, {pipeline_mode = #tpu.pipeline_mode<synchronous>, transform_indices = @transform_2, window_bounds = array<i64: 16, 128>}, {pipeline_mode = #tpu.pipeline_mode<synchronous>, transform_indices = @transform_3, window_bounds = array<i64: 128, 1>}, {pipeline_mode = #tpu.pipeline_mode<synchronous>, transform_indices = @transform_4, window_bounds = array<i64: 3, 128, 128>}, {pipeline_mode = #tpu.pipeline_mode<synchronous>, transform_indices = @transform_5, window_bounds = array<i64: 3, 128, 128>}, {pipeline_mode = #tpu.pipeline_mode<synchronous>, transform_indices = @transform_6, window_bounds = array<i64: 3, 8, 128>}, {transform_indices = @transform_7, window_bounds = array<i64: 128, 128>}, {transform_indices = @transform_8, window_bounds = array<i64: 16, 128>}]} {
    %c0_i32 = arith.constant 0 : i32
    %0 = arith.cmpi eq, %arg0, %c0_i32 : i32
    %1 = arith.extui %0 : i1 to i32
    %c0_i32_0 = arith.constant 0 : i32
    %2 = arith.cmpi ne, %1, %c0_i32_0 : i32
    scf.if %2 {
      %c0_30 = arith.constant 0 : index
      %c0_31 = arith.constant 0 : index
      %62 = vector.load %arg2[%c0_30, %c0_31] : memref<128x128xbf16, #tpu.memory_space<vmem>>, vector<128x128xbf16>
      %c0_32 = arith.constant 0 : index
      %c0_33 = arith.constant 0 : index
      %63 = vector.load %arg10[%c0_32, %c0_33] : memref<128x128xbf16, #tpu.memory_space<vmem>>, vector<128x128xbf16>
      tpu.vector_store %arg10[%c0_32, %c0_33], %62 {strides = array<i32>} : memref<128x128xbf16, #tpu.memory_space<vmem>>, vector<128x128xbf16>,
    } else {
    }
    %c0 = arith.constant 0 : index
    %c0_1 = arith.constant 0 : index
    %3 = vector.load %arg10[%c0, %c0_1] : memref<128x128xbf16, #tpu.memory_space<vmem>>, vector<128x128xbf16>
    %c0_2 = arith.constant 0 : index
    %c0_3 = arith.constant 0 : index
    %4 = vector.load %arg1[%c0_2, %c0_3] : memref<128x128xbf16, #tpu.memory_space<vmem>>, vector<128x128xbf16>
    %cst = arith.constant dense<0.000000e+00> : vector<128x128xf32>
    %5 = tpu.matmul %4, %3, %cst {dimension_numbers = #tpu.dot_dimension_numbers<[1], [0], [0], [1], [0, 0, 1, 1], [], []>} : vector<128x128xbf16>, vector<128x128xbf16>, vector<128x128xf32> -> vector<128x128xf32>
    %6 = arith.index_cast %arg0 : i32 to index
    %c0_4 = arith.constant 0 : index
    %c0_5 = arith.constant 0 : index
    %7 = vector.load %arg5[%6, %c0_4, %c0_5] : memref<3x128x128xf32, #tpu.memory_space<vmem>>, vector<1x128x128xf32>
    %8 = vector.shape_cast %7 : vector<1x128x128xf32> to vector<128x128xf32>
    %9 = arith.index_cast %arg0 : i32 to index
    %c0_6 = arith.constant 0 : index
    %c0_7 = arith.constant 0 : index
    %10 = vector.load %arg6[%9, %c0_6, %c0_7] : memref<3x128x128xf32, #tpu.memory_space<vmem>>, vector<1x128x128xf32>
    %11 = vector.shape_cast %10 : vector<1x128x128xf32> to vector<128x128xf32>
    %12 = arith.index_cast %arg0 : i32 to index
    %c0_8 = arith.constant 0 : index
    %c0_9 = arith.constant 0 : index
    %13 = vector.load %arg7[%12, %c0_8, %c0_9] : memref<3x8x128xf32, #tpu.memory_space<vmem>>, vector<1x8x128xf32>
    %14 = vector.shape_cast %13 : vector<1x8x128xf32> to vector<8x128xf32>
    %15 = vector.extract_strided_slice %14 {offsets = [0, 0], sizes = [1, 128], strides = [1, 1]} : vector<8x128xf32> to vector<1x128xf32>
    %16 = vector.extract_strided_slice %14 {offsets = [1, 0], sizes = [1, 128], strides = [1, 1]} : vector<8x128xf32> to vector<1x128xf32>
    %17 = vector.extract_strided_slice %14 {offsets = [2, 0], sizes = [1, 128], strides = [1, 1]} : vector<8x128xf32> to vector<1x128xf32>
    %18 = vector.extract_strided_slice %14 {offsets = [3, 0], sizes = [1, 128], strides = [1, 1]} : vector<8x128xf32> to vector<1x128xf32>
    %cst_10 = arith.constant dense<0.000000e+00> : vector<128x128xf32>
    %19 = tpu.matmul %5, %8, %cst_10 {dimension_numbers = #tpu.dot_dimension_numbers<[1], [0], [0], [1], [0, 0, 1, 1], [], []>} : vector<128x128xf32>, vector<128x128xf32>, vector<128x128xf32> -> vector<128x128xf32>
    %20 = vector.broadcast %15 : vector<1x128xf32> to vector<128x128xf32>
    %21 = arith.addf %19, %20 : vector<128x128xf32>
    %cst_11 = arith.constant 0.000000e+00 : f32
    %22 = vector.broadcast %cst_11 : f32 to vector<128x128xf32>
    %23 = arith.maximumf %21, %22 : vector<128x128xf32>
    %cst_12 = arith.constant dense<0.000000e+00> : vector<128x128xf32>
    %24 = tpu.matmul %23, %11, %cst_12 {dimension_numbers = #tpu.dot_dimension_numbers<[1], [0], [0], [1], [0, 0, 1, 1], [], []>} : vector<128x128xf32>, vector<128x128xf32>, vector<128x128xf32> -> vector<128x128xf32>
    %25 = vector.broadcast %16 : vector<1x128xf32> to vector<128x128xf32>
    %26 = arith.addf %24, %25 : vector<128x128xf32>
    %cst_13 = arith.constant 0.000000e+00 : f32
    %27 = vector.broadcast %cst_13 : f32 to vector<128x128xf32>
    %28 = arith.maximumf %26, %27 : vector<128x128xf32>
    %c0_14 = arith.constant 0 : index
    %c0_15 = arith.constant 0 : index
    %29 = vector.load %arg4[%c0_14, %c0_15] : memref<128x1xf32, #tpu.memory_space<vmem>>, vector<128x1xf32>
    %30 = vector.broadcast %29 : vector<128x1xf32> to vector<128x128xf32>
    %31 = arith.mulf %28, %30 : vector<128x128xf32>
    %cst_16 = arith.constant dense<0.000000e+00> : vector<128xf32>
    %32 = vector.multi_reduction <add>, %31, %cst_16 [0] : vector<128x128xf32> to vector<128xf32>
    %33 = vector.shape_cast %32 : vector<128xf32> to vector<1x128xf32>
    %cst_17 = arith.constant 6.250000e-02 : f32
    %34 = vector.broadcast %cst_17 : f32 to vector<1x128xf32>
    %35 = arith.mulf %33, %34 : vector<1x128xf32>
    %36 = vector.broadcast %35 : vector<1x128xf32> to vector<128x128xf32>
    %37 = arith.subf %31, %36 : vector<128x128xf32>
    %38 = arith.mulf %37, %37 : vector<128x128xf32>
    %39 = vector.broadcast %29 : vector<128x1xf32> to vector<128x128xf32>
    %40 = arith.mulf %38, %39 : vector<128x128xf32>
    %cst_18 = arith.constant dense<0.000000e+00> : vector<128xf32>
    %41 = vector.multi_reduction <add>, %40, %cst_18 [0] : vector<128x128xf32> to vector<128xf32>
    %42 = vector.shape_cast %41 : vector<128xf32> to vector<1x128xf32>
    %cst_19 = arith.constant 6.250000e-02 : f32
    %43 = vector.broadcast %cst_19 : f32 to vector<1x128xf32>
    %44 = arith.mulf %42, %43 : vector<1x128xf32>
    %45 = vector.broadcast %17 : vector<1x128xf32> to vector<128x128xf32>
    %46 = arith.mulf %45, %37 : vector<128x128xf32>
    %cst_20 = arith.constant 9.99999974E-6 : f32
    %47 = vector.broadcast %cst_20 : f32 to vector<1x128xf32>
    %48 = arith.addf %44, %47 : vector<1x128xf32>
    %49 = math.rsqrt %48 : vector<1x128xf32>
    %50 = vector.broadcast %49 : vector<1x128xf32> to vector<128x128xf32>
    %51 = arith.mulf %46, %50 : vector<128x128xf32>
    %52 = vector.broadcast %18 : vector<1x128xf32> to vector<128x128xf32>
    %53 = arith.addf %51, %52 : vector<128x128xf32>
    %54 = vector.broadcast %29 : vector<128x1xf32> to vector<128x128xf32>
    %55 = arith.mulf %53, %54 : vector<128x128xf32>
    %56 = arith.truncf %55 : vector<128x128xf32> to vector<128x128xbf16>
    %c0_21 = arith.constant 0 : index
    %c0_22 = arith.constant 0 : index
    %57 = vector.load %arg10[%c0_21, %c0_22] : memref<128x128xbf16, #tpu.memory_space<vmem>>, vector<128x128xbf16>
    tpu.vector_store %arg10[%c0_21, %c0_22], %56 {strides = array<i32>} : memref<128x128xbf16, #tpu.memory_space<vmem>>, vector<128x128xbf16>,
    %c0_23 = arith.constant 0 : index
    %c0_24 = arith.constant 0 : index
    %58 = vector.load %arg8[%c0_23, %c0_24] : memref<128x128xf32, #tpu.memory_space<vmem>>, vector<128x128xf32>
    tpu.vector_store %arg8[%c0_23, %c0_24], %55 {strides = array<i32>} : memref<128x128xf32, #tpu.memory_space<vmem>>, vector<128x128xf32>,
    %c0_25 = arith.constant 0 : index
    %c0_26 = arith.constant 0 : index
    %59 = vector.load %arg3[%c0_25, %c0_26] : memref<16x128xbf16, #tpu.memory_space<vmem>>, vector<16x128xbf16>
    %cst_27 = arith.constant dense<0.000000e+00> : vector<16x128xf32>
    %60 = tpu.matmul %59, %56, %cst_27 {dimension_numbers = #tpu.dot_dimension_numbers<[1], [0], [0], [1], [0, 0, 1, 1], [], []>} : vector<16x128xbf16>, vector<128x128xbf16>, vector<16x128xf32> -> vector<16x128xf32>
    %c0_28 = arith.constant 0 : index
    %c0_29 = arith.constant 0 : index
    %61 = vector.load %arg9[%c0_28, %c0_29] : memref<16x128xf32, #tpu.memory_space<vmem>>, vector<16x128xf32>
    tpu.vector_store %arg9[%c0_28, %c0_29], %60 {strides = array<i32>} : memref<16x128xf32, #tpu.memory_space<vmem>>, vector<16x128xf32>,
    return
  }
  func.func @transform_0(%arg0: i32) -> (i32, i32) {
    %c0_i32 = arith.constant 0 : i32
    %c0_i32_0 = arith.constant 0 : i32
    %c0_i32_1 = arith.constant 0 : i32
    return %c0_i32, %c0_i32_0 : i32, i32
  }
  func.func @transform_1(%arg0: i32) -> (i32, i32) {
    %c0_i32 = arith.constant 0 : i32
    %c0_i32_0 = arith.constant 0 : i32
    %c0_i32_1 = arith.constant 0 : i32
    return %c0_i32, %c0_i32_0 : i32, i32
  }
  func.func @transform_2(%arg0: i32) -> (i32, i32) {
    %c0_i32 = arith.constant 0 : i32
    %c0_i32_0 = arith.constant 0 : i32
    %c0_i32_1 = arith.constant 0 : i32
    return %c0_i32, %c0_i32_0 : i32, i32
  }
  func.func @transform_3(%arg0: i32) -> (i32, i32) {
    %c0_i32 = arith.constant 0 : i32
    %c0_i32_0 = arith.constant 0 : i32
    %c0_i32_1 = arith.constant 0 : i32
    return %c0_i32, %c0_i32_0 : i32, i32
  }
  func.func @transform_4(%arg0: i32) -> (i32, i32, i32) {
    %c0_i32 = arith.constant 0 : i32
    %c0_i32_0 = arith.constant 0 : i32
    %c0_i32_1 = arith.constant 0 : i32
    %c0_i32_2 = arith.constant 0 : i32
    return %c0_i32, %c0_i32_0, %c0_i32_1 : i32, i32, i32
  }
  func.func @transform_5(%arg0: i32) -> (i32, i32, i32) {
    %c0_i32 = arith.constant 0 : i32
    %c0_i32_0 = arith.constant 0 : i32
    %c0_i32_1 = arith.constant 0 : i32
    %c0_i32_2 = arith.constant 0 : i32
    return %c0_i32, %c0_i32_0, %c0_i32_1 : i32, i32, i32
  }
  func.func @transform_6(%arg0: i32) -> (i32, i32, i32) {
    %c0_i32 = arith.constant 0 : i32
    %c0_i32_0 = arith.constant 0 : i32
    %c0_i32_1 = arith.constant 0 : i32
    %c0_i32_2 = arith.constant 0 : i32
    return %c0_i32, %c0_i32_0, %c0_i32_1 : i32, i32, i32
  }
  func.func @transform_7(%arg0: i32) -> (i32, i32) {
    %c0_i32 = arith.constant 0 : i32
    %c0_i32_0 = arith.constant 0 : i32
    return %c0_i32, %arg0 : i32, i32
  }
  func.func @transform_8(%arg0: i32) -> (i32, i32) {
    %c0_i32 = arith.constant 0 : i32
    %c0_i32_0 = arith.constant 0 : i32
    return %c0_i32, %arg0 : i32, i32
  }
}

</mosaic_0001>

<llo_original>
// kernel: _run_fused.1
$region0: #{_run_fused.1}
  #allocation0 [shape = 'u32[]', space=smem, size = 0x4, offset = 0x4, fixed_abs, tag = 'smem constant byte address 0x4 - core index']
  #allocation1 [shape = 'u32[144,128]{1,0:T(1,128)}', space=vmem, size = 0x12000, scoped, tag = 'internal scratch']
  #allocation2 [shape = 'bf16[128,128]{1,0:T(16,128)(2,1)}', space=vmem, size = 0x8000, scoped, tag = 'scratch operand']
  %s0 = inlined_call_operand.vmem [shape: bf16[128,128], index: 0, kind: input, shape index: {}]
  %s1 = inlined_call_operand.vmem [shape: bf16[128,128], index: 1, kind: input, shape index: {}]
  %s2 = inlined_call_operand.vmem [shape: bf16[16,128], index: 2, kind: input, shape index: {}]
  %s3 = inlined_call_operand.vmem [shape: f32[128,1], index: 3, kind: input, shape index: {}]
  %s4 = inlined_call_operand.hbm [shape: f32[3,128,128], index: 4, kind: input, shape index: {}]
  %s5 = inlined_call_operand.hbm [shape: f32[3,128,128], index: 5, kind: input, shape index: {}]
  %s6 = inlined_call_operand.hbm [shape: f32[3,8,128], index: 6, kind: input, shape index: {}]
  %s7 = inlined_call_operand.hbm [shape: f32[128,384], index: 7, kind: output, shape index: {0}]
  %s8 = inlined_call_operand.hbm [shape: f32[16,384], index: 8, kind: output, shape index: {1}]
  %9 = xla_tuple %s7, %s8
  %s10 = sld [smem:[#allocation0]]
  $region85: #{_run_fused.1} parent=0
    _
  %s12 = ssub.s32 1, %s10
  %s13 = scalar_select 0, %s12, %s10
  $region1: #{_run_fused.1} parent=0
    #allocation3 [shape = 'u8[196608]{0}', space=vmem, size = 0x30000, scoped, tag = 'input window, operand 4, single buffered']
    #allocation4 [shape = 's32[2]{0}', space=sflag, size = 0x8, scoped, tag = 'scoped memory for _run_fused.1']
    #allocation5 [shape = 's32[2]{0}', space=sflag, size = 0x8, scoped, tag = 'scoped memory for _run_fused.1']
    #allocation6 [shape = 'u8[196608]{0}', space=vmem, size = 0x30000, scoped, tag = 'input window, operand 5, single buffered']
    #allocation7 [shape = 's32[1]{0}', space=sflag, size = 0x4, scoped, tag = 'scoped memory for _run_fused.1']
    #allocation8 [shape = 'u8[12288]{0}', space=vmem, size = 0x3000, scoped, tag = 'input window, operand 6, single buffered']
    #allocation9 [shape = 'u8[131072]{0}', space=vmem, size = 0x20000, scoped, tag = 'output window, operand 0']
    #allocation10 [shape = 'u8[16384]{0}', space=vmem, size = 0x4000, scoped, tag = 'output window, operand 1']
    #allocation11 [shape = 's32[2]{0}', space=sflag, size = 0x8, scoped, tag = 'scoped memory for _run_fused.1']
    %14 = vsyncpa [#allocation4], 0
    %15 = vsyncpa [#allocation7], 0
    %16 = vsyncpa [#allocation5], 0
    %s17 = scalar_lea.sflag [#allocation5], 1
    %18 = vsyncpa %s17, 0
    %19 = vsyncpa [#allocation11], 0
    %s20 = scalar_lea.sflag [#allocation11], 1
    %21 = vsyncpa %s20, 0
    loop: start=0, step=1, limit=5
    $region2: #{_run_fused.1} parent=1 // loop_pre_header
      _
    $region3: #{_run_fused.1} parent=1 // loop_header
      %s23 = sphi 0, %s27
      %p24 = scmp.ge.s32.totalorder %s23, 5
      %s31 = sphi 0, %s31
      %s33 = sphi 0, %s31
      %s34 = sphi 0, %s33
      %s48 = sphi 0, %s34
      %s52 = sphi 0, %s52
      %s54 = sphi 0, %s52
      %s55 = sphi 0, %s54
      %s69 = sphi 0, %s55
      %s73 = sphi 0, %s73
      %s75 = sphi 0, %s73
      %s76 = sphi 0, %s75
      %s90 = sphi 0, %s76
      %s94 = sphi 0, %s94
      %s96 = sphi 0, %s94
      %s97 = sphi 0, %s96
      %s111 = sphi 0, %s97
      %s115 = sphi 0, %s115
      %s117 = sphi 0, %s115
      %s118 = sphi 0, %s117
      %s132 = sphi 0, %s118
      %s136 = sphi 0, %s136
      %s138 = sphi 0, %s136
      %s139 = sphi 0, %s138
      %s153 = sphi 0, %s139
      %s157 = sphi 0, %s157
      %s159 = sphi 0, %s157
      %s160 = sphi 0, %s159
      %s174 = sphi 0, %s160
      %s180 = sphi 0, %s182
      %s183 = sphi 0, %s180
      %s184 = sphi 0, %s183
      %s200 = sphi 0, %s184
      %s206 = sphi 0, %s208
      %s209 = sphi 0, %s206
      %s210 = sphi 0, %s209
      %s226 = sphi 0, %s210
    $region4: #{_run_fused.1} parent=1 // loop_header_branch
      %26 = sbr.rel (%p24) target = $region8
    $region5: #{_run_fused.1} parent=1 // loop_body
      %s28 = ssub.s32 %s23, 1
      %s29 = ssub.s32 %s23, 2
      %s30 = sadd.s32 %s23, 1
      %s32 = sadd.s32 %s31, 1
      %p35 = scmp.eq.s32.totalorder %s23, 2
      %p36 = scmp.ne.s32.totalorder %s31, %s33
      %p37 = scmp.eq.s32.totalorder %s23, 0
      %p38 = por %p36, %p37
      %p39 = scmp.ne.s32.totalorder %s31, %s33
      %p40 = scmp.eq.s32.totalorder %s28, 2
      %p41 = por %p39, %p40
      %p42 = scmp.ne.s32.totalorder %s33, %s34
      %p43 = scmp.eq.s32.totalorder %s28, 0
      %p44 = por %p42, %p43
      %p45 = scmp.ne.s32.totalorder %s33, %s34
      %p46 = scmp.eq.s32.totalorder %s29, 2
      %p47 = por %p45, %p46
      %p49 = scmp.ne.s32.totalorder %s34, %s48
      %p50 = scmp.eq.s32.totalorder %s29, 0
      %p51 = por %p49, %p50
      %s53 = sadd.s32 %s52, 1
      %p56 = scmp.eq.s32.totalorder %s23, 2
      %p57 = scmp.ne.s32.totalorder %s52, %s54
      %p58 = scmp.eq.s32.totalorder %s23, 0
      %p59 = por %p57, %p58
      %p60 = scmp.ne.s32.totalorder %s52, %s54
      %p61 = scmp.eq.s32.totalorder %s28, 2
      %p62 = por %p60, %p61
      %p63 = scmp.ne.s32.totalorder %s54, %s55
      %p64 = scmp.eq.s32.totalorder %s28, 0
      %p65 = por %p63, %p64
      %p66 = scmp.ne.s32.totalorder %s54, %s55
      %p67 = scmp.eq.s32.totalorder %s29, 2
      %p68 = por %p66, %p67
      %p70 = scmp.ne.s32.totalorder %s55, %s69
      %p71 = scmp.eq.s32.totalorder %s29, 0
      %p72 = por %p70, %p71
      %s74 = sadd.s32 %s73, 1
      %p77 = scmp.eq.s32.totalorder %s23, 2
      %p78 = scmp.ne.s32.totalorder %s73, %s75
      %p79 = scmp.eq.s32.totalorder %s23, 0
      %p80 = por %p78, %p79
      %p81 = scmp.ne.s32.totalorder %s73, %s75
      %p82 = scmp.eq.s32.totalorder %s28, 2
      %p83 = por %p81, %p82
      %p84 = scmp.ne.s32.totalorder %s75, %s76
      %p85 = scmp.eq.s32.totalorder %s28, 0
      %p86 = por %p84, %p85
      %p87 = scmp.ne.s32.totalorder %s75, %s76
      %p88 = scmp.eq.s32.totalorder %s29, 2
      %p89 = por %p87, %p88
      %p91 = scmp.ne.s32.totalorder %s76, %s90
      %p92 = scmp.eq.s32.totalorder %s29, 0
      %p93 = por %p91, %p92
      %s95 = sadd.s32 %s94, 1
      %p98 = scmp.eq.s32.totalorder %s23, 2
      %p99 = scmp.ne.s32.totalorder %s94, %s96
      %p100 = scmp.eq.s32.totalorder %s23, 0
      %p101 = por %p99, %p100
      %p102 = scmp.ne.s32.totalorder %s94, %s96
      %p103 = scmp.eq.s32.totalorder %s28, 2
      %p104 = por %p102, %p103
      %p105 = scmp.ne.s32.totalorder %s96, %s97
      %p106 = scmp.eq.s32.totalorder %s28, 0
      %p107 = por %p105, %p106
      %p108 = scmp.ne.s32.totalorder %s96, %s97
      %p109 = scmp.eq.s32.totalorder %s29, 2
      %p110 = por %p108, %p109
      %p112 = scmp.ne.s32.totalorder %s97, %s111
      %p113 = scmp.eq.s32.totalorder %s29, 0
      %p114 = por %p112, %p113
      %s116 = sadd.s32 %s115, 1
      %p119 = scmp.eq.s32.totalorder %s23, 2
      %p120 = scmp.ne.s32.totalorder %s115, %s117
      %p121 = scmp.eq.s32.totalorder %s23, 0
      %p122 = por %p120, %p121
      %p123 = scmp.ne.s32.totalorder %s115, %s117
      %p124 = scmp.eq.s32.totalorder %s28, 2
      %p125 = por %p123, %p124
      %p126 = scmp.ne.s32.totalorder %s117, %s118
      %p127 = scmp.eq.s32.totalorder %s28, 0
      %p128 = por %p126, %p127
      %p129 = scmp.ne.s32.totalorder %s117, %s118
      %p130 = scmp.eq.s32.totalorder %s29, 2
      %p131 = por %p129, %p130
      %p133 = scmp.ne.s32.totalorder %s118, %s132
      %p134 = scmp.eq.s32.totalorder %s29, 0
      %p135 = por %p133, %p134
      %s137 = sadd.s32 %s136, 1
      %p140 = scmp.eq.s32.totalorder %s23, 2
      %p141 = scmp.ne.s32.totalorder %s136, %s138
      %p142 = scmp.eq.s32.totalorder %s23, 0
      %p143 = por %p141, %p142
      %p144 = scmp.ne.s32.totalorder %s136, %s138
      %p145 = scmp.eq.s32.totalorder %s28, 2
      %p146 = por %p144, %p145
      %p147 = scmp.ne.s32.totalorder %s138, %s139
      %p148 = scmp.eq.s32.totalorder %s28, 0
      %p149 = por %p147, %p148
      %p150 = scmp.ne.s32.totalorder %s138, %s139
      %p151 = scmp.eq.s32.totalorder %s29, 2
      %p152 = por %p150, %p151
      %p154 = scmp.ne.s32.totalorder %s139, %s153
      %p155 = scmp.eq.s32.totalorder %s29, 0
      %p156 = por %p154, %p155
      %s158 = sadd.s32 %s157, 1
      %p161 = scmp.eq.s32.totalorder %s23, 2
      %p162 = scmp.ne.s32.totalorder %s157, %s159
      %p163 = scmp.eq.s32.totalorder %s23, 0
      %p164 = por %p162, %p163
      %p165 = scmp.ne.s32.totalorder %s157, %s159
      %p166 = scmp.eq.s32.totalorder %s28, 2
      %p167 = por %p165, %p166
      %p168 = scmp.ne.s32.totalorder %s159, %s160
      %p169 = scmp.eq.s32.totalorder %s28, 0
      %p170 = por %p168, %p169
      %p171 = scmp.ne.s32.totalorder %s159, %s160
      %p172 = scmp.eq.s32.totalorder %s29, 2
      %p173 = por %p171, %p172
      %p175 = scmp.ne.s32.totalorder %s160, %s174
      %p176 = scmp.eq.s32.totalorder %s29, 0
      %p177 = por %p175, %p176
      %s178 = ssub.s32 %s23, %s30
      %p179 = scmp.eq.s32.totalorder %s178, 0
      %s181 = sadd.s32 %s180, 1
      %s182 = scalar_select %p179, %s180, %s181
      %p185 = pneg %p179
      %p186 = scmp.eq.s32.totalorder %s23, 2
      %p187 = por %p185, %p186
      %p188 = scmp.ne.s32.totalorder %s180, %s183
      %p189 = scmp.eq.s32.totalorder %s23, 0
      %p190 = por %p188, %p189
      %p191 = scmp.ne.s32.totalorder %s180, %s183
      %p192 = scmp.eq.s32.totalorder %s28, 2
      %p193 = por %p191, %p192
      %p194 = scmp.ne.s32.totalorder %s183, %s184
      %p195 = scmp.eq.s32.totalorder %s28, 0
      %p196 = por %p194, %p195
      %p197 = scmp.ne.s32.totalorder %s183, %s184
      %p198 = scmp.eq.s32.totalorder %s29, 2
      %p199 = por %p197, %p198
      %p201 = scmp.ne.s32.totalorder %s184, %s200
      %p202 = scmp.eq.s32.totalorder %s29, 0
      %p203 = por %p201, %p202
      %s204 = ssub.s32 %s23, %s30
      %p205 = scmp.eq.s32.totalorder %s204, 0
      %s207 = sadd.s32 %s206, 1
      %s208 = scalar_select %p205, %s206, %s207
      %p211 = pneg %p205
      %p212 = scmp.eq.s32.totalorder %s23, 2
      %p213 = por %p211, %p212
      %p214 = scmp.ne.s32.totalorder %s206, %s209
      %p215 = scmp.eq.s32.totalorder %s23, 0
      %p216 = por %p214, %p215
      %p217 = scmp.ne.s32.totalorder %s206, %s209
      %p218 = scmp.eq.s32.totalorder %s28, 2
      %p219 = por %p217, %p218
      %p220 = scmp.ne.s32.totalorder %s209, %s210
      %p221 = scmp.eq.s32.totalorder %s28, 0
      %p222 = por %p220, %p221
      %p223 = scmp.ne.s32.totalorder %s209, %s210
      %p224 = scmp.eq.s32.totalorder %s29, 2
      %p225 = por %p223, %p224
      %p227 = scmp.ne.s32.totalorder %s210, %s226
      %p228 = scmp.eq.s32.totalorder %s29, 0
      %p229 = por %p227, %p228
      %p230 = scmp.le.s32.totalorder 1, %s23
      %p231 = scmp.lt.s32.totalorder %s23, 4
      %p232 = pnand %p230, %p231
      %p233 = pneg %p232
      // Predicated region
      $region9: #{_run_fused.1} parent=5 // pred_check
        _
      $region10: #{_run_fused.1} parent=5 // pred_check_branch
        %235 = sbr.rel (%p232) target = $region12
      $region11: #{_run_fused.1} parent=5 // pred_region
        %s236 = ssub.s32 %s23, 1
        // Predicated region
        $region13: #{_run_fused.1} parent=11 // pred_check
          %p237 = pneg %p44
        $region14: #{_run_fused.1} parent=11 // pred_check_branch
          %239 = sbr.rel (%p237) target = $region16
        $region15: #{_run_fused.1} parent=11 // pred_region
          _
        $region16: #{_run_fused.1} parent=11 // pred_fallthru
          _
        // Predicated region
        $region17: #{_run_fused.1} parent=11 // pred_check
          %p240 = pneg %p65
        $region18: #{_run_fused.1} parent=11 // pred_check_branch
          %242 = sbr.rel (%p240) target = $region20
        $region19: #{_run_fused.1} parent=11 // pred_region
          _
        $region20: #{_run_fused.1} parent=11 // pred_fallthru
          _
        // Predicated region
        $region21: #{_run_fused.1} parent=11 // pred_check
          %p243 = pneg %p86
        $region22: #{_run_fused.1} parent=11 // pred_check_branch
          %245 = sbr.rel (%p243) target = $region24
        $region23: #{_run_fused.1} parent=11 // pred_region
          _
        $region24: #{_run_fused.1} parent=11 // pred_fallthru
          _
        // Predicated region
        $region25: #{_run_fused.1} parent=11 // pred_check
          %p246 = pneg %p107
        $region26: #{_run_fused.1} parent=11 // pred_check_branch
          %248 = sbr.rel (%p246) target = $region28
        $region27: #{_run_fused.1} parent=11 // pred_region
          _
        $region28: #{_run_fused.1} parent=11 // pred_fallthru
          _
        // Predicated region
        $region29: #{_run_fused.1} parent=11 // pred_check
          %p249 = pneg %p128
        $region30: #{_run_fused.1} parent=11 // pred_check_branch
          %251 = sbr.rel (%p249) target = $region32
        $region31: #{_run_fused.1} parent=11 // pred_region
          %s253 = ssub.s32 6144, 6144
          %254 = vsyncadd [#allocation4], %s253
          %s255 = sshll.u32 [#allocation3], 4
          %s256 = int_to_ptr.vmem [resolvable:$true] %s255
          %261 = dma.hbm_to_vmem [thread:$0]  %s4, 6144, %s256, [#allocation4], 128, 128, 8
        $region32: #{_run_fused.1} parent=11 // pred_fallthru
          _
        // Predicated region
        $region33: #{_run_fused.1} parent=11 // pred_check
          %p262 = pneg %p149
        $region34: #{_run_fused.1} parent=11 // pred_check_branch
          %264 = sbr.rel (%p262) target = $region36
        $region35: #{_run_fused.1} parent=11 // pred_region
          %s266 = ssub.s32 6144, 6144
          %267 = vsyncadd [#allocation7], %s266
          %s268 = sshll.u32 [#allocation6], 4
          %s269 = int_to_ptr.vmem [resolvable:$true] %s268
          %274 = dma.hbm_to_vmem [thread:$0]  %s5, 6144, %s269, [#allocation7], 128, 128, 8
        $region36: #{_run_fused.1} parent=11 // pred_fallthru
          _
        // Predicated region
        $region37: #{_run_fused.1} parent=11 // pred_check
          %p275 = pneg %p170
        $region38: #{_run_fused.1} parent=11 // pred_check_branch
          %277 = sbr.rel (%p275) target = $region40
        $region39: #{_run_fused.1} parent=11 // pred_region
          %s279 = ssub.s32 384, 384
          %280 = vsyncadd [#allocation7], %s279
          %s281 = sshll.u32 [#allocation8], 4
          %s282 = int_to_ptr.vmem [resolvable:$true] %s281
          %287 = dma.hbm_to_vmem [thread:$0]  %s6, 384, %s282, [#allocation7], 128, 128, 8
        $region40: #{_run_fused.1} parent=11 // pred_fallthru
          _
      $region12: #{_run_fused.1} parent=5 // pred_fallthru
        _
      %p288 = scmp.lt.s32.totalorder %s23, 3
      // Predicated region
      $region41: #{_run_fused.1} parent=5 // pred_check
        %p289 = pneg %p288
      $region42: #{_run_fused.1} parent=5 // pred_check_branch
        %291 = sbr.rel (%p289) target = $region44
      $region43: #{_run_fused.1} parent=5 // pred_region
        _
      $region44: #{_run_fused.1} parent=5 // pred_fallthru
        _
      %p292 = scmp.le.s32.totalorder 1, %s23
      %p293 = scmp.lt.s32.totalorder %s23, 4
      %p294 = pnand %p292, %p293
      %p295 = pneg %p294
      // Predicated region
      $region45: #{_run_fused.1} parent=5 // pred_check
        _
      $region46: #{_run_fused.1} parent=5 // pred_check_branch
        %297 = sbr.rel (%p294) target = $region48
      $region47: #{_run_fused.1} parent=5 // pred_region
        %s298 = ssub.s32 %s23, 1
        // Predicated region
        $region49: #{_run_fused.1} parent=47 // pred_check
          %p299 = pneg %p128
        $region50: #{_run_fused.1} parent=47 // pred_check_branch
          %301 = sbr.rel (%p299) target = $region52
        $region51: #{_run_fused.1} parent=47 // pred_region
          %302 = dma.done [#allocation4], 6144
        $region52: #{_run_fused.1} parent=47 // pred_fallthru
          _
        // Predicated region
        $region53: #{_run_fused.1} parent=47 // pred_check
          %p303 = pneg %p149
        $region54: #{_run_fused.1} parent=47 // pred_check_branch
          %305 = sbr.rel (%p303) target = $region56
        $region55: #{_run_fused.1} parent=47 // pred_region
          %306 = dma.done [#allocation7], 6144
        $region56: #{_run_fused.1} parent=47 // pred_fallthru
          _
        // Predicated region
        $region57: #{_run_fused.1} parent=47 // pred_check
          %p307 = pneg %p170
        $region58: #{_run_fused.1} parent=47 // pred_check_branch
          %309 = sbr.rel (%p307) target = $region60
        $region59: #{_run_fused.1} parent=47 // pred_region
          %310 = dma.done [#allocation7], 384
        $region60: #{_run_fused.1} parent=47 // pred_fallthru
          _
        %p311 = pneg %p44
        %p312 = pneg %p41
        %p313 = pneg %p65
        %p314 = pneg %p62
        %p315 = pneg %p86
        %p316 = pneg %p83
        %p317 = pneg %p107
        %p318 = pneg %p104
        %p319 = pneg %p128
        %p320 = pneg %p125
        %p321 = pneg %p149
        %p322 = pneg %p146
        %p323 = pneg %p170
        %p324 = pneg %p167
        %p325 = pneg %p196
        %p326 = pneg %p193
        %s327 = sand.u32 %s183, 1
        %s328 = scalar_lea.sflag [#allocation5], %s327
        %s329 = sand.u32 %s183, 1
        %s330 = smul.addr %s329, 128
        %s331 = scalar_lea.vmem [#allocation9], %s330
        %p332 = pneg %p222
        %p333 = pneg %p219
        %s334 = sand.u32 %s209, 1
        %s335 = scalar_lea.sflag [#allocation11], %s334
        %s336 = sand.u32 %s209, 1
        %s337 = smul.addr %s336, 16
        %s338 = scalar_lea.vmem [#allocation10], %s337
        %p340 = scmp.eq.s32.totalorder %s28, 0
        // Predicated region
        $region61: #{_run_fused.1} parent=47 // pred_check
          %p341 = pneg %p340
        $region62: #{_run_fused.1} parent=47 // pred_check_branch
          %343 = sbr.rel (%p341) target = $region64
        $region63: #{_run_fused.1} parent=47 // pred_region
          %v344 = vld [vmem:[%s1] sm:$0xf]
          %v345 = vld [vmem:[%s1 + $0x4] sm:$0xf]
          %v346 = vld [vmem:[%s1 + $0x8] sm:$0xf]
          %v347 = vld [vmem:[%s1 + $0xc] sm:$0xf]
          %v348 = vld [vmem:[%s1 + $0x10] sm:$0xf]
          %v349 = vld [vmem:[%s1 + $0x14] sm:$0xf]
          %v350 = vld [vmem:[%s1 + $0x18] sm:$0xf]
          %v351 = vld [vmem:[%s1 + $0x1c] sm:$0xf]
          %v352 = vld [vmem:[%s1 + $0x20] sm:$0xf]
          %v353 = vld [vmem:[%s1 + $0x24] sm:$0xf]
          %v354 = vld [vmem:[%s1 + $0x28] sm:$0xf]
          %v355 = vld [vmem:[%s1 + $0x2c] sm:$0xf]
          %v356 = vld [vmem:[%s1 + $0x30] sm:$0xf]
          %v357 = vld [vmem:[%s1 + $0x34] sm:$0xf]
          %v358 = vld [vmem:[%s1 + $0x38] sm:$0xf]
          %v359 = vld [vmem:[%s1 + $0x3c] sm:$0xf]
          %v376 = vunpack.c.l.b16 %v344
          %v377 = vunpack.c.l.b16 %v345
          %v378 = vunpack.c.l.b16 %v346
          %v379 = vunpack.c.l.b16 %v347
          %v380 = vunpack.c.l.b16 %v348
          %v381 = vunpack.c.l.b16 %v349
          %v382 = vunpack.c.l.b16 %v350
          %v383 = vunpack.c.l.b16 %v351
          %v384 = vunpack.c.l.b16 %v352
          %v385 = vunpack.c.l.b16 %v353
          %v386 = vunpack.c.l.b16 %v354
          %v387 = vunpack.c.l.b16 %v355
          %v388 = vunpack.c.l.b16 %v356
          %v389 = vunpack.c.l.b16 %v357
          %v390 = vunpack.c.l.b16 %v358
          %v391 = vunpack.c.l.b16 %v359
          %v392 = vpack.c.b16 %v377, %v376
          %v393 = vpack.c.b16 %v379, %v378
          %v394 = vpack.c.b16 %v381, %v380
          %v395 = vpack.c.b16 %v383, %v382
          %v396 = vpack.c.b16 %v385, %v384
          %v397 = vpack.c.b16 %v387, %v386
          %v398 = vpack.c.b16 %v389, %v388
          %v399 = vpack.c.b16 %v391, %v390
          %408 = vst [vmem:[#allocation2] sm:$0xff] %v392
          %409 = vst [vmem:[#allocation2 + $0x8] sm:$0xff] %v393
          %410 = vst [vmem:[#allocation2 + $0x10] sm:$0xff] %v394
          %411 = vst [vmem:[#allocation2 + $0x18] sm:$0xff] %v395
          %412 = vst [vmem:[#allocation2 + $0x20] sm:$0xff] %v396
          %413 = vst [vmem:[#allocation2 + $0x28] sm:$0xff] %v397
          %414 = vst [vmem:[#allocation2 + $0x30] sm:$0xff] %v398
          %415 = vst [vmem:[#allocation2 + $0x38] sm:$0xff] %v399
        $region64: #{_run_fused.1} parent=47 // pred_fallthru
          _
        %v416 = vld [vmem:[#allocation2] sm:$0xff]
        %v417 = vld [vmem:[#allocation2 + $0x8] sm:$0xff]
        %v418 = vld [vmem:[#allocation2 + $0x10] sm:$0xff]
        %v419 = vld [vmem:[#allocation2 + $0x18] sm:$0xff]
        %v420 = vld [vmem:[#allocation2 + $0x20] sm:$0xff]
        %v421 = vld [vmem:[#allocation2 + $0x28] sm:$0xff]
        %v422 = vld [vmem:[#allocation2 + $0x30] sm:$0xff]
        %v423 = vld [vmem:[#allocation2 + $0x38] sm:$0xff]
        %v424 = vld [vmem:[%s0] sm:$0xf]
        %v425 = vld [vmem:[%s0 + $0x4] sm:$0xf]
        %v426 = vld [vmem:[%s0 + $0x8] sm:$0xf]
        %v427 = vld [vmem:[%s0 + $0xc] sm:$0xf]
        %v428 = vld [vmem:[%s0 + $0x10] sm:$0xf]
        %v429 = vld [vmem:[%s0 + $0x14] sm:$0xf]
        %v430 = vld [vmem:[%s0 + $0x18] sm:$0xf]
        %v431 = vld [vmem:[%s0 + $0x1c] sm:$0xf]
        %v432 = vld [vmem:[%s0 + $0x20] sm:$0xf]
        %v433 = vld [vmem:[%s0 + $0x24] sm:$0xf]
        %v434 = vld [vmem:[%s0 + $0x28] sm:$0xf]
        %v435 = vld [vmem:[%s0 + $0x2c] sm:$0xf]
        %v436 = vld [vmem:[%s0 + $0x30] sm:$0xf]
        %v437 = vld [vmem:[%s0 + $0x34] sm:$0xf]
        %v438 = vld [vmem:[%s0 + $0x38] sm:$0xf]
        %v439 = vld [vmem:[%s0 + $0x3c] sm:$0xf]
        %v456 = vunpack.c.l.b16 %v424
        %v457 = vunpack.c.l.b16 %v425
        %v458 = vunpack.c.l.b16 %v426
        %v459 = vunpack.c.l.b16 %v427
        %v460 = vunpack.c.l.b16 %v428
        %v461 = vunpack.c.l.b16 %v429
        %v462 = vunpack.c.l.b16 %v430
        %v463 = vunpack.c.l.b16 %v431
        %v464 = vunpack.c.l.b16 %v432
        %v465 = vunpack.c.l.b16 %v433
        %v466 = vunpack.c.l.b16 %v434
        %v467 = vunpack.c.l.b16 %v435
        %v468 = vunpack.c.l.b16 %v436
        %v469 = vunpack.c.l.b16 %v437
        %v470 = vunpack.c.l.b16 %v438
        %v471 = vunpack.c.l.b16 %v439
        %v472 = vpack.c.b16 %v457, %v456
        %v473 = vpack.c.b16 %v459, %v458
        %v474 = vpack.c.b16 %v461, %v460
        %v475 = vpack.c.b16 %v463, %v462
        %v476 = vpack.c.b16 %v465, %v464
        %v477 = vpack.c.b16 %v467, %v466
        %v478 = vpack.c.b16 %v469, %v468
        %v479 = vpack.c.b16 %v471, %v470
        %488 = vmatprep.subr.bf16.mxu0 0
        %489 = vmatpush1.bf16.msra.mxu0 %v416
        %490 = vmatprep.subr.bf16.mxu0 0
        %491 = vmatpush1.bf16.msra.mxu0 %v417
        %492 = vmatprep.subr.bf16.mxu0 0
        %493 = vmatpush1.bf16.msra.mxu0 %v418
        %494 = vmatprep.subr.bf16.mxu0 0
        %495 = vmatpush1.bf16.msra.mxu0 %v419
        %496 = vmatprep.subr.bf16.mxu0 0
        %497 = vmatpush1.bf16.msra.mxu0 %v420
        %498 = vmatprep.subr.bf16.mxu0 0
        %499 = vmatpush1.bf16.msra.mxu0 %v421
        %500 = vmatprep.subr.bf16.mxu0 0
        %501 = vmatpush1.bf16.msra.mxu0 %v422
        %502 = vmatprep.subr.bf16.mxu0 0
        %503 = vmatpush1.bf16.msra.mxu0 %v423
        %504 = vmatprep.subr.bf16.mxu0 0
        %505 = vmatpush1.bf16.msra.mxu0 0
        %506 = vmatprep.subr.bf16.mxu0 0
        %507 = vmatpush1.bf16.msra.mxu0 0
        %508 = vmatprep.subr.bf16.mxu0 0
        %509 = vmatpush1.bf16.msra.mxu0 0
        %510 = vmatprep.subr.bf16.mxu0 0
        %511 = vmatpush1.bf16.msra.mxu0 0
        %512 = vmatprep.subr.bf16.mxu0 0
        %513 = vmatpush1.bf16.msra.mxu0 0
        %514 = vmatprep.subr.bf16.mxu0 0
        %515 = vmatpush1.bf16.msra.mxu0 0
        %516 = vmatprep.subr.bf16.mxu0 0
        %517 = vmatpush1.bf16.msra.mxu0 0
        %518 = vmatprep.subr.bf16.mxu0 0
        %519 = vmatpush1.bf16.msra.mxu0 0
        %520 = vmatprep.mubr.bf16.mxu0 0
        %521 = vmatmul.mubr.bf16.gmra.mrb[0].mxu0 %v472
        %v522 = vpop.f32.mrb[0].mxu0
        %v523 = vadd.f32 0.0, %v522
        %v524 = vpop.f32.mrb[0].mxu0
        %v525 = vpop.f32.mrb[0].mxu0
        %v526 = vadd.f32 0.0, %v525
        %v527 = vpop.f32.mrb[0].mxu0
        %528 = vmatprep.mubr.bf16.mxu0 0
        %529 = vmatmul.mubr.bf16.gmra.mrb[0].mxu0 %v473
        %v530 = vpop.f32.mrb[0].mxu0
        %v531 = vadd.f32 0.0, %v530
        %v532 = vpop.f32.mrb[0].mxu0
        %v533 = vpop.f32.mrb[0].mxu0
        %v534 = vadd.f32 0.0, %v533
        %v535 = vpop.f32.mrb[0].mxu0
        %536 = vmatprep.mubr.bf16.mxu0 0
        %537 = vmatmul.mubr.bf16.gmra.mrb[0].mxu0 %v474
        %v538 = vpop.f32.mrb[0].mxu0
        %v539 = vadd.f32 0.0, %v538
        %v540 = vpop.f32.mrb[0].mxu0
        %v541 = vpop.f32.mrb[0].mxu0
        %v542 = vadd.f32 0.0, %v541
        %v543 = vpop.f32.mrb[0].mxu0
        %544 = vmatprep.mubr.bf16.mxu0 0
        %545 = vmatmul.mubr.bf16.gmra.mrb[0].mxu0 %v475
        %v546 = vpop.f32.mrb[0].mxu0
        %v547 = vadd.f32 0.0, %v546
        %v548 = vpop.f32.mrb[0].mxu0
        %v549 = vpop.f32.mrb[0].mxu0
        %v550 = vadd.f32 0.0, %v549
        %v551 = vpop.f32.mrb[0].mxu0
        %552 = vmatprep.mubr.bf16.mxu0 0
        %553 = vmatmul.mubr.bf16.gmra.mrb[0].mxu0 %v476
        %v554 = vpop.f32.mrb[0].mxu0
        %v555 = vadd.f32 0.0, %v554
        %v556 = vpop.f32.mrb[0].mxu0
        %v557 = vpop.f32.mrb[0].mxu0
        %v558 = vadd.f32 0.0, %v557
        %v559 = vpop.f32.mrb[0].mxu0
        %560 = vmatprep.mubr.bf16.mxu0 0
        %561 = vmatmul.mubr.bf16.gmra.mrb[0].mxu0 %v477
        %v562 = vpop.f32.mrb[0].mxu0
        %v563 = vadd.f32 0.0, %v562
        %v564 = vpop.f32.mrb[0].mxu0
        %v565 = vpop.f32.mrb[0].mxu0
        %v566 = vadd.f32 0.0, %v565
        %v567 = vpop.f32.mrb[0].mxu0
        %568 = vmatprep.mubr.bf16.mxu0 0
        %569 = vmatmul.mubr.bf16.gmra.mrb[0].mxu0 %v478
        %v570 = vpop.f32.mrb[0].mxu0
        %v571 = vadd.f32 0.0, %v570
        %v572 = vpop.f32.mrb[0].mxu0
        %v573 = vpop.f32.mrb[0].mxu0
        %v574 = vadd.f32 0.0, %v573
        %v575 = vpop.f32.mrb[0].mxu0
        %576 = vmatprep.mubr.bf16.mxu0 0
        %577 = vmatmul.mubr.bf16.gmra.mrb[0].mxu0 %v479
        %v578 = vpop.f32.mrb[0].mxu0
        %v579 = vadd.f32 0.0, %v578
        %v580 = vpop.f32.mrb[0].mxu0
        %v581 = vpop.f32.mrb[0].mxu0
        %v582 = vadd.f32 0.0, %v581
        %v583 = vpop.f32.mrb[0].mxu0
        %584 = vdwg.mxu0
        %s585 = smul.u32 %s28, 128
        %s586 = scalar_lea.vmem [#allocation3], %s585
        %v587 = vld [vmem:[%s586] sm:$0xff]
        %v588 = vld [vmem:[%s586 + $0x8] sm:$0xff]
        %v589 = vld [vmem:[%s586 + $0x10] sm:$0xff]
        %v590 = vld [vmem:[%s586 + $0x18] sm:$0xff]
        %v591 = vld [vmem:[%s586 + $0x20] sm:$0xff]
        %v592 = vld [vmem:[%s586 + $0x28] sm:$0xff]
        %v593 = vld [vmem:[%s586 + $0x30] sm:$0xff]
        %v594 = vld [vmem:[%s586 + $0x38] sm:$0xff]
        %v595 = vld [vmem:[%s586 + $0x40] sm:$0xff]
        %v596 = vld [vmem:[%s586 + $0x48] sm:$0xff]
        %v597 = vld [vmem:[%s586 + $0x50] sm:$0xff]
        %v598 = vld [vmem:[%s586 + $0x58] sm:$0xff]
        %v599 = vld [vmem:[%s586 + $0x60] sm:$0xff]
        %v600 = vld [vmem:[%s586 + $0x68] sm:$0xff]
        %v601 = vld [vmem:[%s586 + $0x70] sm:$0xff]
        %v602 = vld [vmem:[%s586 + $0x78] sm:$0xff]
        %s603 = scalar_lea.vmem [#allocation6], %s585
        %v604 = vld [vmem:[%s603] sm:$0xff]
        %v605 = vld [vmem:[%s603 + $0x8] sm:$0xff]
        %v606 = vld [vmem:[%s603 + $0x10] sm:$0xff]
        %v607 = vld [vmem:[%s603 + $0x18] sm:$0xff]
        %v608 = vld [vmem:[%s603 + $0x20] sm:$0xff]
        %v609 = vld [vmem:[%s603 + $0x28] sm:$0xff]
        %v610 = vld [vmem:[%s603 + $0x30] sm:$0xff]
        %v611 = vld [vmem:[%s603 + $0x38] sm:$0xff]
        %v612 = vld [vmem:[%s603 + $0x40] sm:$0xff]
        %v613 = vld [vmem:[%s603 + $0x48] sm:$0xff]
        %v614 = vld [vmem:[%s603 + $0x50] sm:$0xff]
        %v615 = vld [vmem:[%s603 + $0x58] sm:$0xff]
        %v616 = vld [vmem:[%s603 + $0x60] sm:$0xff]
        %v617 = vld [vmem:[%s603 + $0x68] sm:$0xff]
        %v618 = vld [vmem:[%s603 + $0x70] sm:$0xff]
        %v619 = vld [vmem:[%s603 + $0x78] sm:$0xff]
        %s620 = smul.u32 %s28, 8
        %s621 = scalar_lea.vmem [#allocation8], %s620
        %v622 = vld [vmem:[%s621] sm:$0xff]
        %v623 = vlaneseq
        %v624 = vshrl.u32 %v623, 7
        %v625 = vsub.s32 0, %v624
        %v626 = vrot.slane %v622, %v625
        %627 = vmatprep.subr.mxu0 0.0
        %628 = vmatpush1.msra.mxu0 %v587
        %629 = vmatprep.subr.mxu0 0.0
        %630 = vmatpush1.msra.mxu0 %v588
        %631 = vmatprep.subr.mxu0 0.0
        %632 = vmatpush1.msra.mxu0 %v589
        %633 = vmatprep.subr.mxu0 0.0
        %634 = vmatpush1.msra.mxu0 %v590
        %635 = vmatprep.subr.mxu0 0.0
        %636 = vmatpush1.msra.mxu0 %v591
        %637 = vmatprep.subr.mxu0 0.0
        %638 = vmatpush1.msra.mxu0 %v592
        %639 = vmatprep.subr.mxu0 0.0
        %640 = vmatpush1.msra.mxu0 %v593
        %641 = vmatprep.subr.mxu0 0.0
        %642 = vmatpush1.msra.mxu0 %v594
        %643 = vmatprep.subr.mxu0 0.0
        %644 = vmatpush1.msra.mxu0 %v595
        %645 = vmatprep.subr.mxu0 0.0
        %646 = vmatpush1.msra.mxu0 %v596
        %647 = vmatprep.subr.mxu0 0.0
        %648 = vmatpush1.msra.mxu0 %v597
        %649 = vmatprep.subr.mxu0 0.0
        %650 = vmatpush1.msra.mxu0 %v598
        %651 = vmatprep.subr.mxu0 0.0
        %652 = vmatpush1.msra.mxu0 %v599
        %653 = vmatprep.subr.mxu0 0.0
        %654 = vmatpush1.msra.mxu0 %v600
        %655 = vmatprep.subr.mxu0 0.0
        %656 = vmatpush1.msra.mxu0 %v601
        %657 = vmatprep.subr.mxu0 0.0
        %658 = vmatpush1.msra.mxu0 %v602
        %659 = vmatprep.subr.mxu0 0.0
        %660 = vmatpush1.msra.mxu0 0.0
        %661 = vmatprep.subr.mxu0 0.0
        %662 = vmatpush1.msra.mxu0 0.0
        %663 = vmatprep.subr.mxu0 0.0
        %664 = vmatpush1.msra.mxu0 0.0
        %665 = vmatprep.subr.mxu0 0.0
        %666 = vmatpush1.msra.mxu0 0.0
        %667 = vmatprep.subr.mxu0 0.0
        %668 = vmatpush1.msra.mxu0 0.0
        %669 = vmatprep.subr.mxu0 0.0
        %670 = vmatpush1.msra.mxu0 0.0
        %671 = vmatprep.subr.mxu0 0.0
        %672 = vmatpush1.msra.mxu0 0.0
        %673 = vmatprep.subr.mxu0 0.0
        %674 = vmatpush1.msra.mxu0 0.0
        %675 = vmatprep.subr.mxu0 0.0
        %676 = vmatpush1.msra.mxu0 0.0
        %677 = vmatprep.subr.mxu0 0.0
        %678 = vmatpush1.msra.mxu0 0.0
        %679 = vmatprep.subr.mxu0 0.0
        %680 = vmatpush1.msra.mxu0 0.0
        %681 = vmatprep.subr.mxu0 0.0
        %682 = vmatpush1.msra.mxu0 0.0
        %683 = vmatprep.subr.mxu0 0.0
        %684 = vmatpush1.msra.mxu0 0.0
        %685 = vmatprep.subr.mxu0 0.0
        %686 = vmatpush1.msra.mxu0 0.0
        %687 = vmatprep.subr.mxu0 0.0
        %688 = vmatpush1.msra.mxu0 0.0
        %689 = vmatprep.subr.mxu0 0.0
        %690 = vmatpush1.msra.mxu0 0.0
        %691 = vmatprep.mubr.f32.mxu0 0.0
        %692 = vmatmul.mubr.f32.gmra.mrb[0].mxu0 %v523
        %v693 = vpop.f32.mrb[0].mxu0
        %v694 = vadd.f32 %v626, %v693
        %v695 = vpop.f32.mrb[0].mxu0
        %696 = vmatprep.mubr.f32.mxu0 0.0
        %697 = vmatmul.mubr.f32.gmra.mrb[0].mxu0 %v526
        %v698 = vpop.f32.mrb[0].mxu0
        %v699 = vadd.f32 %v626, %v698
        %v700 = vpop.f32.mrb[0].mxu0
        %701 = vmatprep.mubr.f32.mxu0 0.0
        %702 = vmatmul.mubr.f32.gmra.mrb[0].mxu0 %v531
        %v703 = vpop.f32.mrb[0].mxu0
        %v704 = vadd.f32 %v626, %v703
        %v705 = vpop.f32.mrb[0].mxu0
        %706 = vmatprep.mubr.f32.mxu0 0.0
        %707 = vmatmul.mubr.f32.gmra.mrb[0].mxu0 %v534
        %v708 = vpop.f32.mrb[0].mxu0
        %v709 = vadd.f32 %v626, %v708
        %v710 = vpop.f32.mrb[0].mxu0
        %711 = vmatprep.mubr.f32.mxu0 0.0
        %712 = vmatmul.mubr.f32.gmra.mrb[0].mxu0 %v539
        %v713 = vpop.f32.mrb[0].mxu0
        %v714 = vadd.f32 %v626, %v713
        %v715 = vpop.f32.mrb[0].mxu0
        %716 = vmatprep.mubr.f32.mxu0 0.0
        %717 = vmatmul.mubr.f32.gmra.mrb[0].mxu0 %v542
        %v718 = vpop.f32.mrb[0].mxu0
        %v719 = vadd.f32 %v626, %v718
        %v720 = vpop.f32.mrb[0].mxu0
        %721 = vmatprep.mubr.f32.mxu0 0.0
        %722 = vmatmul.mubr.f32.gmra.mrb[0].mxu0 %v547
        %v723 = vpop.f32.mrb[0].mxu0
        %v724 = vadd.f32 %v626, %v723
        %v725 = vpop.f32.mrb[0].mxu0
        %726 = vmatprep.mubr.f32.mxu0 0.0
        %727 = vmatmul.mubr.f32.gmra.mrb[0].mxu0 %v550
        %v728 = vpop.f32.mrb[0].mxu0
        %v729 = vadd.f32 %v626, %v728
        %v730 = vpop.f32.mrb[0].mxu0
        %731 = vmatprep.mubr.f32.mxu0 0.0
        %732 = vmatmul.mubr.f32.gmra.mrb[0].mxu0 %v555
        %v733 = vpop.f32.mrb[0].mxu0
        %v734 = vadd.f32 %v626, %v733
        %v735 = vpop.f32.mrb[0].mxu0
        %736 = vmatprep.mubr.f32.mxu0 0.0
        %737 = vmatmul.mubr.f32.gmra.mrb[0].mxu0 %v558
        %v738 = vpop.f32.mrb[0].mxu0
        %v739 = vadd.f32 %v626, %v738
        %v740 = vpop.f32.mrb[0].mxu0
        %741 = vmatprep.mubr.f32.mxu0 0.0
        %742 = vmatmul.mubr.f32.gmra.mrb[0].mxu0 %v563
        %v743 = vpop.f32.mrb[0].mxu0
        %v744 = vadd.f32 %v626, %v743
        %v745 = vpop.f32.mrb[0].mxu0
        %746 = vmatprep.mubr.f32.mxu0 0.0
        %747 = vmatmul.mubr.f32.gmra.mrb[0].mxu0 %v566
        %v748 = vpop.f32.mrb[0].mxu0
        %v749 = vadd.f32 %v626, %v748
        %v750 = vpop.f32.mrb[0].mxu0
        %751 = vmatprep.mubr.f32.mxu0 0.0
        %752 = vmatmul.mubr.f32.gmra.mrb[0].mxu0 %v571
        %v753 = vpop.f32.mrb[0].mxu0
        %v754 = vadd.f32 %v626, %v753
        %v755 = vpop.f32.mrb[0].mxu0
        %756 = vmatprep.mubr.f32.mxu0 0.0
        %757 = vmatmul.mubr.f32.gmra.mrb[0].mxu0 %v574
        %v758 = vpop.f32.mrb[0].mxu0
        %v759 = vadd.f32 %v626, %v758
        %v760 = vpop.f32.mrb[0].mxu0
        %761 = vmatprep.mubr.f32.mxu0 0.0
        %762 = vmatmul.mubr.f32.gmra.mrb[0].mxu0 %v579
        %v763 = vpop.f32.mrb[0].mxu0
        %v764 = vadd.f32 %v626, %v763
        %v765 = vpop.f32.mrb[0].mxu0
        %766 = vmatprep.mubr.f32.mxu0 0.0
        %767 = vmatmul.mubr.f32.gmra.mrb[0].mxu0 %v582
        %v768 = vpop.f32.mrb[0].mxu0
        %v769 = vadd.f32 %v626, %v768
        %v770 = vpop.f32.mrb[0].mxu0
        %771 = vdwg.mxu0
        %v772 = vmax.f32 %v694, 0.0
        %v773 = vmax.f32 %v699, 0.0
        %v774 = vmax.f32 %v704, 0.0
        %v775 = vmax.f32 %v709, 0.0
        %v776 = vmax.f32 %v714, 0.0
        %v777 = vmax.f32 %v719, 0.0
        %v778 = vmax.f32 %v724, 0.0
        %v779 = vmax.f32 %v729, 0.0
        %v780 = vmax.f32 %v734, 0.0
        %v781 = vmax.f32 %v739, 0.0
        %v782 = vmax.f32 %v744, 0.0
        %v783 = vmax.f32 %v749, 0.0
        %v784 = vmax.f32 %v754, 0.0
        %v785 = vmax.f32 %v759, 0.0
        %v786 = vmax.f32 %v764, 0.0
        %v787 = vmax.f32 %v769, 0.0
        %v788 = vlaneseq
        %v789 = vshrl.u32 %v788, 7
        %v790 = vsub.s32 1, %v789
        %v791 = vrot.slane %v622, %v790
        %792 = vmatprep.subr.mxu0 0.0
        %793 = vmatpush1.msra.mxu0 %v604
        %794 = vmatprep.subr.mxu0 0.0
        %795 = vmatpush1.msra.mxu0 %v605
        %796 = vmatprep.subr.mxu0 0.0
        %797 = vmatpush1.msra.mxu0 %v606
        %798 = vmatprep.subr.mxu0 0.0
        %799 = vmatpush1.msra.mxu0 %v607
        %800 = vmatprep.subr.mxu0 0.0
        %801 = vmatpush1.msra.mxu0 %v608
        %802 = vmatprep.subr.mxu0 0.0
        %803 = vmatpush1.msra.mxu0 %v609
        %804 = vmatprep.subr.mxu0 0.0
        %805 = vmatpush1.msra.mxu0 %v610
        %806 = vmatprep.subr.mxu0 0.0
        %807 = vmatpush1.msra.mxu0 %v611
        %808 = vmatprep.subr.mxu0 0.0
        %809 = vmatpush1.msra.mxu0 %v612
        %810 = vmatprep.subr.mxu0 0.0
        %811 = vmatpush1.msra.mxu0 %v613
        %812 = vmatprep.subr.mxu0 0.0
        %813 = vmatpush1.msra.mxu0 %v614
        %814 = vmatprep.subr.mxu0 0.0
        %815 = vmatpush1.msra.mxu0 %v615
        %816 = vmatprep.subr.mxu0 0.0
        %817 = vmatpush1.msra.mxu0 %v616
        %818 = vmatprep.subr.mxu0 0.0
        %819 = vmatpush1.msra.mxu0 %v617
        %820 = vmatprep.subr.mxu0 0.0
        %821 = vmatpush1.msra.mxu0 %v618
        %822 = vmatprep.subr.mxu0 0.0
        %823 = vmatpush1.msra.mxu0 %v619
        %824 = vmatprep.subr.mxu0 0.0
        %825 = vmatpush1.msra.mxu0 0.0
        %826 = vmatprep.subr.mxu0 0.0
        %827 = vmatpush1.msra.mxu0 0.0
        %828 = vmatprep.subr.mxu0 0.0
        %829 = vmatpush1.msra.mxu0 0.0
        %830 = vmatprep.subr.mxu0 0.0
        %831 = vmatpush1.msra.mxu0 0.0
        %832 = vmatprep.subr.mxu0 0.0
        %833 = vmatpush1.msra.mxu0 0.0
        %834 = vmatprep.subr.mxu0 0.0
        %835 = vmatpush1.msra.mxu0 0.0
        %836 = vmatprep.subr.mxu0 0.0
        %837 = vmatpush1.msra.mxu0 0.0
        %838 = vmatprep.subr.mxu0 0.0
        %839 = vmatpush1.msra.mxu0 0.0
        %840 = vmatprep.subr.mxu0 0.0
        %841 = vmatpush1.msra.mxu0 0.0
        %842 = vmatprep.subr.mxu0 0.0
        %843 = vmatpush1.msra.mxu0 0.0
        %844 = vmatprep.subr.mxu0 0.0
        %845 = vmatpush1.msra.mxu0 0.0
        %846 = vmatprep.subr.mxu0 0.0
        %847 = vmatpush1.msra.mxu0 0.0
        %848 = vmatprep.subr.mxu0 0.0
        %849 = vmatpush1.msra.mxu0 0.0
        %850 = vmatprep.subr.mxu0 0.0
        %851 = vmatpush1.msra.mxu0 0.0
        %852 = vmatprep.subr.mxu0 0.0
        %853 = vmatpush1.msra.mxu0 0.0
        %854 = vmatprep.subr.mxu0 0.0
        %855 = vmatpush1.msra.mxu0 0.0
        %856 = vmatprep.mubr.f32.mxu0 0.0
        %857 = vmatmul.mubr.f32.gmra.mrb[0].mxu0 %v772
        %v858 = vpop.f32.mrb[0].mxu0
        %v859 = vadd.f32 %v791, %v858
        %v860 = vpop.f32.mrb[0].mxu0
        %861 = vmatprep.mubr.f32.mxu0 0.0
        %862 = vmatmul.mubr.f32.gmra.mrb[0].mxu0 %v773
        %v863 = vpop.f32.mrb[0].mxu0
        %v864 = vadd.f32 %v791, %v863
        %v865 = vpop.f32.mrb[0].mxu0
        %866 = vmatprep.mubr.f32.mxu0 0.0
        %867 = vmatmul.mubr.f32.gmra.mrb[0].mxu0 %v774
        %v868 = vpop.f32.mrb[0].mxu0
        %v869 = vadd.f32 %v791, %v868
        %v870 = vpop.f32.mrb[0].mxu0
        %871 = vmatprep.mubr.f32.mxu0 0.0
        %872 = vmatmul.mubr.f32.gmra.mrb[0].mxu0 %v775
        %v873 = vpop.f32.mrb[0].mxu0
        %v874 = vadd.f32 %v791, %v873
        %v875 = vpop.f32.mrb[0].mxu0
        %876 = vmatprep.mubr.f32.mxu0 0.0
        %877 = vmatmul.mubr.f32.gmra.mrb[0].mxu0 %v776
        %v878 = vpop.f32.mrb[0].mxu0
        %v879 = vadd.f32 %v791, %v878
        %v880 = vpop.f32.mrb[0].mxu0
        %881 = vmatprep.mubr.f32.mxu0 0.0
        %882 = vmatmul.mubr.f32.gmra.mrb[0].mxu0 %v777
        %v883 = vpop.f32.mrb[0].mxu0
        %v884 = vadd.f32 %v791, %v883
        %v885 = vpop.f32.mrb[0].mxu0
        %886 = vmatprep.mubr.f32.mxu0 0.0
        %887 = vmatmul.mubr.f32.gmra.mrb[0].mxu0 %v778
        %v888 = vpop.f32.mrb[0].mxu0
        %v889 = vadd.f32 %v791, %v888
        %v890 = vpop.f32.mrb[0].mxu0
        %891 = vmatprep.mubr.f32.mxu0 0.0
        %892 = vmatmul.mubr.f32.gmra.mrb[0].mxu0 %v779
        %v893 = vpop.f32.mrb[0].mxu0
        %v894 = vadd.f32 %v791, %v893
        %v895 = vpop.f32.mrb[0].mxu0
        %896 = vmatprep.mubr.f32.mxu0 0.0
        %897 = vmatmul.mubr.f32.gmra.mrb[0].mxu0 %v780
        %v898 = vpop.f32.mrb[0].mxu0
        %v899 = vadd.f32 %v791, %v898
        %v900 = vpop.f32.mrb[0].mxu0
        %901 = vmatprep.mubr.f32.mxu0 0.0
        %902 = vmatmul.mubr.f32.gmra.mrb[0].mxu0 %v781
        %v903 = vpop.f32.mrb[0].mxu0
        %v904 = vadd.f32 %v791, %v903
        %v905 = vpop.f32.mrb[0].mxu0
        %906 = vmatprep.mubr.f32.mxu0 0.0
        %907 = vmatmul.mubr.f32.gmra.mrb[0].mxu0 %v782
        %v908 = vpop.f32.mrb[0].mxu0
        %v909 = vadd.f32 %v791, %v908
        %v910 = vpop.f32.mrb[0].mxu0
        %911 = vmatprep.mubr.f32.mxu0 0.0
        %912 = vmatmul.mubr.f32.gmra.mrb[0].mxu0 %v783
        %v913 = vpop.f32.mrb[0].mxu0
        %v914 = vadd.f32 %v791, %v913
        %v915 = vpop.f32.mrb[0].mxu0
        %916 = vmatprep.mubr.f32.mxu0 0.0
        %917 = vmatmul.mubr.f32.gmra.mrb[0].mxu0 %v784
        %v918 = vpop.f32.mrb[0].mxu0
        %v919 = vadd.f32 %v791, %v918
        %v920 = vpop.f32.mrb[0].mxu0
        %921 = vmatprep.mubr.f32.mxu0 0.0
        %922 = vmatmul.mubr.f32.gmra.mrb[0].mxu0 %v785
        %v923 = vpop.f32.mrb[0].mxu0
        %v924 = vadd.f32 %v791, %v923
        %v925 = vpop.f32.mrb[0].mxu0
        %926 = vmatprep.mubr.f32.mxu0 0.0
        %927 = vmatmul.mubr.f32.gmra.mrb[0].mxu0 %v786
        %v928 = vpop.f32.mrb[0].mxu0
        %v929 = vadd.f32 %v791, %v928
        %v930 = vpop.f32.mrb[0].mxu0
        %931 = vmatprep.mubr.f32.mxu0 0.0
        %932 = vmatmul.mubr.f32.gmra.mrb[0].mxu0 %v787
        %v933 = vpop.f32.mrb[0].mxu0
        %v934 = vadd.f32 %v791, %v933
        %v935 = vpop.f32.mrb[0].mxu0
        %936 = vdwg.mxu0
        %v937 = vmax.f32 %v859, 0.0
        %v938 = vmax.f32 %v864, 0.0
        %v939 = vmax.f32 %v869, 0.0
        %v940 = vmax.f32 %v874, 0.0
        %v941 = vmax.f32 %v879, 0.0
        %v942 = vmax.f32 %v884, 0.0
        %v943 = vmax.f32 %v889, 0.0
        %v944 = vmax.f32 %v894, 0.0
        %v945 = vmax.f32 %v899, 0.0
        %v946 = vmax.f32 %v904, 0.0
        %v947 = vmax.f32 %v909, 0.0
        %v948 = vmax.f32 %v914, 0.0
        %v949 = vmax.f32 %v919, 0.0
        %v950 = vmax.f32 %v924, 0.0
        %v951 = vmax.f32 %v929, 0.0
        %v952 = vmax.f32 %v934, 0.0
        %v953 = vld [vmem:[%s3] sm:$0xff]
        %v954 = vld [vmem:[%s3 + $0x8] sm:$0xff]
        %v955 = vld [vmem:[%s3 + $0x10] sm:$0xff]
        %v956 = vld [vmem:[%s3 + $0x18] sm:$0xff]
        %v957 = vld [vmem:[%s3 + $0x20] sm:$0xff]
        %v958 = vld [vmem:[%s3 + $0x28] sm:$0xff]
        %v959 = vld [vmem:[%s3 + $0x30] sm:$0xff]
        %v960 = vld [vmem:[%s3 + $0x38] sm:$0xff]
        %v961 = vld [vmem:[%s3 + $0x40] sm:$0xff]
        %v962 = vld [vmem:[%s3 + $0x48] sm:$0xff]
        %v963 = vld [vmem:[%s3 + $0x50] sm:$0xff]
        %v964 = vld [vmem:[%s3 + $0x58] sm:$0xff]
        %v965 = vld [vmem:[%s3 + $0x60] sm:$0xff]
        %v966 = vld [vmem:[%s3 + $0x68] sm:$0xff]
        %v967 = vld [vmem:[%s3 + $0x70] sm:$0xff]
        %v968 = vld [vmem:[%s3 + $0x78] sm:$0xff]
        %970 = vset.pattern.permute.xlu0 0
        %971 = vperm.xlu0 %970, %v953
        %v972 = vpop.permute.xlu0 %971
        %975 = vset.pattern.permute.xlu0 0
        %976 = vperm.xlu0 %975, %v954
        %v977 = vpop.permute.xlu0 %976
        %980 = vset.pattern.permute.xlu0 0
        %981 = vperm.xlu0 %980, %v955
        %v982 = vpop.permute.xlu0 %981
        %985 = vset.pattern.permute.xlu0 0
        %986 = vperm.xlu0 %985, %v956
        %v987 = vpop.permute.xlu0 %986
        %990 = vset.pattern.permute.xlu0 0
        %991 = vperm.xlu0 %990, %v957
        %v992 = vpop.permute.xlu0 %991
        %995 = vset.pattern.permute.xlu0 0
        %996 = vperm.xlu0 %995, %v958
        %v997 = vpop.permute.xlu0 %996
        %1000 = vset.pattern.permute.xlu0 0
        %1001 = vperm.xlu0 %1000, %v959
        %v1002 = vpop.permute.xlu0 %1001
        %1005 = vset.pattern.permute.xlu0 0
        %1006 = vperm.xlu0 %1005, %v960
        %v1007 = vpop.permute.xlu0 %1006
        %1010 = vset.pattern.permute.xlu0 0
        %1011 = vperm.xlu0 %1010, %v961
        %v1012 = vpop.permute.xlu0 %1011
        %1015 = vset.pattern.permute.xlu0 0
        %1016 = vperm.xlu0 %1015, %v962
        %v1017 = vpop.permute.xlu0 %1016
        %1020 = vset.pattern.permute.xlu0 0
        %1021 = vperm.xlu0 %1020, %v963
        %v1022 = vpop.permute.xlu0 %1021
        %1025 = vset.pattern.permute.xlu0 0
        %1026 = vperm.xlu0 %1025, %v964
        %v1027 = vpop.permute.xlu0 %1026
        %1030 = vset.pattern.permute.xlu0 0
        %1031 = vperm.xlu0 %1030, %v965
        %v1032 = vpop.permute.xlu0 %1031
        %1035 = vset.pattern.permute.xlu0 0
        %1036 = vperm.xlu0 %1035, %v966
        %v1037 = vpop.permute.xlu0 %1036
        %1040 = vset.pattern.permute.xlu0 0
        %1041 = vperm.xlu0 %1040, %v967
        %v1042 = vpop.permute.xlu0 %1041
        %1045 = vset.pattern.permute.xlu0 0
        %1046 = vperm.xlu0 %1045, %v968
        %v1047 = vpop.permute.xlu0 %1046
        %v1049 = vmul.f32 %v937, %v972
        %v1050 = vmul.f32 %v938, %v977
        %v1051 = vmul.f32 %v939, %v982
        %v1052 = vmul.f32 %v940, %v987
        %v1053 = vmul.f32 %v941, %v992
        %v1054 = vmul.f32 %v942, %v997
        %v1055 = vmul.f32 %v943, %v1002
        %v1056 = vmul.f32 %v944, %v1007
        %v1057 = vmul.f32 %v945, %v1012
        %v1058 = vmul.f32 %v946, %v1017
        %v1059 = vmul.f32 %v947, %v1022
        %v1060 = vmul.f32 %v948, %v1027
        %v1061 = vmul.f32 %v949, %v1032
        %v1062 = vmul.f32 %v950, %v1037
        %v1063 = vmul.f32 %v951, %v1042
        %v1064 = vmul.f32 %v952, %v1047
        %v1065 = vadd.f32 %v1049, %v1050
        %v1066 = vadd.f32 %v1065, %v1051
        %v1067 = vadd.f32 %v1066, %v1052
        %v1068 = vadd.f32 %v1067, %v1053
        %v1069 = vadd.f32 %v1068, %v1054
        %v1070 = vadd.f32 %v1069, %v1055
        %v1071 = vadd.f32 %v1070, %v1056
        %v1072 = vadd.f32 %v1071, %v1057
        %v1073 = vadd.f32 %v1072, %v1058
        %v1074 = vadd.f32 %v1073, %v1059
        %v1075 = vadd.f32 %v1074, %v1060
        %v1076 = vadd.f32 %v1075, %v1061
        %v1077 = vadd.f32 %v1076, %v1062
        %v1078 = vadd.f32 %v1077, %v1063
        %v1079 = vadd.f32 %v1078, %v1064
        %v1080 = vrot.slane %v1079, 4
        %v1081 = vadd.f32 %v1079, %v1080
        %v1082 = vrot.slane %v1081, 2
        %v1083 = vadd.f32 %v1081, %v1082
        %v1084 = vrot.slane %v1083, 1
        %v1085 = vadd.f32 %v1083, %v1084
        %v1086 = vmul.f32 %v1085, 0.0625
        %v1087 = vsub.f32 %v1049, %v1086
        %v1088 = vsub.f32 %v1050, %v1086
        %v1089 = vsub.f32 %v1051, %v1086
        %v1090 = vsub.f32 %v1052, %v1086
        %v1091 = vsub.f32 %v1053, %v1086
        %v1092 = vsub.f32 %v1054, %v1086
        %v1093 = vsub.f32 %v1055, %v1086
        %v1094 = vsub.f32 %v1056, %v1086
        %v1095 = vsub.f32 %v1057, %v1086
        %v1096 = vsub.f32 %v1058, %v1086
        %v1097 = vsub.f32 %v1059, %v1086
        %v1098 = vsub.f32 %v1060, %v1086
        %v1099 = vsub.f32 %v1061, %v1086
        %v1100 = vsub.f32 %v1062, %v1086
        %v1101 = vsub.f32 %v1063, %v1086
        %v1102 = vsub.f32 %v1064, %v1086
        %v1103 = vmul.f32 %v1087, %v1087
        %v1104 = vmul.f32 %v1088, %v1088
        %v1105 = vmul.f32 %v1089, %v1089
        %v1106 = vmul.f32 %v1090, %v1090
        %v1107 = vmul.f32 %v1091, %v1091
        %v1108 = vmul.f32 %v1092, %v1092
        %v1109 = vmul.f32 %v1093, %v1093
        %v1110 = vmul.f32 %v1094, %v1094
        %v1111 = vmul.f32 %v1095, %v1095
        %v1112 = vmul.f32 %v1096, %v1096
        %v1113 = vmul.f32 %v1097, %v1097
        %v1114 = vmul.f32 %v1098, %v1098
        %v1115 = vmul.f32 %v1099, %v1099
        %v1116 = vmul.f32 %v1100, %v1100
        %v1117 = vmul.f32 %v1101, %v1101
        %v1118 = vmul.f32 %v1102, %v1102
        %v1119 = vmul.f32 %v1103, %v972
        %v1120 = vmul.f32 %v1104, %v977
        %v1121 = vmul.f32 %v1105, %v982
        %v1122 = vmul.f32 %v1106, %v987
        %v1123 = vmul.f32 %v1107, %v992
        %v1124 = vmul.f32 %v1108, %v997
        %v1125 = vmul.f32 %v1109, %v1002
        %v1126 = vmul.f32 %v1110, %v1007
        %v1127 = vmul.f32 %v1111, %v1012
        %v1128 = vmul.f32 %v1112, %v1017
        %v1129 = vmul.f32 %v1113, %v1022
        %v1130 = vmul.f32 %v1114, %v1027
        %v1131 = vmul.f32 %v1115, %v1032
        %v1132 = vmul.f32 %v1116, %v1037
        %v1133 = vmul.f32 %v1117, %v1042
        %v1134 = vmul.f32 %v1118, %v1047
        %v1135 = vadd.f32 %v1119, %v1120
        %v1136 = vadd.f32 %v1135, %v1121
        %v1137 = vadd.f32 %v1136, %v1122
        %v1138 = vadd.f32 %v1137, %v1123
        %v1139 = vadd.f32 %v1138, %v1124
        %v1140 = vadd.f32 %v1139, %v1125
        %v1141 = vadd.f32 %v1140, %v1126
        %v1142 = vadd.f32 %v1141, %v1127
        %v1143 = vadd.f32 %v1142, %v1128
        %v1144 = vadd.f32 %v1143, %v1129
        %v1145 = vadd.f32 %v1144, %v1130
        %v1146 = vadd.f32 %v1145, %v1131
        %v1147 = vadd.f32 %v1146, %v1132
        %v1148 = vadd.f32 %v1147, %v1133
        %v1149 = vadd.f32 %v1148, %v1134
        %v1150 = vrot.slane %v1149, 4
        %v1151 = vadd.f32 %v1149, %v1150
        %v1152 = vrot.slane %v1151, 2
        %v1153 = vadd.f32 %v1151, %v1152
        %v1154 = vrot.slane %v1153, 1
        %v1155 = vadd.f32 %v1153, %v1154
        %v1156 = vmul.f32 %v1155, 0.0625
        %v1157 = vlaneseq
        %v1158 = vshrl.u32 %v1157, 7
        %v1159 = vsub.s32 2, %v1158
        %v1160 = vrot.slane %v622, %v1159
        %v1161 = vmul.f32 %v1160, %v1087
        %v1162 = vmul.f32 %v1160, %v1088
        %v1163 = vmul.f32 %v1160, %v1089
        %v1164 = vmul.f32 %v1160, %v1090
        %v1165 = vmul.f32 %v1160, %v1091
        %v1166 = vmul.f32 %v1160, %v1092
        %v1167 = vmul.f32 %v1160, %v1093
        %v1168 = vmul.f32 %v1160, %v1094
        %v1169 = vmul.f32 %v1160, %v1095
        %v1170 = vmul.f32 %v1160, %v1096
        %v1171 = vmul.f32 %v1160, %v1097
        %v1172 = vmul.f32 %v1160, %v1098
        %v1173 = vmul.f32 %v1160, %v1099
        %v1174 = vmul.f32 %v1160, %v1100
        %v1175 = vmul.f32 %v1160, %v1101
        %v1176 = vmul.f32 %v1160, %v1102
        %v1177 = vadd.f32 %v1156, 1e-05
        %v1178 = vrsqrt.pop %v1177
        %v1179 = vmul.f32 %v1161, %v1178
        %v1180 = vmul.f32 %v1162, %v1178
        %v1181 = vmul.f32 %v1163, %v1178
        %v1182 = vmul.f32 %v1164, %v1178
        %v1183 = vmul.f32 %v1165, %v1178
        %v1184 = vmul.f32 %v1166, %v1178
        %v1185 = vmul.f32 %v1167, %v1178
        %v1186 = vmul.f32 %v1168, %v1178
        %v1187 = vmul.f32 %v1169, %v1178
        %v1188 = vmul.f32 %v1170, %v1178
        %v1189 = vmul.f32 %v1171, %v1178
        %v1190 = vmul.f32 %v1172, %v1178
        %v1191 = vmul.f32 %v1173, %v1178
        %v1192 = vmul.f32 %v1174, %v1178
        %v1193 = vmul.f32 %v1175, %v1178
        %v1194 = vmul.f32 %v1176, %v1178
        %v1195 = vlaneseq
        %v1196 = vshrl.u32 %v1195, 7
        %v1197 = vsub.s32 3, %v1196
        %v1198 = vrot.slane %v622, %v1197
        %v1199 = vadd.f32 %v1179, %v1198
        %v1200 = vadd.f32 %v1180, %v1198
        %v1201 = vadd.f32 %v1181, %v1198
        %v1202 = vadd.f32 %v1182, %v1198
        %v1203 = vadd.f32 %v1183, %v1198
        %v1204 = vadd.f32 %v1184, %v1198
        %v1205 = vadd.f32 %v1185, %v1198
        %v1206 = vadd.f32 %v1186, %v1198
        %v1207 = vadd.f32 %v1187, %v1198
        %v1208 = vadd.f32 %v1188, %v1198
        %v1209 = vadd.f32 %v1189, %v1198
        %v1210 = vadd.f32 %v1190, %v1198
        %v1211 = vadd.f32 %v1191, %v1198
        %v1212 = vadd.f32 %v1192, %v1198
        %v1213 = vadd.f32 %v1193, %v1198
        %v1214 = vadd.f32 %v1194, %v1198
        %v1215 = vmul.f32 %v1199, %v972
        %v1216 = vmul.f32 %v1200, %v977
        %v1217 = vmul.f32 %v1201, %v982
        %v1218 = vmul.f32 %v1202, %v987
        %v1219 = vmul.f32 %v1203, %v992
        %v1220 = vmul.f32 %v1204, %v997
        %v1221 = vmul.f32 %v1205, %v1002
        %v1222 = vmul.f32 %v1206, %v1007
        %v1223 = vmul.f32 %v1207, %v1012
        %v1224 = vmul.f32 %v1208, %v1017
        %v1225 = vmul.f32 %v1209, %v1022
        %v1226 = vmul.f32 %v1210, %v1027
        %v1227 = vmul.f32 %v1211, %v1032
        %v1228 = vmul.f32 %v1212, %v1037
        %v1229 = vmul.f32 %v1213, %v1042
        %v1230 = vmul.f32 %v1214, %v1047
        %v1231 = vpack.c.bf16 %v1216, %v1215
        %v1232 = vpack.c.bf16 %v1218, %v1217
        %v1233 = vpack.c.bf16 %v1220, %v1219
        %v1234 = vpack.c.bf16 %v1222, %v1221
        %v1235 = vpack.c.bf16 %v1224, %v1223
        %v1236 = vpack.c.bf16 %v1226, %v1225
        %v1237 = vpack.c.bf16 %v1228, %v1227
        %v1238 = vpack.c.bf16 %v1230, %v1229
        %1239 = vst [vmem:[#allocation2] sm:$0xff] %v1231
        %1240 = vst [vmem:[#allocation2 + $0x8] sm:$0xff] %v1232
        %1241 = vst [vmem:[#allocation2 + $0x10] sm:$0xff] %v1233
        %1242 = vst [vmem:[#allocation2 + $0x18] sm:$0xff] %v1234
        %1243 = vst [vmem:[#allocation2 + $0x20] sm:$0xff] %v1235
        %1244 = vst [vmem:[#allocation2 + $0x28] sm:$0xff] %v1236
        %1245 = vst [vmem:[#allocation2 + $0x30] sm:$0xff] %v1237
        %1246 = vst [vmem:[#allocation2 + $0x38] sm:$0xff] %v1238
        %1247 = vst [vmem:[%s331] sm:$0xff] %v1215
        %1248 = vst [vmem:[%s331 + $0x8] sm:$0xff] %v1216
        %1249 = vst [vmem:[%s331 + $0x10] sm:$0xff] %v1217
        %1250 = vst [vmem:[%s331 + $0x18] sm:$0xff] %v1218
        %1251 = vst [vmem:[%s331 + $0x20] sm:$0xff] %v1219
        %1252 = vst [vmem:[%s331 + $0x28] sm:$0xff] %v1220
        %1253 = vst [vmem:[%s331 + $0x30] sm:$0xff] %v1221
        %1254 = vst [vmem:[%s331 + $0x38] sm:$0xff] %v1222
        %1255 = vst [vmem:[%s331 + $0x40] sm:$0xff] %v1223
        %1256 = vst [vmem:[%s331 + $0x48] sm:$0xff] %v1224
        %1257 = vst [vmem:[%s331 + $0x50] sm:$0xff] %v1225
        %1258 = vst [vmem:[%s331 + $0x58] sm:$0xff] %v1226
        %1259 = vst [vmem:[%s331 + $0x60] sm:$0xff] %v1227
        %1260 = vst [vmem:[%s331 + $0x68] sm:$0xff] %v1228
        %1261 = vst [vmem:[%s331 + $0x70] sm:$0xff] %v1229
        %1262 = vst [vmem:[%s331 + $0x78] sm:$0xff] %v1230
        %v1263 = vld [vmem:[%s2] sm:$0xf]
        %v1264 = vld [vmem:[%s2 + $0x4] sm:$0xf]
        %v1267 = vunpack.c.l.b16 %v1263
        %v1268 = vunpack.c.l.b16 %v1264
        %v1269 = vpack.c.b16 %v1268, %v1267
        %1271 = vmatprep.subr.bf16.mxu0 0
        %1272 = vmatpush1.bf16.msra.mxu0 %v1231
        %1273 = vmatprep.subr.bf16.mxu0 0
        %1274 = vmatpush1.bf16.msra.mxu0 %v1232
        %1275 = vmatprep.subr.bf16.mxu0 0
        %1276 = vmatpush1.bf16.msra.mxu0 %v1233
        %1277 = vmatprep.subr.bf16.mxu0 0
        %1278 = vmatpush1.bf16.msra.mxu0 %v1234
        %1279 = vmatprep.subr.bf16.mxu0 0
        %1280 = vmatpush1.bf16.msra.mxu0 %v1235
        %1281 = vmatprep.subr.bf16.mxu0 0
        %1282 = vmatpush1.bf16.msra.mxu0 %v1236
        %1283 = vmatprep.subr.bf16.mxu0 0
        %1284 = vmatpush1.bf16.msra.mxu0 %v1237
        %1285 = vmatprep.subr.bf16.mxu0 0
        %1286 = vmatpush1.bf16.msra.mxu0 %v1238
        %1287 = vmatprep.subr.bf16.mxu0 0
        %1288 = vmatpush1.bf16.msra.mxu0 0
        %1289 = vmatprep.subr.bf16.mxu0 0
        %1290 = vmatpush1.bf16.msra.mxu0 0
        %1291 = vmatprep.subr.bf16.mxu0 0
        %1292 = vmatpush1.bf16.msra.mxu0 0
        %1293 = vmatprep.subr.bf16.mxu0 0
        %1294 = vmatpush1.bf16.msra.mxu0 0
        %1295 = vmatprep.subr.bf16.mxu0 0
        %1296 = vmatpush1.bf16.msra.mxu0 0
        %1297 = vmatprep.subr.bf16.mxu0 0
        %1298 = vmatpush1.bf16.msra.mxu0 0
        %1299 = vmatprep.subr.bf16.mxu0 0
        %1300 = vmatpush1.bf16.msra.mxu0 0
        %1301 = vmatprep.subr.bf16.mxu0 0
        %1302 = vmatpush1.bf16.msra.mxu0 0
        %1303 = vmatprep.mubr.bf16.mxu0 0
        %1304 = vmatmul.mubr.bf16.gmra.mrb[0].mxu0 %v1269
        %v1305 = vpop.f32.mrb[0].mxu0
        %v1306 = vadd.f32 0.0, %v1305
        %v1307 = vpop.f32.mrb[0].mxu0
        %v1308 = vpop.f32.mrb[0].mxu0
        %v1309 = vadd.f32 0.0, %v1308
        %v1310 = vpop.f32.mrb[0].mxu0
        %1311 = vdwg.mxu0
        %1312 = vst [vmem:[%s338] sm:$0xff] %v1306
        %1313 = vst [vmem:[%s338 + $0x8] sm:$0xff] %v1309
        %s1314 = sand.u32 %s183, 1
        %s1315 = scalar_lea.sflag [#allocation5], %s1314
        %s1316 = sand.u32 %s183, 1
        %s1317 = smul.addr %s1316, 128
        %s1318 = scalar_lea.vmem [#allocation9], %s1317
        %s1319 = sand.u32 %s209, 1
        %s1320 = scalar_lea.sflag [#allocation11], %s1319
        %s1321 = sand.u32 %s209, 1
        %s1322 = smul.addr %s1321, 16
        %s1323 = scalar_lea.vmem [#allocation10], %s1322
        // Predicated region
        $region65: #{_run_fused.1} parent=47 // pred_check
          %p1324 = pneg %p193
        $region66: #{_run_fused.1} parent=47 // pred_check_branch
          %1326 = sbr.rel (%p1324) target = $region68
        $region67: #{_run_fused.1} parent=47 // pred_region
          %s1328 = ssub.s32 2048, 2048
          %1329 = vsyncadd %s1315, %s1328
          %s1330 = smul.addr %s28, 128
          %s1331 = scalar_lea.hbm %s7, %s1330
          %s1332 = sshll.u32 %s1318, 4
          %s1333 = int_to_ptr.vmem [resolvable:$true] %s1332
          %1338 = dma.vmem_to_hbm [thread:$0]  %s1333, 2048, %s1331, %s1315, 128, 384, 8
        $region68: #{_run_fused.1} parent=47 // pred_fallthru
          _
        // Predicated region
        $region69: #{_run_fused.1} parent=47 // pred_check
          %p1339 = pneg %p219
        $region70: #{_run_fused.1} parent=47 // pred_check_branch
          %1341 = sbr.rel (%p1339) target = $region72
        $region71: #{_run_fused.1} parent=47 // pred_region
          %s1343 = ssub.s32 256, 256
          %1344 = vsyncadd %s1320, %s1343
          %s1345 = smul.addr %s28, 128
          %s1346 = scalar_lea.hbm %s8, %s1345
          %s1347 = sshll.u32 %s1323, 4
          %s1348 = int_to_ptr.vmem [resolvable:$true] %s1347
          %1353 = dma.vmem_to_hbm [thread:$0]  %s1348, 256, %s1346, %s1320, 128, 384, 8
        $region72: #{_run_fused.1} parent=47 // pred_fallthru
          _
      $region48: #{_run_fused.1} parent=5 // pred_fallthru
        _
      %p1354 = scmp.le.s32.totalorder 2, %s23
      // Predicated region
      $region73: #{_run_fused.1} parent=5 // pred_check
        %p1355 = pneg %p1354
      $region74: #{_run_fused.1} parent=5 // pred_check_branch
        %1357 = sbr.rel (%p1355) target = $region76
      $region75: #{_run_fused.1} parent=5 // pred_region
        %s1358 = ssub.s32 %s23, 2
        // Predicated region
        $region77: #{_run_fused.1} parent=75 // pred_check
          %p1359 = pneg %p199
        $region78: #{_run_fused.1} parent=75 // pred_check_branch
          %1361 = sbr.rel (%p1359) target = $region80
        $region79: #{_run_fused.1} parent=75 // pred_region
          %s1362 = sand.u32 %s184, 1
          %s1363 = scalar_lea.sflag [#allocation5], %s1362
          %s1364 = sand.u32 %s184, 1
          %s1365 = smul.addr %s1364, 128
          %s1366 = scalar_lea.vmem [#allocation9], %s1365
          %1367 = dma.done %s1363, 2048
        $region80: #{_run_fused.1} parent=75 // pred_fallthru
          _
        // Predicated region
        $region81: #{_run_fused.1} parent=75 // pred_check
          %p1368 = pneg %p225
        $region82: #{_run_fused.1} parent=75 // pred_check_branch
          %1370 = sbr.rel (%p1368) target = $region84
        $region83: #{_run_fused.1} parent=75 // pred_region
          %s1371 = sand.u32 %s210, 1
          %s1372 = scalar_lea.sflag [#allocation11], %s1371
          %s1373 = sand.u32 %s210, 1
          %s1374 = smul.addr %s1373, 16
          %s1375 = scalar_lea.vmem [#allocation10], %s1374
          %1376 = dma.done %s1372, 256
        $region84: #{_run_fused.1} parent=75 // pred_fallthru
          _
      $region76: #{_run_fused.1} parent=5 // pred_fallthru
        _
    $region6: #{_run_fused.1} parent=1 // loop_footer
      %s27 = sadd.s32 1, %s23
    $region7: #{_run_fused.1} parent=1 // loop_footer_branch
      %22 = sbr.rel target = $region3
    $region8: #{_run_fused.1} parent=1 // loop_exit
      _
    %1377 = vsyncpa [#allocation4], 1
    %s1378 = scalar_lea.sflag [#allocation4], 1
    %1379 = vsyncpa %s1378, 1
    %1380 = vsyncpa [#allocation7], 1
    %1381 = vsyncpa [#allocation5], 1
    %s1382 = scalar_lea.sflag [#allocation5], 1
    %1383 = vsyncpa %s1382, 1
    %1384 = vsyncpa [#allocation11], 1
    %s1385 = scalar_lea.sflag [#allocation11], 1
    %1386 = vsyncpa %s1385, 1

// kernel: _run_fused.1
$region0: #{_run_fused.1}
  #allocation0 [shape = 'u32[]', space=smem, size = 0x4, offset = 0x4, fixed_abs, tag = 'smem constant byte address 0x4 - core index']
  #allocation1 [shape = 'u32[144,128]{1,0:T(1,128)}', space=vmem, size = 0x12000, scoped, tag = 'internal scratch']
  #allocation2 [shape = 'bf16[128,128]{1,0:T(16,128)(2,1)}', space=vmem, size = 0x8000, scoped, tag = 'scratch operand']
  %s0 = inlined_call_operand.vmem [shape: bf16[128,128], index: 0, kind: input, shape index: {}]
  %s1 = inlined_call_operand.vmem [shape: bf16[128,128], index: 1, kind: input, shape index: {}]
  %s2 = inlined_call_operand.vmem [shape: bf16[16,128], index: 2, kind: input, shape index: {}]
  %s3 = inlined_call_operand.vmem [shape: f32[128,1], index: 3, kind: input, shape index: {}]
  %s4 = inlined_call_operand.hbm [shape: f32[3,128,128], index: 4, kind: input, shape index: {}]
  %s5 = inlined_call_operand.hbm [shape: f32[3,128,128], index: 5, kind: input, shape index: {}]
  %s6 = inlined_call_operand.hbm [shape: f32[3,8,128], index: 6, kind: input, shape index: {}]
  %s7 = inlined_call_operand.hbm [shape: f32[128,384], index: 7, kind: output, shape index: {0}]
  %s8 = inlined_call_operand.hbm [shape: f32[16,384], index: 8, kind: output, shape index: {1}]
  %9 = xla_tuple %s7, %s8
  %s10 = sld [smem:[#allocation0]]
  $region85: #{_run_fused.1} parent=0
    _
  %s12 = ssub.s32 1, %s10
  %s13 = scalar_select 0, %s12, %s10
  $region1: #{_run_fused.1} parent=0
    #allocation3 [shape = 'u8[196608]{0}', space=vmem, size = 0x30000, scoped, tag = 'input window, operand 4, single buffered']
    #allocation4 [shape = 's32[2]{0}', space=sflag, size = 0x8, scoped, tag = 'scoped memory for _run_fused.1']
    #allocation5 [shape = 's32[2]{0}', space=sflag, size = 0x8, scoped, tag = 'scoped memory for _run_fused.1']
    #allocation6 [shape = 'u8[196608]{0}', space=vmem, size = 0x30000, scoped, tag = 'input window, operand 5, single buffered']
    #allocation7 [shape = 's32[1]{0}', space=sflag, size = 0x4, scoped, tag = 'scoped memory for _run_fused.1']
    #allocation8 [shape = 'u8[12288]{0}', space=vmem, size = 0x3000, scoped, tag = 'input window, operand 6, single buffered']
    #allocation9 [shape = 'u8[131072]{0}', space=vmem, size = 0x20000, scoped, tag = 'output window, operand 0']
    #allocation10 [shape = 'u8[16384]{0}', space=vmem, size = 0x4000, scoped, tag = 'output window, operand 1']
    #allocation11 [shape = 's32[2]{0}', space=sflag, size = 0x8, scoped, tag = 'scoped memory for _run_fused.1']
    %14 = vsyncpa [#allocation4], 0
    %15 = vsyncpa [#allocation7], 0
    %16 = vsyncpa [#allocation5], 0
    %s17 = scalar_lea.sflag [#allocation5], 1
    %18 = vsyncpa %s17, 0
    %19 = vsyncpa [#allocation11], 0
    %s20 = scalar_lea.sflag [#allocation11], 1
    %21 = vsyncpa %s20, 0
    loop: start=0, step=1, limit=5
    $region2: #{_run_fused.1} parent=1 // loop_pre_header
      _
    $region3: #{_run_fused.1} parent=1 // loop_header
      %s23 = sphi 0, %s27
      %p24 = scmp.ge.s32.totalorder %s23, 5
      %s31 = sphi 0, %s31
      %s33 = sphi 0, %s31
      %s34 = sphi 0, %s33
      %s48 = sphi 0, %s34
      %s52 = sphi 0, %s52
      %s54 = sphi 0, %s52
      %s55 = sphi 0, %s54
      %s69 = sphi 0, %s55
      %s73 = sphi 0, %s73
      %s75 = sphi 0, %s73
      %s76 = sphi 0, %s75
      %s90 = sphi 0, %s76
      %s94 = sphi 0, %s94
      %s96 = sphi 0, %s94
      %s97 = sphi 0, %s96
      %s111 = sphi 0, %s97
      %s115 = sphi 0, %s115
      %s117 = sphi 0, %s115
      %s118 = sphi 0, %s117
      %s132 = sphi 0, %s118
      %s136 = sphi 0, %s136
      %s138 = sphi 0, %s136
      %s139 = sphi 0, %s138
      %s153 = sphi 0, %s139
      %s157 = sphi 0, %s157
      %s159 = sphi 0, %s157
      %s160 = sphi 0, %s159
      %s174 = sphi 0, %s160
      %s180 = sphi 0, %s182
      %s183 = sphi 0, %s180
      %s184 = sphi 0, %s183
      %s200 = sphi 0, %s184
      %s206 = sphi 0, %s208
      %s209 = sphi 0, %s206
      %s210 = sphi 0, %s209
      %s226 = sphi 0, %s210
    $region4: #{_run_fused.1} parent=1 // loop_header_branch
      %26 = sbr.rel (%p24) target = $region8
    $region5: #{_run_fused.1} parent=1 // loop_body
      %s28 = ssub.s32 %s23, 1
      %s29 = ssub.s32 %s23, 2
      %s30 = sadd.s32 %s23, 1
      %s32 = sadd.s32 %s31, 1
      %p35 = scmp.eq.s32.totalorder %s23, 2
      %p36 = scmp.ne.s32.totalorder %s31, %s33
      %p37 = scmp.eq.s32.totalorder %s23, 0
      %p38 = por %p36, %p37
      %p39 = scmp.ne.s32.totalorder %s31, %s33
      %p40 = scmp.eq.s32.totalorder %s28, 2
      %p41 = por %p39, %p40
      %p42 = scmp.ne.s32.totalorder %s33, %s34
      %p43 = scmp.eq.s32.totalorder %s28, 0
      %p44 = por %p42, %p43
      %p45 = scmp.ne.s32.totalorder %s33, %s34
      %p46 = scmp.eq.s32.totalorder %s29, 2
      %p47 = por %p45, %p46
      %p49 = scmp.ne.s32.totalorder %s34, %s48
      %p50 = scmp.eq.s32.totalorder %s29, 0
      %p51 = por %p49, %p50
      %s53 = sadd.s32 %s52, 1
      %p56 = scmp.eq.s32.totalorder %s23, 2
      %p57 = scmp.ne.s32.totalorder %s52, %s54
      %p58 = scmp.eq.s32.totalorder %s23, 0
      %p59 = por %p57, %p58
      %p60 = scmp.ne.s32.totalorder %s52, %s54
      %p61 = scmp.eq.s32.totalorder %s28, 2
      %p62 = por %p60, %p61
      %p63 = scmp.ne.s32.totalorder %s54, %s55
      %p64 = scmp.eq.s32.totalorder %s28, 0
      %p65 = por %p63, %p64
      %p66 = scmp.ne.s32.totalorder %s54, %s55
      %p67 = scmp.eq.s32.totalorder %s29, 2
      %p68 = por %p66, %p67
      %p70 = scmp.ne.s32.totalorder %s55, %s69
      %p71 = scmp.eq.s32.totalorder %s29, 0
      %p72 = por %p70, %p71
      %s74 = sadd.s32 %s73, 1
      %p77 = scmp.eq.s32.totalorder %s23, 2
      %p78 = scmp.ne.s32.totalorder %s73, %s75
      %p79 = scmp.eq.s32.totalorder %s23, 0
      %p80 = por %p78, %p79
      %p81 = scmp.ne.s32.totalorder %s73, %s75
      %p82 = scmp.eq.s32.totalorder %s28, 2
      %p83 = por %p81, %p82
      %p84 = scmp.ne.s32.totalorder %s75, %s76
      %p85 = scmp.eq.s32.totalorder %s28, 0
      %p86 = por %p84, %p85
      %p87 = scmp.ne.s32.totalorder %s75, %s76
      %p88 = scmp.eq.s32.totalorder %s29, 2
      %p89 = por %p87, %p88
      %p91 = scmp.ne.s32.totalorder %s76, %s90
      %p92 = scmp.eq.s32.totalorder %s29, 0
      %p93 = por %p91, %p92
      %s95 = sadd.s32 %s94, 1
      %p98 = scmp.eq.s32.totalorder %s23, 2
      %p99 = scmp.ne.s32.totalorder %s94, %s96
      %p100 = scmp.eq.s32.totalorder %s23, 0
      %p101 = por %p99, %p100
      %p102 = scmp.ne.s32.totalorder %s94, %s96
      %p103 = scmp.eq.s32.totalorder %s28, 2
      %p104 = por %p102, %p103
      %p105 = scmp.ne.s32.totalorder %s96, %s97
      %p106 = scmp.eq.s32.totalorder %s28, 0
      %p107 = por %p105, %p106
      %p108 = scmp.ne.s32.totalorder %s96, %s97
      %p109 = scmp.eq.s32.totalorder %s29, 2
      %p110 = por %p108, %p109
      %p112 = scmp.ne.s32.totalorder %s97, %s111
      %p113 = scmp.eq.s32.totalorder %s29, 0
      %p114 = por %p112, %p113
      %s116 = sadd.s32 %s115, 1
      %p119 = scmp.eq.s32.totalorder %s23, 2
      %p120 = scmp.ne.s32.totalorder %s115, %s117
      %p121 = scmp.eq.s32.totalorder %s23, 0
      %p122 = por %p120, %p121
      %p123 = scmp.ne.s32.totalorder %s115, %s117
      %p124 = scmp.eq.s32.totalorder %s28, 2
      %p125 = por %p123, %p124
      %p126 = scmp.ne.s32.totalorder %s117, %s118
      %p127 = scmp.eq.s32.totalorder %s28, 0
      %p128 = por %p126, %p127
      %p129 = scmp.ne.s32.totalorder %s117, %s118
      %p130 = scmp.eq.s32.totalorder %s29, 2
      %p131 = por %p129, %p130
      %p133 = scmp.ne.s32.totalorder %s118, %s132
      %p134 = scmp.eq.s32.totalorder %s29, 0
      %p135 = por %p133, %p134
      %s137 = sadd.s32 %s136, 1
      %p140 = scmp.eq.s32.totalorder %s23, 2
      %p141 = scmp.ne.s32.totalorder %s136, %s138
      %p142 = scmp.eq.s32.totalorder %s23, 0
      %p143 = por %p141, %p142
      %p144 = scmp.ne.s32.totalorder %s136, %s138
      %p145 = scmp.eq.s32.totalorder %s28, 2
      %p146 = por %p144, %p145
      %p147 = scmp.ne.s32.totalorder %s138, %s139
      %p148 = scmp.eq.s32.totalorder %s28, 0
      %p149 = por %p147, %p148
      %p150 = scmp.ne.s32.totalorder %s138, %s139
      %p151 = scmp.eq.s32.totalorder %s29, 2
      %p152 = por %p150, %p151
      %p154 = scmp.ne.s32.totalorder %s139, %s153
      %p155 = scmp.eq.s32.totalorder %s29, 0
      %p156 = por %p154, %p155
      %s158 = sadd.s32 %s157, 1
      %p161 = scmp.eq.s32.totalorder %s23, 2
      %p162 = scmp.ne.s32.totalorder %s157, %s159
      %p163 = scmp.eq.s32.totalorder %s23, 0
      %p164 = por %p162, %p163
      %p165 = scmp.ne.s32.totalorder %s157, %s159
      %p166 = scmp.eq.s32.totalorder %s28, 2
      %p167 = por %p165, %p166
      %p168 = scmp.ne.s32.totalorder %s159, %s160
      %p169 = scmp.eq.s32.totalorder %s28, 0
      %p170 = por %p168, %p169
      %p171 = scmp.ne.s32.totalorder %s159, %s160
      %p172 = scmp.eq.s32.totalorder %s29, 2
      %p173 = por %p171, %p172
      %p175 = scmp.ne.s32.totalorder %s160, %s174
      %p176 = scmp.eq.s32.totalorder %s29, 0
      %p177 = por %p175, %p176
      %s178 = ssub.s32 %s23, %s30
      %p179 = scmp.eq.s32.totalorder %s178, 0
      %s181 = sadd.s32 %s180, 1
      %s182 = scalar_select %p179, %s180, %s181
      %p185 = pneg %p179
      %p186 = scmp.eq.s32.totalorder %s23, 2
      %p187 = por %p185, %p186
      %p188 = scmp.ne.s32.totalorder %s180, %s183
      %p189 = scmp.eq.s32.totalorder %s23, 0
      %p190 = por %p188, %p189
      %p191 = scmp.ne.s32.totalorder %s180, %s183
      %p192 = scmp.eq.s32.totalorder %s28, 2
      %p193 = por %p191, %p192
      %p194 = scmp.ne.s32.totalorder %s183, %s184
      %p195 = scmp.eq.s32.totalorder %s28, 0
      %p196 = por %p194, %p195
      %p197 = scmp.ne.s32.totalorder %s183, %s184
      %p198 = scmp.eq.s32.totalorder %s29, 2
      %p199 = por %p197, %p198
      %p201 = scmp.ne.s32.totalorder %s184, %s200
      %p202 = scmp.eq.s32.totalorder %s29, 0
      %p203 = por %p201, %p202
      %s204 = ssub.s32 %s23, %s30
      %p205 = scmp.eq.s32.totalorder %s204, 0
      %s207 = sadd.s32 %s206, 1
      %s208 = scalar_select %p205, %s206, %s207
      %p211 = pneg %p205
      %p212 = scmp.eq.s32.totalorder %s23, 2
      %p213 = por %p211, %p212
      %p214 = scmp.ne.s32.totalorder %s206, %s209
      %p215 = scmp.eq.s32.totalorder %s23, 0
      %p216 = por %p214, %p215
      %p217 = scmp.ne.s32.totalorder %s206, %s209
      %p218 = scmp.eq.s32.totalorder %s28, 2
      %p219 = por %p217, %p218
      %p220 = scmp.ne.s32.totalorder %s209, %s210
      %p221 = scmp.eq.s32.totalorder %s28, 0
      %p222 = por %p220, %p221
      %p223 = scmp.ne.s32.totalorder %s209, %s210
      %p224 = scmp.eq.s32.totalorder %s29, 2
      %p225 = por %p223, %p224
      %p227 = scmp.ne.s32.totalorder %s210, %s226
      %p228 = scmp.eq.s32.totalorder %s29, 0
      %p229 = por %p227, %p228
      %p230 = scmp.le.s32.totalorder 1, %s23
      %p231 = scmp.lt.s32.totalorder %s23, 4
      %p232 = pnand %p230, %p231
      %p233 = pneg %p232
      // Predicated region
      $region9: #{_run_fused.1} parent=5 // pred_check
        _
      $region10: #{_run_fused.1} parent=5 // pred_check_branch
        %235 = sbr.rel (%p232) target = $region12
      $region11: #{_run_fused.1} parent=5 // pred_region
        %s236 = ssub.s32 %s23, 1
        // Predicated region
        $region13: #{_run_fused.1} parent=11 // pred_check
          %p237 = pneg %p44
        $region14: #{_run_fused.1} parent=11 // pred_check_branch
          %239 = sbr.rel (%p237) target = $region16
        $region15: #{_run_fused.1} parent=11 // pred_region
          _
        $region16: #{_run_fused.1} parent=11 // pred_fallthru
          _
        // Predicated region
        $region17: #{_run_fused.1} parent=11 // pred_check
          %p240 = pneg %p65
        $region18: #{_run_fused.1} parent=11 // pred_check_branch
          %242 = sbr.rel (%p240) target = $region20
        $region19: #{_run_fused.1} parent=11 // pred_region
          _
        $region20: #{_run_fused.1} parent=11 // pred_fallthru
          _
        // Predicated region
        $region21: #{_run_fused.1} parent=11 // pred_check
          %p243 = pneg %p86
        $region22: #{_run_fused.1} parent=11 // pred_check_branch
          %245 = sbr.rel (%p243) target = $region24
        $region23: #{_run_fused.1} parent=11 // pred_region
          _
        $region24: #{_run_fused.1} parent=11 // pred_fallthru
          _
        // Predicated region
        $region25: #{_run_fused.1} parent=11 // pred_check
          %p246 = pneg %p107
        $region26: #{_run_fused.1} parent=11 // pred_check_branch
          %248 = sbr.rel (%p246) target = $region28
        $region27: #{_run_fused.1} parent=11 // pred_region
          _
        $region28: #{_run_fused.1} parent=11 // pred_fallthru
          _
        // Predicated region
        $region29: #{_run_fused.1} parent=11 // pred_check
          %p249 = pneg %p128
        $region30: #{_run_fused.1} parent=11 // pred_check_branch
          %251 = sbr.rel (%p249) target = $region32
        $region31: #{_run_fused.1} parent=11 // pred_region
          %s253 = ssub.s32 6144, 6144
          %254 = vsyncadd [#allocation4], %s253
          %s255 = sshll.u32 [#allocation3], 4
          %s256 = int_to_ptr.vmem [resolvable:$true] %s255
          %261 = dma.hbm_to_vmem [thread:$0]  %s4, 6144, %s256, [#allocation4], 128, 128, 8
        $region32: #{_run_fused.1} parent=11 // pred_fallthru
          _
        // Predicated region
        $region33: #{_run_fused.1} parent=11 // pred_check
          %p262 = pneg %p149
        $region34: #{_run_fused.1} parent=11 // pred_check_branch
          %264 = sbr.rel (%p262) target = $region36
        $region35: #{_run_fused.1} parent=11 // pred_region
          %s266 = ssub.s32 6144, 6144
          %267 = vsyncadd [#allocation7], %s266
          %s268 = sshll.u32 [#allocation6], 4
          %s269 = int_to_ptr.vmem [resolvable:$true] %s268
          %274 = dma.hbm_to_vmem [thread:$0]  %s5, 6144, %s269, [#allocation7], 128, 128, 8
        $region36: #{_run_fused.1} parent=11 // pred_fallthru
          _
        // Predicated region
        $region37: #{_run_fused.1} parent=11 // pred_check
          %p275 = pneg %p170
        $region38: #{_run_fused.1} parent=11 // pred_check_branch
          %277 = sbr.rel (%p275) target = $region40
        $region39: #{_run_fused.1} parent=11 // pred_region
          %s279 = ssub.s32 384, 384
          %280 = vsyncadd [#allocation7], %s279
          %s281 = sshll.u32 [#allocation8], 4
          %s282 = int_to_ptr.vmem [resolvable:$true] %s281
          %287 = dma.hbm_to_vmem [thread:$0]  %s6, 384, %s282, [#allocation7], 128, 128, 8
        $region40: #{_run_fused.1} parent=11 // pred_fallthru
          _
      $region12: #{_run_fused.1} parent=5 // pred_fallthru
        _
      %p288 = scmp.lt.s32.totalorder %s23, 3
      // Predicated region
      $region41: #{_run_fused.1} parent=5 // pred_check
        %p289 = pneg %p288
      $region42: #{_run_fused.1} parent=5 // pred_check_branch
        %291 = sbr.rel (%p289) target = $region44
      $region43: #{_run_fused.1} parent=5 // pred_region
        _
      $region44: #{_run_fused.1} parent=5 // pred_fallthru
        _
      %p292 = scmp.le.s32.totalorder 1, %s23
      %p293 = scmp.lt.s32.totalorder %s23, 4
      %p294 = pnand %p292, %p293
      %p295 = pneg %p294
      // Predicated region
      $region45: #{_run_fused.1} parent=5 // pred_check
        _
      $region46: #{_run_fused.1} parent=5 // pred_check_branch
        %297 = sbr.rel (%p294) target = $region48
      $region47: #{_run_fused.1} parent=5 // pred_region
        %s298 = ssub.s32 %s23, 1
        // Predicated region
        $region49: #{_run_fused.1} parent=47 // pred_check
          %p299 = pneg %p128
        $region50: #{_run_fused.1} parent=47 // pred_check_branch
          %301 = sbr.rel (%p299) target = $region52
        $region51: #{_run_fused.1} parent=47 // pred_region
          %302 = dma.done [#allocation4], 6144
        $region52: #{_run_fused.1} parent=47 // pred_fallthru
          _
        // Predicated region
        $region53: #{_run_fused.1} parent=47 // pred_check
          %p303 = pneg %p149
        $region54: #{_run_fused.1} parent=47 // pred_check_branch
          %305 = sbr.rel (%p303) target = $region56
        $region55: #{_run_fused.1} parent=47 // pred_region
          %306 = dma.done [#allocation7], 6144
        $region56: #{_run_fused.1} parent=47 // pred_fallthru
          _
        // Predicated region
        $region57: #{_run_fused.1} parent=47 // pred_check
          %p307 = pneg %p170
        $region58: #{_run_fused.1} parent=47 // pred_check_branch
          %309 = sbr.rel (%p307) target = $region60
        $region59: #{_run_fused.1} parent=47 // pred_region
          %310 = dma.done [#allocation7], 384
        $region60: #{_run_fused.1} parent=47 // pred_fallthru
          _
        %p311 = pneg %p44
        %p312 = pneg %p41
        %p313 = pneg %p65
        %p314 = pneg %p62
        %p315 = pneg %p86
        %p316 = pneg %p83
        %p317 = pneg %p107
        %p318 = pneg %p104
        %p319 = pneg %p128
        %p320 = pneg %p125
        %p321 = pneg %p149
        %p322 = pneg %p146
        %p323 = pneg %p170
        %p324 = pneg %p167
        %p325 = pneg %p196
        %p326 = pneg %p193
        %s327 = sand.u32 %s183, 1
        %s328 = scalar_lea.sflag [#allocation5], %s327
        %s329 = sand.u32 %s183, 1
        %s330 = smul.addr %s329, 128
        %s331 = scalar_lea.vmem [#allocation9], %s330
        %p332 = pneg %p222
        %p333 = pneg %p219
        %s334 = sand.u32 %s209, 1
        %s335 = scalar_lea.sflag [#allocation11], %s334
        %s336 = sand.u32 %s209, 1
        %s337 = smul.addr %s336, 16
        %s338 = scalar_lea.vmem [#allocation10], %s337
        %p340 = scmp.eq.s32.totalorder %s28, 0
        // Predicated region
        $region61: #{_run_fused.1} parent=47 // pred_check
          %p341 = pneg %p340
        $region62: #{_run_fused.1} parent=47 // pred_check_branch
          %343 = sbr.rel (%p341) target = $region64
        $region63: #{_run_fused.1} parent=47 // pred_region
          %v344 = vld [vmem:[%s1] sm:$0xf]
          %v345 = vld [vmem:[%s1 + $0x4] sm:$0xf]
          %v346 = vld [vmem:[%s1 + $0x8] sm:$0xf]
          %v347 = vld [vmem:[%s1 + $0xc] sm:$0xf]
          %v348 = vld [vmem:[%s1 + $0x10] sm:$0xf]
          %v349 = vld [vmem:[%s1 + $0x14] sm:$0xf]
          %v350 = vld [vmem:[%s1 + $0x18] sm:$0xf]
          %v351 = vld [vmem:[%s1 + $0x1c] sm:$0xf]
          %v352 = vld [vmem:[%s1 + $0x20] sm:$0xf]
          %v353 = vld [vmem:[%s1 + $0x24] sm:$0xf]
          %v354 = vld [vmem:[%s1 + $0x28] sm:$0xf]
          %v355 = vld [vmem:[%s1 + $0x2c] sm:$0xf]
          %v356 = vld [vmem:[%s1 + $0x30] sm:$0xf]
          %v357 = vld [vmem:[%s1 + $0x34] sm:$0xf]
          %v358 = vld [vmem:[%s1 + $0x38] sm:$0xf]
          %v359 = vld [vmem:[%s1 + $0x3c] sm:$0xf]
          %v376 = vunpack.c.l.b16 %v344
          %v377 = vunpack.c.l.b16 %v345
          %v378 = vunpack.c.l.b16 %v346
          %v379 = vunpack.c.l.b16 %v347
          %v380 = vunpack.c.l.b16 %v348
          %v381 = vunpack.c.l.b16 %v349
          %v382 = vunpack.c.l.b16 %v350
          %v383 = vunpack.c.l.b16 %v351
          %v384 = vunpack.c.l.b16 %v352
          %v385 = vunpack.c.l.b16 %v353
          %v386 = vunpack.c.l.b16 %v354
          %v387 = vunpack.c.l.b16 %v355
          %v388 = vunpack.c.l.b16 %v356
          %v389 = vunpack.c.l.b16 %v357
          %v390 = vunpack.c.l.b16 %v358
          %v391 = vunpack.c.l.b16 %v359
          %v392 = vpack.c.b16 %v377, %v376
          %v393 = vpack.c.b16 %v379, %v378
          %v394 = vpack.c.b16 %v381, %v380
          %v395 = vpack.c.b16 %v383, %v382
          %v396 = vpack.c.b16 %v385, %v384
          %v397 = vpack.c.b16 %v387, %v386
          %v398 = vpack.c.b16 %v389, %v388
          %v399 = vpack.c.b16 %v391, %v390
          %408 = vst [vmem:[#allocation2] sm:$0xff] %v392
          %409 = vst [vmem:[#allocation2 + $0x8] sm:$0xff] %v393
          %410 = vst [vmem:[#allocation2 + $0x10] sm:$0xff] %v394
          %411 = vst [vmem:[#allocation2 + $0x18] sm:$0xff] %v395
          %412 = vst [vmem:[#allocation2 + $0x20] sm:$0xff] %v396
          %413 = vst [vmem:[#allocation2 + $0x28] sm:$0xff] %v397
          %414 = vst [vmem:[#allocation2 + $0x30] sm:$0xff] %v398
          %415 = vst [vmem:[#allocation2 + $0x38] sm:$0xff] %v399
        $region64: #{_run_fused.1} parent=47 // pred_fallthru
          _
        %v416 = vld [vmem:[#allocation2] sm:$0xff]
        %v417 = vld [vmem:[#allocation2 + $0x8] sm:$0xff]
        %v418 = vld [vmem:[#allocation2 + $0x10] sm:$0xff]
        %v419 = vld [vmem:[#allocation2 + $0x18] sm:$0xff]
        %v420 = vld [vmem:[#allocation2 + $0x20] sm:$0xff]
        %v421 = vld [vmem:[#allocation2 + $0x28] sm:$0xff]
        %v422 = vld [vmem:[#allocation2 + $0x30] sm:$0xff]
        %v423 = vld [vmem:[#allocation2 + $0x38] sm:$0xff]
        %v424 = vld [vmem:[%s0] sm:$0xf]
        %v425 = vld [vmem:[%s0 + $0x4] sm:$0xf]
        %v426 = vld [vmem:[%s0 + $0x8] sm:$0xf]
        %v427 = vld [vmem:[%s0 + $0xc] sm:$0xf]
        %v428 = vld [vmem:[%s0 + $0x10] sm:$0xf]
        %v429 = vld [vmem:[%s0 + $0x14] sm:$0xf]
        %v430 = vld [vmem:[%s0 + $0x18] sm:$0xf]
        %v431 = vld [vmem:[%s0 + $0x1c] sm:$0xf]
        %v432 = vld [vmem:[%s0 + $0x20] sm:$0xf]
        %v433 = vld [vmem:[%s0 + $0x24] sm:$0xf]
        %v434 = vld [vmem:[%s0 + $0x28] sm:$0xf]
        %v435 = vld [vmem:[%s0 + $0x2c] sm:$0xf]
        %v436 = vld [vmem:[%s0 + $0x30] sm:$0xf]
        %v437 = vld [vmem:[%s0 + $0x34] sm:$0xf]
        %v438 = vld [vmem:[%s0 + $0x38] sm:$0xf]
        %v439 = vld [vmem:[%s0 + $0x3c] sm:$0xf]
        %v456 = vunpack.c.l.b16 %v424
        %v457 = vunpack.c.l.b16 %v425
        %v458 = vunpack.c.l.b16 %v426
        %v459 = vunpack.c.l.b16 %v427
        %v460 = vunpack.c.l.b16 %v428
        %v461 = vunpack.c.l.b16 %v429
        %v462 = vunpack.c.l.b16 %v430
        %v463 = vunpack.c.l.b16 %v431
        %v464 = vunpack.c.l.b16 %v432
        %v465 = vunpack.c.l.b16 %v433
        %v466 = vunpack.c.l.b16 %v434
        %v467 = vunpack.c.l.b16 %v435
        %v468 = vunpack.c.l.b16 %v436
        %v469 = vunpack.c.l.b16 %v437
        %v470 = vunpack.c.l.b16 %v438
        %v471 = vunpack.c.l.b16 %v439
        %v472 = vpack.c.b16 %v457, %v456
        %v473 = vpack.c.b16 %v459, %v458
        %v474 = vpack.c.b16 %v461, %v460
        %v475 = vpack.c.b16 %v463, %v462
        %v476 = vpack.c.b16 %v465, %v464
        %v477 = vpack.c.b16 %v467, %v466
        %v478 = vpack.c.b16 %v469, %v468
        %v479 = vpack.c.b16 %v471, %v470
        %488 = vmatprep.subr.bf16.mxu0 0
        %489 = vmatpush1.bf16.msra.mxu0 %v416
        %490 = vmatprep.subr.bf16.mxu0 0
        %491 = vmatpush1.bf16.msra.mxu0 %v417
        %492 = vmatprep.subr.bf16.mxu0 0
        %493 = vmatpush1.bf16.msra.mxu0 %v418
        %494 = vmatprep.subr.bf16.mxu0 0
        %495 = vmatpush1.bf16.msra.mxu0 %v419
        %496 = vmatprep.subr.bf16.mxu0 0
        %497 = vmatpush1.bf16.msra.mxu0 %v420
        %498 = vmatprep.subr.bf16.mxu0 0
        %499 = vmatpush1.bf16.msra.mxu0 %v421
        %500 = vmatprep.subr.bf16.mxu0 0
        %501 = vmatpush1.bf16.msra.mxu0 %v422
        %502 = vmatprep.subr.bf16.mxu0 0
        %503 = vmatpush1.bf16.msra.mxu0 %v423
        %504 = vmatprep.subr.bf16.mxu0 0
        %505 = vmatpush1.bf16.msra.mxu0 0
        %506 = vmatprep.subr.bf16.mxu0 0
        %507 = vmatpush1.bf16.msra.mxu0 0
        %508 = vmatprep.subr.bf16.mxu0 0
        %509 = vmatpush1.bf16.msra.mxu0 0
        %510 = vmatprep.subr.bf16.mxu0 0
        %511 = vmatpush1.bf16.msra.mxu0 0
        %512 = vmatprep.subr.bf16.mxu0 0
        %513 = vmatpush1.bf16.msra.mxu0 0
        %514 = vmatprep.subr.bf16.mxu0 0
        %515 = vmatpush1.bf16.msra.mxu0 0
        %516 = vmatprep.subr.bf16.mxu0 0
        %517 = vmatpush1.bf16.msra.mxu0 0
        %518 = vmatprep.subr.bf16.mxu0 0
        %519 = vmatpush1.bf16.msra.mxu0 0
        %520 = vmatprep.mubr.bf16.mxu0 0
        %521 = vmatmul.mubr.bf16.gmra.mrb[0].mxu0 %v472
        %v522 = vpop.f32.mrb[0].mxu0
        %v523 = vadd.f32 0.0, %v522
        %v524 = vpop.f32.mrb[0].mxu0
        %v525 = vpop.f32.mrb[0].mxu0
        %v526 = vadd.f32 0.0, %v525
        %v527 = vpop.f32.mrb[0].mxu0
        %528 = vmatprep.mubr.bf16.mxu0 0
        %529 = vmatmul.mubr.bf16.gmra.mrb[0].mxu0 %v473
        %v530 = vpop.f32.mrb[0].mxu0
        %v531 = vadd.f32 0.0, %v530
        %v532 = vpop.f32.mrb[0].mxu0
        %v533 = vpop.f32.mrb[0].mxu0
        %v534 = vadd.f32 0.0, %v533
        %v535 = vpop.f32.mrb[0].mxu0
        %536 = vmatprep.mubr.bf16.mxu0 0
        %537 = vmatmul.mubr.bf16.gmra.mrb[0].mxu0 %v474
        %v538 = vpop.f32.mrb[0].mxu0
        %v539 = vadd.f32 0.0, %v538
        %v540 = vpop.f32.mrb[0].mxu0
        %v541 = vpop.f32.mrb[0].mxu0
        %v542 = vadd.f32 0.0, %v541
        %v543 = vpop.f32.mrb[0].mxu0
        %544 = vmatprep.mubr.bf16.mxu0 0
        %545 = vmatmul.mubr.bf16.gmra.mrb[0].mxu0 %v475
        %v546 = vpop.f32.mrb[0].mxu0
        %v547 = vadd.f32 0.0, %v546
        %v548 = vpop.f32.mrb[0].mxu0
        %v549 = vpop.f32.mrb[0].mxu0
        %v550 = vadd.f32 0.0, %v549
        %v551 = vpop.f32.mrb[0].mxu0
        %552 = vmatprep.mubr.bf16.mxu0 0
        %553 = vmatmul.mubr.bf16.gmra.mrb[0].mxu0 %v476
        %v554 = vpop.f32.mrb[0].mxu0
        %v555 = vadd.f32 0.0, %v554
        %v556 = vpop.f32.mrb[0].mxu0
        %v557 = vpop.f32.mrb[0].mxu0
        %v558 = vadd.f32 0.0, %v557
        %v559 = vpop.f32.mrb[0].mxu0
        %560 = vmatprep.mubr.bf16.mxu0 0
        %561 = vmatmul.mubr.bf16.gmra.mrb[0].mxu0 %v477
        %v562 = vpop.f32.mrb[0].mxu0
        %v563 = vadd.f32 0.0, %v562
        %v564 = vpop.f32.mrb[0].mxu0
        %v565 = vpop.f32.mrb[0].mxu0
        %v566 = vadd.f32 0.0, %v565
        %v567 = vpop.f32.mrb[0].mxu0
        %568 = vmatprep.mubr.bf16.mxu0 0
        %569 = vmatmul.mubr.bf16.gmra.mrb[0].mxu0 %v478
        %v570 = vpop.f32.mrb[0].mxu0
        %v571 = vadd.f32 0.0, %v570
        %v572 = vpop.f32.mrb[0].mxu0
        %v573 = vpop.f32.mrb[0].mxu0
        %v574 = vadd.f32 0.0, %v573
        %v575 = vpop.f32.mrb[0].mxu0
        %576 = vmatprep.mubr.bf16.mxu0 0
        %577 = vmatmul.mubr.bf16.gmra.mrb[0].mxu0 %v479
        %v578 = vpop.f32.mrb[0].mxu0
        %v579 = vadd.f32 0.0, %v578
        %v580 = vpop.f32.mrb[0].mxu0
        %v581 = vpop.f32.mrb[0].mxu0
        %v582 = vadd.f32 0.0, %v581
        %v583 = vpop.f32.mrb[0].mxu0
        %584 = vdwg.mxu0
        %s585 = smul.u32 %s28, 128
        %s586 = scalar_lea.vmem [#allocation3], %s585
        %v587 = vld [vmem:[%s586] sm:$0xff]
        %v588 = vld [vmem:[%s586 + $0x8] sm:$0xff]
        %v589 = vld [vmem:[%s586 + $0x10] sm:$0xff]
        %v590 = vld [vmem:[%s586 + $0x18] sm:$0xff]
        %v591 = vld [vmem:[%s586 + $0x20] sm:$0xff]
        %v592 = vld [vmem:[%s586 + $0x28] sm:$0xff]
        %v593 = vld [vmem:[%s586 + $0x30] sm:$0xff]
        %v594 = vld [vmem:[%s586 + $0x38] sm:$0xff]
        %v595 = vld [vmem:[%s586 + $0x40] sm:$0xff]
        %v596 = vld [vmem:[%s586 + $0x48] sm:$0xff]
        %v597 = vld [vmem:[%s586 + $0x50] sm:$0xff]
        %v598 = vld [vmem:[%s586 + $0x58] sm:$0xff]
        %v599 = vld [vmem:[%s586 + $0x60] sm:$0xff]
        %v600 = vld [vmem:[%s586 + $0x68] sm:$0xff]
        %v601 = vld [vmem:[%s586 + $0x70] sm:$0xff]
        %v602 = vld [vmem:[%s586 + $0x78] sm:$0xff]
        %s603 = scalar_lea.vmem [#allocation6], %s585
        %v604 = vld [vmem:[%s603] sm:$0xff]
        %v605 = vld [vmem:[%s603 + $0x8] sm:$0xff]
        %v606 = vld [vmem:[%s603 + $0x10] sm:$0xff]
        %v607 = vld [vmem:[%s603 + $0x18] sm:$0xff]
        %v608 = vld [vmem:[%s603 + $0x20] sm:$0xff]
        %v609 = vld [vmem:[%s603 + $0x28] sm:$0xff]
        %v610 = vld [vmem:[%s603 + $0x30] sm:$0xff]
        %v611 = vld [vmem:[%s603 + $0x38] sm:$0xff]
        %v612 = vld [vmem:[%s603 + $0x40] sm:$0xff]
        %v613 = vld [vmem:[%s603 + $0x48] sm:$0xff]
        %v614 = vld [vmem:[%s603 + $0x50] sm:$0xff]
        %v615 = vld [vmem:[%s603 + $0x58] sm:$0xff]
        %v616 = vld [vmem:[%s603 + $0x60] sm:$0xff]
        %v617 = vld [vmem:[%s603 + $0x68] sm:$0xff]
        %v618 = vld [vmem:[%s603 + $0x70] sm:$0xff]
        %v619 = vld [vmem:[%s603 + $0x78] sm:$0xff]
        %s620 = smul.u32 %s28, 8
        %s621 = scalar_lea.vmem [#allocation8], %s620
        %v622 = vld [vmem:[%s621] sm:$0xff]
        %v623 = vlaneseq
        %v624 = vshrl.u32 %v623, 7
        %v625 = vsub.s32 0, %v624
        %v626 = vrot.slane %v622, %v625
        %627 = vmatprep.subr.mxu0 0.0
        %628 = vmatpush1.msra.mxu0 %v587
        %629 = vmatprep.subr.mxu0 0.0
        %630 = vmatpush1.msra.mxu0 %v588
        %631 = vmatprep.subr.mxu0 0.0
        %632 = vmatpush1.msra.mxu0 %v589
        %633 = vmatprep.subr.mxu0 0.0
        %634 = vmatpush1.msra.mxu0 %v590
        %635 = vmatprep.subr.mxu0 0.0
        %636 = vmatpush1.msra.mxu0 %v591
        %637 = vmatprep.subr.mxu0 0.0
        %638 = vmatpush1.msra.mxu0 %v592
        %639 = vmatprep.subr.mxu0 0.0
        %640 = vmatpush1.msra.mxu0 %v593
        %641 = vmatprep.subr.mxu0 0.0
        %642 = vmatpush1.msra.mxu0 %v594
        %643 = vmatprep.subr.mxu0 0.0
        %644 = vmatpush1.msra.mxu0 %v595
        %645 = vmatprep.subr.mxu0 0.0
        %646 = vmatpush1.msra.mxu0 %v596
        %647 = vmatprep.subr.mxu0 0.0
        %648 = vmatpush1.msra.mxu0 %v597
        %649 = vmatprep.subr.mxu0 0.0
        %650 = vmatpush1.msra.mxu0 %v598
        %651 = vmatprep.subr.mxu0 0.0
        %652 = vmatpush1.msra.mxu0 %v599
        %653 = vmatprep.subr.mxu0 0.0
        %654 = vmatpush1.msra.mxu0 %v600
        %655 = vmatprep.subr.mxu0 0.0
        %656 = vmatpush1.msra.mxu0 %v601
        %657 = vmatprep.subr.mxu0 0.0
        %658 = vmatpush1.msra.mxu0 %v602
        %659 = vmatprep.subr.mxu0 0.0
        %660 = vmatpush1.msra.mxu0 0.0
        %661 = vmatprep.subr.mxu0 0.0
        %662 = vmatpush1.msra.mxu0 0.0
        %663 = vmatprep.subr.mxu0 0.0
        %664 = vmatpush1.msra.mxu0 0.0
        %665 = vmatprep.subr.mxu0 0.0
        %666 = vmatpush1.msra.mxu0 0.0
        %667 = vmatprep.subr.mxu0 0.0
        %668 = vmatpush1.msra.mxu0 0.0
        %669 = vmatprep.subr.mxu0 0.0
        %670 = vmatpush1.msra.mxu0 0.0
        %671 = vmatprep.subr.mxu0 0.0
        %672 = vmatpush1.msra.mxu0 0.0
        %673 = vmatprep.subr.mxu0 0.0
        %674 = vmatpush1.msra.mxu0 0.0
        %675 = vmatprep.subr.mxu0 0.0
        %676 = vmatpush1.msra.mxu0 0.0
        %677 = vmatprep.subr.mxu0 0.0
        %678 = vmatpush1.msra.mxu0 0.0
        %679 = vmatprep.subr.mxu0 0.0
        %680 = vmatpush1.msra.mxu0 0.0
        %681 = vmatprep.subr.mxu0 0.0
        %682 = vmatpush1.msra.mxu0 0.0
        %683 = vmatprep.subr.mxu0 0.0
        %684 = vmatpush1.msra.mxu0 0.0
        %685 = vmatprep.subr.mxu0 0.0
        %686 = vmatpush1.msra.mxu0 0.0
        %687 = vmatprep.subr.mxu0 0.0
        %688 = vmatpush1.msra.mxu0 0.0
        %689 = vmatprep.subr.mxu0 0.0
        %690 = vmatpush1.msra.mxu0 0.0
        %691 = vmatprep.mubr.f32.mxu0 0.0
        %692 = vmatmul.mubr.f32.gmra.mrb[0].mxu0 %v523
        %v693 = vpop.f32.mrb[0].mxu0
        %v694 = vadd.f32 %v626, %v693
        %v695 = vpop.f32.mrb[0].mxu0
        %696 = vmatprep.mubr.f32.mxu0 0.0
        %697 = vmatmul.mubr.f32.gmra.mrb[0].mxu0 %v526
        %v698 = vpop.f32.mrb[0].mxu0
        %v699 = vadd.f32 %v626, %v698
        %v700 = vpop.f32.mrb[0].mxu0
        %701 = vmatprep.mubr.f32.mxu0 0.0
        %702 = vmatmul.mubr.f32.gmra.mrb[0].mxu0 %v531
        %v703 = vpop.f32.mrb[0].mxu0
        %v704 = vadd.f32 %v626, %v703
        %v705 = vpop.f32.mrb[0].mxu0
        %706 = vmatprep.mubr.f32.mxu0 0.0
        %707 = vmatmul.mubr.f32.gmra.mrb[0].mxu0 %v534
        %v708 = vpop.f32.mrb[0].mxu0
        %v709 = vadd.f32 %v626, %v708
        %v710 = vpop.f32.mrb[0].mxu0
        %711 = vmatprep.mubr.f32.mxu0 0.0
        %712 = vmatmul.mubr.f32.gmra.mrb[0].mxu0 %v539
        %v713 = vpop.f32.mrb[0].mxu0
        %v714 = vadd.f32 %v626, %v713
        %v715 = vpop.f32.mrb[0].mxu0
        %716 = vmatprep.mubr.f32.mxu0 0.0
        %717 = vmatmul.mubr.f32.gmra.mrb[0].mxu0 %v542
        %v718 = vpop.f32.mrb[0].mxu0
        %v719 = vadd.f32 %v626, %v718
        %v720 = vpop.f32.mrb[0].mxu0
        %721 = vmatprep.mubr.f32.mxu0 0.0
        %722 = vmatmul.mubr.f32.gmra.mrb[0].mxu0 %v547
        %v723 = vpop.f32.mrb[0].mxu0
        %v724 = vadd.f32 %v626, %v723
        %v725 = vpop.f32.mrb[0].mxu0
        %726 = vmatprep.mubr.f32.mxu0 0.0
        %727 = vmatmul.mubr.f32.gmra.mrb[0].mxu0 %v550
        %v728 = vpop.f32.mrb[0].mxu0
        %v729 = vadd.f32 %v626, %v728
        %v730 = vpop.f32.mrb[0].mxu0
        %731 = vmatprep.mubr.f32.mxu0 0.0
        %732 = vmatmul.mubr.f32.gmra.mrb[0].mxu0 %v555
        %v733 = vpop.f32.mrb[0].mxu0
        %v734 = vadd.f32 %v626, %v733
        %v735 = vpop.f32.mrb[0].mxu0
        %736 = vmatprep.mubr.f32.mxu0 0.0
        %737 = vmatmul.mubr.f32.gmra.mrb[0].mxu0 %v558
        %v738 = vpop.f32.mrb[0].mxu0
        %v739 = vadd.f32 %v626, %v738
        %v740 = vpop.f32.mrb[0].mxu0
        %741 = vmatprep.mubr.f32.mxu0 0.0
        %742 = vmatmul.mubr.f32.gmra.mrb[0].mxu0 %v563
        %v743 = vpop.f32.mrb[0].mxu0
        %v744 = vadd.f32 %v626, %v743
        %v745 = vpop.f32.mrb[0].mxu0
        %746 = vmatprep.mubr.f32.mxu0 0.0
        %747 = vmatmul.mubr.f32.gmra.mrb[0].mxu0 %v566
        %v748 = vpop.f32.mrb[0].mxu0
        %v749 = vadd.f32 %v626, %v748
        %v750 = vpop.f32.mrb[0].mxu0
        %751 = vmatprep.mubr.f32.mxu0 0.0
        %752 = vmatmul.mubr.f32.gmra.mrb[0].mxu0 %v571
        %v753 = vpop.f32.mrb[0].mxu0
        %v754 = vadd.f32 %v626, %v753
        %v755 = vpop.f32.mrb[0].mxu0
        %756 = vmatprep.mubr.f32.mxu0 0.0
        %757 = vmatmul.mubr.f32.gmra.mrb[0].mxu0 %v574
        %v758 = vpop.f32.mrb[0].mxu0
        %v759 = vadd.f32 %v626, %v758
        %v760 = vpop.f32.mrb[0].mxu0
        %761 = vmatprep.mubr.f32.mxu0 0.0
        %762 = vmatmul.mubr.f32.gmra.mrb[0].mxu0 %v579
        %v763 = vpop.f32.mrb[0].mxu0
        %v764 = vadd.f32 %v626, %v763
        %v765 = vpop.f32.mrb[0].mxu0
        %766 = vmatprep.mubr.f32.mxu0 0.0
        %767 = vmatmul.mubr.f32.gmra.mrb[0].mxu0 %v582
        %v768 = vpop.f32.mrb[0].mxu0
        %v769 = vadd.f32 %v626, %v768
        %v770 = vpop.f32.mrb[0].mxu0
        %771 = vdwg.mxu0
        %v772 = vmax.f32 %v694, 0.0
        %v773 = vmax.f32 %v699, 0.0
        %v774 = vmax.f32 %v704, 0.0
        %v775 = vmax.f32 %v709, 0.0
        %v776 = vmax.f32 %v714, 0.0
        %v777 = vmax.f32 %v719, 0.0
        %v778 = vmax.f32 %v724, 0.0
        %v779 = vmax.f32 %v729, 0.0
        %v780 = vmax.f32 %v734, 0.0
        %v781 = vmax.f32 %v739, 0.0
        %v782 = vmax.f32 %v744, 0.0
        %v783 = vmax.f32 %v749, 0.0
        %v784 = vmax.f32 %v754, 0.0
        %v785 = vmax.f32 %v759, 0.0
        %v786 = vmax.f32 %v764, 0.0
        %v787 = vmax.f32 %v769, 0.0
        %v788 = vlaneseq
        %v789 = vshrl.u32 %v788, 7
        %v790 = vsub.s32 1, %v789
        %v791 = vrot.slane %v622, %v790
        %792 = vmatprep.subr.mxu0 0.0
        %793 = vmatpush1.msra.mxu0 %v604
        %794 = vmatprep.subr.mxu0 0.0
        %795 = vmatpush1.msra.mxu0 %v605
        %796 = vmatprep.subr.mxu0 0.0
        %797 = vmatpush1.msra.mxu0 %v606
        %798 = vmatprep.subr.mxu0 0.0
        %799 = vmatpush1.msra.mxu0 %v607
        %800 = vmatprep.subr.mxu0 0.0
        %801 = vmatpush1.msra.mxu0 %v608
        %802 = vmatprep.subr.mxu0 0.0
        %803 = vmatpush1.msra.mxu0 %v609
        %804 = vmatprep.subr.mxu0 0.0
        %805 = vmatpush1.msra.mxu0 %v610
        %806 = vmatprep.subr.mxu0 0.0
        %807 = vmatpush1.msra.mxu0 %v611
        %808 = vmatprep.subr.mxu0 0.0
        %809 = vmatpush1.msra.mxu0 %v612
        %810 = vmatprep.subr.mxu0 0.0
        %811 = vmatpush1.msra.mxu0 %v613
        %812 = vmatprep.subr.mxu0 0.0
        %813 = vmatpush1.msra.mxu0 %v614
        %814 = vmatprep.subr.mxu0 0.0
        %815 = vmatpush1.msra.mxu0 %v615
        %816 = vmatprep.subr.mxu0 0.0
        %817 = vmatpush1.msra.mxu0 %v616
        %818 = vmatprep.subr.mxu0 0.0
        %819 = vmatpush1.msra.mxu0 %v617
        %820 = vmatprep.subr.mxu0 0.0
        %821 = vmatpush1.msra.mxu0 %v618
        %822 = vmatprep.subr.mxu0 0.0
        %823 = vmatpush1.msra.mxu0 %v619
        %824 = vmatprep.subr.mxu0 0.0
        %825 = vmatpush1.msra.mxu0 0.0
        %826 = vmatprep.subr.mxu0 0.0
        %827 = vmatpush1.msra.mxu0 0.0
        %828 = vmatprep.subr.mxu0 0.0
        %829 = vmatpush1.msra.mxu0 0.0
        %830 = vmatprep.subr.mxu0 0.0
        %831 = vmatpush1.msra.mxu0 0.0
        %832 = vmatprep.subr.mxu0 0.0
        %833 = vmatpush1.msra.mxu0 0.0
        %834 = vmatprep.subr.mxu0 0.0
        %835 = vmatpush1.msra.mxu0 0.0
        %836 = vmatprep.subr.mxu0 0.0
        %837 = vmatpush1.msra.mxu0 0.0
        %838 = vmatprep.subr.mxu0 0.0
        %839 = vmatpush1.msra.mxu0 0.0
        %840 = vmatprep.subr.mxu0 0.0
        %841 = vmatpush1.msra.mxu0 0.0
        %842 = vmatprep.subr.mxu0 0.0
        %843 = vmatpush1.msra.mxu0 0.0
        %844 = vmatprep.subr.mxu0 0.0
        %845 = vmatpush1.msra.mxu0 0.0
        %846 = vmatprep.subr.mxu0 0.0
        %847 = vmatpush1.msra.mxu0 0.0
        %848 = vmatprep.subr.mxu0 0.0
        %849 = vmatpush1.msra.mxu0 0.0
        %850 = vmatprep.subr.mxu0 0.0
        %851 = vmatpush1.msra.mxu0 0.0
        %852 = vmatprep.subr.mxu0 0.0
        %853 = vmatpush1.msra.mxu0 0.0
        %854 = vmatprep.subr.mxu0 0.0
        %855 = vmatpush1.msra.mxu0 0.0
        %856 = vmatprep.mubr.f32.mxu0 0.0
        %857 = vmatmul.mubr.f32.gmra.mrb[0].mxu0 %v772
        %v858 = vpop.f32.mrb[0].mxu0
        %v859 = vadd.f32 %v791, %v858
        %v860 = vpop.f32.mrb[0].mxu0
        %861 = vmatprep.mubr.f32.mxu0 0.0
        %862 = vmatmul.mubr.f32.gmra.mrb[0].mxu0 %v773
        %v863 = vpop.f32.mrb[0].mxu0
        %v864 = vadd.f32 %v791, %v863
        %v865 = vpop.f32.mrb[0].mxu0
        %866 = vmatprep.mubr.f32.mxu0 0.0
        %867 = vmatmul.mubr.f32.gmra.mrb[0].mxu0 %v774
        %v868 = vpop.f32.mrb[0].mxu0
        %v869 = vadd.f32 %v791, %v868
        %v870 = vpop.f32.mrb[0].mxu0
        %871 = vmatprep.mubr.f32.mxu0 0.0
        %872 = vmatmul.mubr.f32.gmra.mrb[0].mxu0 %v775
        %v873 = vpop.f32.mrb[0].mxu0
        %v874 = vadd.f32 %v791, %v873
        %v875 = vpop.f32.mrb[0].mxu0
        %876 = vmatprep.mubr.f32.mxu0 0.0
        %877 = vmatmul.mubr.f32.gmra.mrb[0].mxu0 %v776
        %v878 = vpop.f32.mrb[0].mxu0
        %v879 = vadd.f32 %v791, %v878
        %v880 = vpop.f32.mrb[0].mxu0
        %881 = vmatprep.mubr.f32.mxu0 0.0
        %882 = vmatmul.mubr.f32.gmra.mrb[0].mxu0 %v777
        %v883 = vpop.f32.mrb[0].mxu0
        %v884 = vadd.f32 %v791, %v883
        %v885 = vpop.f32.mrb[0].mxu0
        %886 = vmatprep.mubr.f32.mxu0 0.0
        %887 = vmatmul.mubr.f32.gmra.mrb[0].mxu0 %v778
        %v888 = vpop.f32.mrb[0].mxu0
        %v889 = vadd.f32 %v791, %v888
        %v890 = vpop.f32.mrb[0].mxu0
        %891 = vmatprep.mubr.f32.mxu0 0.0
        %892 = vmatmul.mubr.f32.gmra.mrb[0].mxu0 %v779
        %v893 = vpop.f32.mrb[0].mxu0
        %v894 = vadd.f32 %v791, %v893
        %v895 = vpop.f32.mrb[0].mxu0
        %896 = vmatprep.mubr.f32.mxu0 0.0
        %897 = vmatmul.mubr.f32.gmra.mrb[0].mxu0 %v780
        %v898 = vpop.f32.mrb[0].mxu0
        %v899 = vadd.f32 %v791, %v898
        %v900 = vpop.f32.mrb[0].mxu0
        %901 = vmatprep.mubr.f32.mxu0 0.0
        %902 = vmatmul.mubr.f32.gmra.mrb[0].mxu0 %v781
        %v903 = vpop.f32.mrb[0].mxu0
        %v904 = vadd.f32 %v791, %v903
        %v905 = vpop.f32.mrb[0].mxu0
        %906 = vmatprep.mubr.f32.mxu0 0.0
        %907 = vmatmul.mubr.f32.gmra.mrb[0].mxu0 %v782
        %v908 = vpop.f32.mrb[0].mxu0
        %v909 = vadd.f32 %v791, %v908
        %v910 = vpop.f32.mrb[0].mxu0
        %911 = vmatprep.mubr.f32.mxu0 0.0
        %912 = vmatmul.mubr.f32.gmra.mrb[0].mxu0 %v783
        %v913 = vpop.f32.mrb[0].mxu0
        %v914 = vadd.f32 %v791, %v913
        %v915 = vpop.f32.mrb[0].mxu0
        %916 = vmatprep.mubr.f32.mxu0 0.0
        %917 = vmatmul.mubr.f32.gmra.mrb[0].mxu0 %v784
        %v918 = vpop.f32.mrb[0].mxu0
        %v919 = vadd.f32 %v791, %v918
        %v920 = vpop.f32.mrb[0].mxu0
        %921 = vmatprep.mubr.f32.mxu0 0.0
        %922 = vmatmul.mubr.f32.gmra.mrb[0].mxu0 %v785
        %v923 = vpop.f32.mrb[0].mxu0
        %v924 = vadd.f32 %v791, %v923
        %v925 = vpop.f32.mrb[0].mxu0
        %926 = vmatprep.mubr.f32.mxu0 0.0
        %927 = vmatmul.mubr.f32.gmra.mrb[0].mxu0 %v786
        %v928 = vpop.f32.mrb[0].mxu0
        %v929 = vadd.f32 %v791, %v928
        %v930 = vpop.f32.mrb[0].mxu0
        %931 = vmatprep.mubr.f32.mxu0 0.0
        %932 = vmatmul.mubr.f32.gmra.mrb[0].mxu0 %v787
        %v933 = vpop.f32.mrb[0].mxu0
        %v934 = vadd.f32 %v791, %v933
        %v935 = vpop.f32.mrb[0].mxu0
        %936 = vdwg.mxu0
        %v937 = vmax.f32 %v859, 0.0
        %v938 = vmax.f32 %v864, 0.0
        %v939 = vmax.f32 %v869, 0.0
        %v940 = vmax.f32 %v874, 0.0
        %v941 = vmax.f32 %v879, 0.0
        %v942 = vmax.f32 %v884, 0.0
        %v943 = vmax.f32 %v889, 0.0
        %v944 = vmax.f32 %v894, 0.0
        %v945 = vmax.f32 %v899, 0.0
        %v946 = vmax.f32 %v904, 0.0
        %v947 = vmax.f32 %v909, 0.0
        %v948 = vmax.f32 %v914, 0.0
        %v949 = vmax.f32 %v919, 0.0
        %v950 = vmax.f32 %v924, 0.0
        %v951 = vmax.f32 %v929, 0.0
        %v952 = vmax.f32 %v934, 0.0
        %v953 = vld [vmem:[%s3] sm:$0xff]
        %v954 = vld [vmem:[%s3 + $0x8] sm:$0xff]
        %v955 = vld [vmem:[%s3 + $0x10] sm:$0xff]
        %v956 = vld [vmem:[%s3 + $0x18] sm:$0xff]
        %v957 = vld [vmem:[%s3 + $0x20] sm:$0xff]
        %v958 = vld [vmem:[%s3 + $0x28] sm:$0xff]
        %v959 = vld [vmem:[%s3 + $0x30] sm:$0xff]
        %v960 = vld [vmem:[%s3 + $0x38] sm:$0xff]
        %v961 = vld [vmem:[%s3 + $0x40] sm:$0xff]
        %v962 = vld [vmem:[%s3 + $0x48] sm:$0xff]
        %v963 = vld [vmem:[%s3 + $0x50] sm:$0xff]
        %v964 = vld [vmem:[%s3 + $0x58] sm:$0xff]
        %v965 = vld [vmem:[%s3 + $0x60] sm:$0xff]
        %v966 = vld [vmem:[%s3 + $0x68] sm:$0xff]
        %v967 = vld [vmem:[%s3 + $0x70] sm:$0xff]
        %v968 = vld [vmem:[%s3 + $0x78] sm:$0xff]
        %970 = vset.pattern.permute.xlu0 0
        %971 = vperm.xlu0 %970, %v953
        %v972 = vpop.permute.xlu0 %971
        %975 = vset.pattern.permute.xlu0 0
        %976 = vperm.xlu0 %975, %v954
        %v977 = vpop.permute.xlu0 %976
        %980 = vset.pattern.permute.xlu0 0
        %981 = vperm.xlu0 %980, %v955
        %v982 = vpop.permute.xlu0 %981
        %985 = vset.pattern.permute.xlu0 0
        %986 = vperm.xlu0 %985, %v956
        %v987 = vpop.permute.xlu0 %986
        %990 = vset.pattern.permute.xlu0 0
        %991 = vperm.xlu0 %990, %v957
        %v992 = vpop.permute.xlu0 %991
        %995 = vset.pattern.permute.xlu0 0
        %996 = vperm.xlu0 %995, %v958
        %v997 = vpop.permute.xlu0 %996
        %1000 = vset.pattern.permute.xlu0 0
        %1001 = vperm.xlu0 %1000, %v959
        %v1002 = vpop.permute.xlu0 %1001
        %1005 = vset.pattern.permute.xlu0 0
        %1006 = vperm.xlu0 %1005, %v960
        %v1007 = vpop.permute.xlu0 %1006
        %1010 = vset.pattern.permute.xlu0 0
        %1011 = vperm.xlu0 %1010, %v961
        %v1012 = vpop.permute.xlu0 %1011
        %1015 = vset.pattern.permute.xlu0 0
        %1016 = vperm.xlu0 %1015, %v962
        %v1017 = vpop.permute.xlu0 %1016
        %1020 = vset.pattern.permute.xlu0 0
        %1021 = vperm.xlu0 %1020, %v963
        %v1022 = vpop.permute.xlu0 %1021
        %1025 = vset.pattern.permute.xlu0 0
        %1026 = vperm.xlu0 %1025, %v964
        %v1027 = vpop.permute.xlu0 %1026
        %1030 = vset.pattern.permute.xlu0 0
        %1031 = vperm.xlu0 %1030, %v965
        %v1032 = vpop.permute.xlu0 %1031
        %1035 = vset.pattern.permute.xlu0 0
        %1036 = vperm.xlu0 %1035, %v966
        %v1037 = vpop.permute.xlu0 %1036
        %1040 = vset.pattern.permute.xlu0 0
        %1041 = vperm.xlu0 %1040, %v967
        %v1042 = vpop.permute.xlu0 %1041
        %1045 = vset.pattern.permute.xlu0 0
        %1046 = vperm.xlu0 %1045, %v968
        %v1047 = vpop.permute.xlu0 %1046
        %v1049 = vmul.f32 %v937, %v972
        %v1050 = vmul.f32 %v938, %v977
        %v1051 = vmul.f32 %v939, %v982
        %v1052 = vmul.f32 %v940, %v987
        %v1053 = vmul.f32 %v941, %v992
        %v1054 = vmul.f32 %v942, %v997
        %v1055 = vmul.f32 %v943, %v1002
        %v1056 = vmul.f32 %v944, %v1007
        %v1057 = vmul.f32 %v945, %v1012
        %v1058 = vmul.f32 %v946, %v1017
        %v1059 = vmul.f32 %v947, %v1022
        %v1060 = vmul.f32 %v948, %v1027
        %v1061 = vmul.f32 %v949, %v1032
        %v1062 = vmul.f32 %v950, %v1037
        %v1063 = vmul.f32 %v951, %v1042
        %v1064 = vmul.f32 %v952, %v1047
        %v1065 = vadd.f32 %v1049, %v1050
        %v1066 = vadd.f32 %v1065, %v1051
        %v1067 = vadd.f32 %v1066, %v1052
        %v1068 = vadd.f32 %v1067, %v1053
        %v1069 = vadd.f32 %v1068, %v1054
        %v1070 = vadd.f32 %v1069, %v1055
        %v1071 = vadd.f32 %v1070, %v1056
        %v1072 = vadd.f32 %v1071, %v1057
        %v1073 = vadd.f32 %v1072, %v1058
        %v1074 = vadd.f32 %v1073, %v1059
        %v1075 = vadd.f32 %v1074, %v1060
        %v1076 = vadd.f32 %v1075, %v1061
        %v1077 = vadd.f32 %v1076, %v1062
        %v1078 = vadd.f32 %v1077, %v1063
        %v1079 = vadd.f32 %v1078, %v1064
        %v1080 = vrot.slane %v1079, 4
        %v1081 = vadd.f32 %v1079, %v1080
        %v1082 = vrot.slane %v1081, 2
        %v1083 = vadd.f32 %v1081, %v1082
        %v1084 = vrot.slane %v1083, 1
        %v1085 = vadd.f32 %v1083, %v1084
        %v1086 = vmul.f32 %v1085, 0.0625
        %v1087 = vsub.f32 %v1049, %v1086
        %v1088 = vsub.f32 %v1050, %v1086
        %v1089 = vsub.f32 %v1051, %v1086
        %v1090 = vsub.f32 %v1052, %v1086
        %v1091 = vsub.f32 %v1053, %v1086
        %v1092 = vsub.f32 %v1054, %v1086
        %v1093 = vsub.f32 %v1055, %v1086
        %v1094 = vsub.f32 %v1056, %v1086
        %v1095 = vsub.f32 %v1057, %v1086
        %v1096 = vsub.f32 %v1058, %v1086
        %v1097 = vsub.f32 %v1059, %v1086
        %v1098 = vsub.f32 %v1060, %v1086
        %v1099 = vsub.f32 %v1061, %v1086
        %v1100 = vsub.f32 %v1062, %v1086
        %v1101 = vsub.f32 %v1063, %v1086
        %v1102 = vsub.f32 %v1064, %v1086
        %v1103 = vmul.f32 %v1087, %v1087
        %v1104 = vmul.f32 %v1088, %v1088
        %v1105 = vmul.f32 %v1089, %v1089
        %v1106 = vmul.f32 %v1090, %v1090
        %v1107 = vmul.f32 %v1091, %v1091
        %v1108 = vmul.f32 %v1092, %v1092
        %v1109 = vmul.f32 %v1093, %v1093
        %v1110 = vmul.f32 %v1094, %v1094
        %v1111 = vmul.f32 %v1095, %v1095
        %v1112 = vmul.f32 %v1096, %v1096
        %v1113 = vmul.f32 %v1097, %v1097
        %v1114 = vmul.f32 %v1098, %v1098
        %v1115 = vmul.f32 %v1099, %v1099
        %v1116 = vmul.f32 %v1100, %v1100
        %v1117 = vmul.f32 %v1101, %v1101
        %v1118 = vmul.f32 %v1102, %v1102
        %v1119 = vmul.f32 %v1103, %v972
        %v1120 = vmul.f32 %v1104, %v977
        %v1121 = vmul.f32 %v1105, %v982
        %v1122 = vmul.f32 %v1106, %v987
        %v1123 = vmul.f32 %v1107, %v992
        %v1124 = vmul.f32 %v1108, %v997
        %v1125 = vmul.f32 %v1109, %v1002
        %v1126 = vmul.f32 %v1110, %v1007
        %v1127 = vmul.f32 %v1111, %v1012
        %v1128 = vmul.f32 %v1112, %v1017
        %v1129 = vmul.f32 %v1113, %v1022
        %v1130 = vmul.f32 %v1114, %v1027
        %v1131 = vmul.f32 %v1115, %v1032
        %v1132 = vmul.f32 %v1116, %v1037
        %v1133 = vmul.f32 %v1117, %v1042
        %v1134 = vmul.f32 %v1118, %v1047
        %v1135 = vadd.f32 %v1119, %v1120
        %v1136 = vadd.f32 %v1135, %v1121
        %v1137 = vadd.f32 %v1136, %v1122
        %v1138 = vadd.f32 %v1137, %v1123
        %v1139 = vadd.f32 %v1138, %v1124
        %v1140 = vadd.f32 %v1139, %v1125
        %v1141 = vadd.f32 %v1140, %v1126
        %v1142 = vadd.f32 %v1141, %v1127
        %v1143 = vadd.f32 %v1142, %v1128
        %v1144 = vadd.f32 %v1143, %v1129
        %v1145 = vadd.f32 %v1144, %v1130
        %v1146 = vadd.f32 %v1145, %v1131
        %v1147 = vadd.f32 %v1146, %v1132
        %v1148 = vadd.f32 %v1147, %v1133
        %v1149 = vadd.f32 %v1148, %v1134
        %v1150 = vrot.slane %v1149, 4
        %v1151 = vadd.f32 %v1149, %v1150
        %v1152 = vrot.slane %v1151, 2
        %v1153 = vadd.f32 %v1151, %v1152
        %v1154 = vrot.slane %v1153, 1
        %v1155 = vadd.f32 %v1153, %v1154
        %v1156 = vmul.f32 %v1155, 0.0625
        %v1157 = vlaneseq
        %v1158 = vshrl.u32 %v1157, 7
        %v1159 = vsub.s32 2, %v1158
        %v1160 = vrot.slane %v622, %v1159
        %v1161 = vmul.f32 %v1160, %v1087
        %v1162 = vmul.f32 %v1160, %v1088
        %v1163 = vmul.f32 %v1160, %v1089
        %v1164 = vmul.f32 %v1160, %v1090
        %v1165 = vmul.f32 %v1160, %v1091
        %v1166 = vmul.f32 %v1160, %v1092
        %v1167 = vmul.f32 %v1160, %v1093
        %v1168 = vmul.f32 %v1160, %v1094
        %v1169 = vmul.f32 %v1160, %v1095
        %v1170 = vmul.f32 %v1160, %v1096
        %v1171 = vmul.f32 %v1160, %v1097
        %v1172 = vmul.f32 %v1160, %v1098
        %v1173 = vmul.f32 %v1160, %v1099
        %v1174 = vmul.f32 %v1160, %v1100
        %v1175 = vmul.f32 %v1160, %v1101
        %v1176 = vmul.f32 %v1160, %v1102
        %v1177 = vadd.f32 %v1156, 1e-05
        %v1178 = vrsqrt.pop %v1177
        %v1179 = vmul.f32 %v1161, %v1178
        %v1180 = vmul.f32 %v1162, %v1178
        %v1181 = vmul.f32 %v1163, %v1178
        %v1182 = vmul.f32 %v1164, %v1178
        %v1183 = vmul.f32 %v1165, %v1178
        %v1184 = vmul.f32 %v1166, %v1178
        %v1185 = vmul.f32 %v1167, %v1178
        %v1186 = vmul.f32 %v1168, %v1178
        %v1187 = vmul.f32 %v1169, %v1178
        %v1188 = vmul.f32 %v1170, %v1178
        %v1189 = vmul.f32 %v1171, %v1178
        %v1190 = vmul.f32 %v1172, %v1178
        %v1191 = vmul.f32 %v1173, %v1178
        %v1192 = vmul.f32 %v1174, %v1178
        %v1193 = vmul.f32 %v1175, %v1178
        %v1194 = vmul.f32 %v1176, %v1178
        %v1195 = vlaneseq
        %v1196 = vshrl.u32 %v1195, 7
        %v1197 = vsub.s32 3, %v1196
        %v1198 = vrot.slane %v622, %v1197
        %v1199 = vadd.f32 %v1179, %v1198
        %v1200 = vadd.f32 %v1180, %v1198
        %v1201 = vadd.f32 %v1181, %v1198
        %v1202 = vadd.f32 %v1182, %v1198
        %v1203 = vadd.f32 %v1183, %v1198
        %v1204 = vadd.f32 %v1184, %v1198
        %v1205 = vadd.f32 %v1185, %v1198
        %v1206 = vadd.f32 %v1186, %v1198
        %v1207 = vadd.f32 %v1187, %v1198
        %v1208 = vadd.f32 %v1188, %v1198
        %v1209 = vadd.f32 %v1189, %v1198
        %v1210 = vadd.f32 %v1190, %v1198
        %v1211 = vadd.f32 %v1191, %v1198
        %v1212 = vadd.f32 %v1192, %v1198
        %v1213 = vadd.f32 %v1193, %v1198
        %v1214 = vadd.f32 %v1194, %v1198
        %v1215 = vmul.f32 %v1199, %v972
        %v1216 = vmul.f32 %v1200, %v977
        %v1217 = vmul.f32 %v1201, %v982
        %v1218 = vmul.f32 %v1202, %v987
        %v1219 = vmul.f32 %v1203, %v992
        %v1220 = vmul.f32 %v1204, %v997
        %v1221 = vmul.f32 %v1205, %v1002
        %v1222 = vmul.f32 %v1206, %v1007
        %v1223 = vmul.f32 %v1207, %v1012
        %v1224 = vmul.f32 %v1208, %v1017
        %v1225 = vmul.f32 %v1209, %v1022
        %v1226 = vmul.f32 %v1210, %v1027
        %v1227 = vmul.f32 %v1211, %v1032
        %v1228 = vmul.f32 %v1212, %v1037
        %v1229 = vmul.f32 %v1213, %v1042
        %v1230 = vmul.f32 %v1214, %v1047
        %v1231 = vpack.c.bf16 %v1216, %v1215
        %v1232 = vpack.c.bf16 %v1218, %v1217
        %v1233 = vpack.c.bf16 %v1220, %v1219
        %v1234 = vpack.c.bf16 %v1222, %v1221
        %v1235 = vpack.c.bf16 %v1224, %v1223
        %v1236 = vpack.c.bf16 %v1226, %v1225
        %v1237 = vpack.c.bf16 %v1228, %v1227
        %v1238 = vpack.c.bf16 %v1230, %v1229
        %1239 = vst [vmem:[#allocation2] sm:$0xff] %v1231
        %1240 = vst [vmem:[#allocation2 + $0x8] sm:$0xff] %v1232
        %1241 = vst [vmem:[#allocation2 + $0x10] sm:$0xff] %v1233
        %1242 = vst [vmem:[#allocation2 + $0x18] sm:$0xff] %v1234
        %1243 = vst [vmem:[#allocation2 + $0x20] sm:$0xff] %v1235
        %1244 = vst [vmem:[#allocation2 + $0x28] sm:$0xff] %v1236
        %1245 = vst [vmem:[#allocation2 + $0x30] sm:$0xff] %v1237
        %1246 = vst [vmem:[#allocation2 + $0x38] sm:$0xff] %v1238
        %1247 = vst [vmem:[%s331] sm:$0xff] %v1215
        %1248 = vst [vmem:[%s331 + $0x8] sm:$0xff] %v1216
        %1249 = vst [vmem:[%s331 + $0x10] sm:$0xff] %v1217
        %1250 = vst [vmem:[%s331 + $0x18] sm:$0xff] %v1218
        %1251 = vst [vmem:[%s331 + $0x20] sm:$0xff] %v1219
        %1252 = vst [vmem:[%s331 + $0x28] sm:$0xff] %v1220
        %1253 = vst [vmem:[%s331 + $0x30] sm:$0xff] %v1221
        %1254 = vst [vmem:[%s331 + $0x38] sm:$0xff] %v1222
        %1255 = vst [vmem:[%s331 + $0x40] sm:$0xff] %v1223
        %1256 = vst [vmem:[%s331 + $0x48] sm:$0xff] %v1224
        %1257 = vst [vmem:[%s331 + $0x50] sm:$0xff] %v1225
        %1258 = vst [vmem:[%s331 + $0x58] sm:$0xff] %v1226
        %1259 = vst [vmem:[%s331 + $0x60] sm:$0xff] %v1227
        %1260 = vst [vmem:[%s331 + $0x68] sm:$0xff] %v1228
        %1261 = vst [vmem:[%s331 + $0x70] sm:$0xff] %v1229
        %1262 = vst [vmem:[%s331 + $0x78] sm:$0xff] %v1230
        %v1263 = vld [vmem:[%s2] sm:$0xf]
        %v1264 = vld [vmem:[%s2 + $0x4] sm:$0xf]
        %v1267 = vunpack.c.l.b16 %v1263
        %v1268 = vunpack.c.l.b16 %v1264
        %v1269 = vpack.c.b16 %v1268, %v1267
        %1271 = vmatprep.subr.bf16.mxu0 0
        %1272 = vmatpush1.bf16.msra.mxu0 %v1231
        %1273 = vmatprep.subr.bf16.mxu0 0
        %1274 = vmatpush1.bf16.msra.mxu0 %v1232
        %1275 = vmatprep.subr.bf16.mxu0 0
        %1276 = vmatpush1.bf16.msra.mxu0 %v1233
        %1277 = vmatprep.subr.bf16.mxu0 0
        %1278 = vmatpush1.bf16.msra.mxu0 %v1234
        %1279 = vmatprep.subr.bf16.mxu0 0
        %1280 = vmatpush1.bf16.msra.mxu0 %v1235
        %1281 = vmatprep.subr.bf16.mxu0 0
        %1282 = vmatpush1.bf16.msra.mxu0 %v1236
        %1283 = vmatprep.subr.bf16.mxu0 0
        %1284 = vmatpush1.bf16.msra.mxu0 %v1237
        %1285 = vmatprep.subr.bf16.mxu0 0
        %1286 = vmatpush1.bf16.msra.mxu0 %v1238
        %1287 = vmatprep.subr.bf16.mxu0 0
        %1288 = vmatpush1.bf16.msra.mxu0 0
        %1289 = vmatprep.subr.bf16.mxu0 0
        %1290 = vmatpush1.bf16.msra.mxu0 0
        %1291 = vmatprep.subr.bf16.mxu0 0
        %1292 = vmatpush1.bf16.msra.mxu0 0
        %1293 = vmatprep.subr.bf16.mxu0 0
        %1294 = vmatpush1.bf16.msra.mxu0 0
        %1295 = vmatprep.subr.bf16.mxu0 0
        %1296 = vmatpush1.bf16.msra.mxu0 0
        %1297 = vmatprep.subr.bf16.mxu0 0
        %1298 = vmatpush1.bf16.msra.mxu0 0
        %1299 = vmatprep.subr.bf16.mxu0 0
        %1300 = vmatpush1.bf16.msra.mxu0 0
        %1301 = vmatprep.subr.bf16.mxu0 0
        %1302 = vmatpush1.bf16.msra.mxu0 0
        %1303 = vmatprep.mubr.bf16.mxu0 0
        %1304 = vmatmul.mubr.bf16.gmra.mrb[0].mxu0 %v1269
        %v1305 = vpop.f32.mrb[0].mxu0
        %v1306 = vadd.f32 0.0, %v1305
        %v1307 = vpop.f32.mrb[0].mxu0
        %v1308 = vpop.f32.mrb[0].mxu0
        %v1309 = vadd.f32 0.0, %v1308
        %v1310 = vpop.f32.mrb[0].mxu0
        %1311 = vdwg.mxu0
        %1312 = vst [vmem:[%s338] sm:$0xff] %v1306
        %1313 = vst [vmem:[%s338 + $0x8] sm:$0xff] %v1309
        %s1314 = sand.u32 %s183, 1
        %s1315 = scalar_lea.sflag [#allocation5], %s1314
        %s1316 = sand.u32 %s183, 1
        %s1317 = smul.addr %s1316, 128
        %s1318 = scalar_lea.vmem [#allocation9], %s1317
        %s1319 = sand.u32 %s209, 1
        %s1320 = scalar_lea.sflag [#allocation11], %s1319
        %s1321 = sand.u32 %s209, 1
        %s1322 = smul.addr %s1321, 16
        %s1323 = scalar_lea.vmem [#allocation10], %s1322
        // Predicated region
        $region65: #{_run_fused.1} parent=47 // pred_check
          %p1324 = pneg %p193
        $region66: #{_run_fused.1} parent=47 // pred_check_branch
          %1326 = sbr.rel (%p1324) target = $region68
        $region67: #{_run_fused.1} parent=47 // pred_region
          %s1328 = ssub.s32 2048, 2048
          %1329 = vsyncadd %s1315, %s1328
          %s1330 = smul.addr %s28, 128
          %s1331 = scalar_lea.hbm %s7, %s1330
          %s1332 = sshll.u32 %s1318, 4
          %s1333 = int_to_ptr.vmem [resolvable:$true] %s1332
          %1338 = dma.vmem_to_hbm [thread:$0]  %s1333, 2048, %s1331, %s1315, 128, 384, 8
        $region68: #{_run_fused.1} parent=47 // pred_fallthru
          _
        // Predicated region
        $region69: #{_run_fused.1} parent=47 // pred_check
          %p1339 = pneg %p219
        $region70: #{_run_fused.1} parent=47 // pred_check_branch
          %1341 = sbr.rel (%p1339) target = $region72
        $region71: #{_run_fused.1} parent=47 // pred_region
          %s1343 = ssub.s32 256, 256
          %1344 = vsyncadd %s1320, %s1343
          %s1345 = smul.addr %s28, 128
          %s1346 = scalar_lea.hbm %s8, %s1345
          %s1347 = sshll.u32 %s1323, 4
          %s1348 = int_to_ptr.vmem [resolvable:$true] %s1347
          %1353 = dma.vmem_to_hbm [thread:$0]  %s1348, 256, %s1346, %s1320, 128, 384, 8
        $region72: #{_run_fused.1} parent=47 // pred_fallthru
          _
      $region48: #{_run_fused.1} parent=5 // pred_fallthru
        _
      %p1354 = scmp.le.s32.totalorder 2, %s23
      // Predicated region
      $region73: #{_run_fused.1} parent=5 // pred_check
        %p1355 = pneg %p1354
      $region74: #{_run_fused.1} parent=5 // pred_check_branch
        %1357 = sbr.rel (%p1355) target = $region76
      $region75: #{_run_fused.1} parent=5 // pred_region
        %s1358 = ssub.s32 %s23, 2
        // Predicated region
        $region77: #{_run_fused.1} parent=75 // pred_check
          %p1359 = pneg %p199
        $region78: #{_run_fused.1} parent=75 // pred_check_branch
          %1361 = sbr.rel (%p1359) target = $region80
        $region79: #{_run_fused.1} parent=75 // pred_region
          %s1362 = sand.u32 %s184, 1
          %s1363 = scalar_lea.sflag [#allocation5], %s1362
          %s1364 = sand.u32 %s184, 1
          %s1365 = smul.addr %s1364, 128
          %s1366 = scalar_lea.vmem [#allocation9], %s1365
          %1367 = dma.done %s1363, 2048
        $region80: #{_run_fused.1} parent=75 // pred_fallthru
          _
        // Predicated region
        $region81: #{_run_fused.1} parent=75 // pred_check
          %p1368 = pneg %p225
        $region82: #{_run_fused.1} parent=75 // pred_check_branch
          %1370 = sbr.rel (%p1368) target = $region84
        $region83: #{_run_fused.1} parent=75 // pred_region
          %s1371 = sand.u32 %s210, 1
          %s1372 = scalar_lea.sflag [#allocation11], %s1371
          %s1373 = sand.u32 %s210, 1
          %s1374 = smul.addr %s1373, 16
          %s1375 = scalar_lea.vmem [#allocation10], %s1374
          %1376 = dma.done %s1372, 256
        $region84: #{_run_fused.1} parent=75 // pred_fallthru
          _
      $region76: #{_run_fused.1} parent=5 // pred_fallthru
        _
    $region6: #{_run_fused.1} parent=1 // loop_footer
      %s27 = sadd.s32 1, %s23
    $region7: #{_run_fused.1} parent=1 // loop_footer_branch
      %22 = sbr.rel target = $region3
    $region8: #{_run_fused.1} parent=1 // loop_exit
      _
    %1377 = vsyncpa [#allocation4], 1
    %s1378 = scalar_lea.sflag [#allocation4], 1
    %1379 = vsyncpa %s1378, 1
    %1380 = vsyncpa [#allocation7], 1
    %1381 = vsyncpa [#allocation5], 1
    %s1382 = scalar_lea.sflag [#allocation5], 1
    %1383 = vsyncpa %s1382, 1
    %1384 = vsyncpa [#allocation11], 1
    %s1385 = scalar_lea.sflag [#allocation11], 1
    %1386 = vsyncpa %s1385, 1

</llo_original>
